<compile_context>
chip_gen: v7x
topology: tpu7x:2x2x1
jax: 0.10.0
libtpu: 0.0.40
codegen_flags: <defaults>
</compile_context>

<pallas_src>
import jax
import jax.numpy as jnp
from jax.experimental import pallas as pl
from jax.experimental.pallas import tpu as pltpu


_VMEM_LIMIT = 48 * 1024 * 1024  # under v7x's 64 MiB physical VMEM, with headroom


def _round_up(x, m):
    return ((x + m - 1) // m) * m


def _pick_time_chunk(t, max_chunk=64):
    """Largest divisor of t that is <= max_chunk (amortizes grid-step cost)."""
    for c in range(min(t, max_chunk), 0, -1):
        if t % c == 0:
            return c
    return 1


# ---------------------------------------------------------------------------
# Shared tiled linear kernel: out = x @ w + b   (used for the hoisted layer-0
# input projection and for the final vocabulary projection)
# ---------------------------------------------------------------------------

def _linear_kernel(x_ref, w_ref, b_ref, o_ref):
    acc = jnp.dot(x_ref[...], w_ref[...], preferred_element_type=jnp.float32)
    o_ref[...] = (acc + b_ref[...].astype(jnp.float32)).astype(o_ref.dtype)


def linear_pallas(x, w, b, *, out_dtype=jnp.float32, tile_n=256, tile_v=512):
    """(N, K) @ (K, V) + (1, V) -> (N, V); tiles rows and cols, pads ragged dims."""
    N, K = x.shape
    V = w.shape[1]

    tile_n = min(tile_n, _round_up(N, 8))      # rows: multiple of 8 sublanes
    tile_v = min(tile_v, _round_up(V, 128))    # cols: multiple of 128 lanes
    Np = _round_up(N, tile_n)
    Vp = _round_up(V, tile_v)

    if Np != N:
        x = jnp.pad(x, ((0, Np - N), (0, 0)))
    if Vp != V:
        w = jnp.pad(w, ((0, 0), (0, Vp - V)))
        b = jnp.pad(b, ((0, 0), (0, Vp - V)))

    out = pl.pallas_call(
        _linear_kernel,
        out_shape=jax.ShapeDtypeStruct((Np, Vp), out_dtype),
        grid=(Np // tile_n, Vp // tile_v),
        in_specs=[
            pl.BlockSpec((tile_n, K), lambda i, j: (i, 0)),
            pl.BlockSpec((K, tile_v), lambda i, j: (0, j)),
            pl.BlockSpec((1, tile_v), lambda i, j: (0, j)),
        ],
        out_specs=pl.BlockSpec((tile_n, tile_v), lambda i, j: (i, j)),
        compiler_params=pltpu.CompilerParams(
            dimension_semantics=("parallel", "parallel"),   # megacore-shardable
            vmem_limit_bytes=_VMEM_LIMIT,
        ),
    )(x, w, b)

    if Np != N or Vp != V:
        out = out[:N, :V]
    return out


# ---------------------------------------------------------------------------
# Fused 2-layer vanilla-RNN (tanh) recurrence, time-chunked.
#   inputs : pre0 = X @ W_ih_l0 + (b_ih_l0 + b_hh_l0)   (hoisted, time-major)
#   per step:  h0 = tanh(pre0[t] + h0 @ W_hh_l0)
#              h1 = tanh(h0 @ W_ih_l1 + h1 @ W_hh_l1 + b_l1)
# ---------------------------------------------------------------------------

def _fused_rnn_kernel(pre0_ref, whh0_ref, wih1_ref, whh1_ref, b1_ref,
                      out_ref, hid_ref, h0_s, h1_s):
    @pl.when(pl.program_id(0) == 0)
    def _():                                   # hidden=None -> zeros
        h0_s[...] = jnp.zeros_like(h0_s)
        h1_s[...] = jnp.zeros_like(h1_s)

    t_chunk, bsz, hdim = out_ref.shape
    cdt = whh0_ref.dtype                       # bf16 compute dtype for the MXU
    # hoist the bias broadcast out of the time loop
    b1 = jnp.broadcast_to(b1_ref[...].astype(jnp.float32), (bsz, hdim))

    def step(t, carry):
        p0 = pre0_ref[t].astype(jnp.float32)                       # (B, H)
        h0 = jnp.tanh(
            p0 + jnp.dot(h0_s[...].astype(cdt), whh0_ref[...],
                         preferred_element_type=jnp.float32))
        a1 = (jnp.dot(h0.astype(cdt), wih1_ref[...],
                      preferred_element_type=jnp.float32)
              + jnp.dot(h1_s[...].astype(cdt), whh1_ref[...],
                        preferred_element_type=jnp.float32)
              + b1)
        h1 = jnp.tanh(a1)
        h0_s[...] = h0
        h1_s[...] = h1
        out_ref[t] = h1.astype(out_ref.dtype)
        return carry

    jax.lax.fori_loop(0, t_chunk, step, 0, unroll=(t_chunk <= 16))

    # resident (2, B, H) output: final per-layer hidden states
    hid_ref[0] = h0_s[...].astype(hid_ref.dtype)
    hid_ref[1] = h1_s[...].astype(hid_ref.dtype)


def fused_rnn(pre0, whh0, wih1, whh1, b1, *, out_dtype=jnp.bfloat16):
    T, B, H = pre0.shape
    t_chunk = _pick_time_chunk(T)

    return pl.pallas_call(
        _fused_rnn_kernel,
        out_shape=(
            jax.ShapeDtypeStruct((T, B, H), out_dtype),     # layer-1 sequence
            jax.ShapeDtypeStruct((2, B, H), jnp.float32),   # final hidden (2 layers)
        ),
        grid=(T // t_chunk,),
        in_specs=[
            pl.BlockSpec((t_chunk, B, H), lambda c: (c, 0, 0)),   # pre-projected x
            pl.BlockSpec((H, H), lambda c: (0, 0)),               # W_hh_l0 (resident)
            pl.BlockSpec((H, H), lambda c: (0, 0)),               # W_ih_l1 (resident)
            pl.BlockSpec((H, H), lambda c: (0, 0)),               # W_hh_l1 (resident)
            pl.BlockSpec((1, H), lambda c: (0, 0)),               # b_l1
        ],
        out_specs=(
            pl.BlockSpec((t_chunk, B, H), lambda c: (c, 0, 0)),
            pl.BlockSpec((2, B, H), lambda c: (0, 0, 0)),         # resident accumulator
        ),
        scratch_shapes=[
            pltpu.VMEM((B, H), jnp.float32),   # h0 state (f32)
            pltpu.VMEM((B, H), jnp.float32),   # h1 state (f32)
        ],
        compiler_params=pltpu.CompilerParams(
            dimension_semantics=("arbitrary",),   # time recurrence is sequential
            vmem_limit_bytes=_VMEM_LIMIT,
        ),
    )(pre0, whh0, wih1, whh1, b1)


# ---------------------------------------------------------------------------
# Full forward: embedding -> fused 2-layer RNN -> (dropout=identity) -> fc
# ---------------------------------------------------------------------------

def vanilla_rnn_language_forward(params, input_ids, *, compute_dtype=jnp.bfloat16):
    B, T = input_ids.shape
    E = params["embedding"].shape[1]
    H = params["w_hh_l0"].shape[0]
    V = params["fc_w"].shape[1]

    # Embedding gather, produced time-major directly (only the tiny int32 id
    # matrix is transposed; no activation-layout copy).
    x_tm = jnp.take(params["embedding"], input_ids.T, axis=0)       # (T, B, E) f32

    # Hoisted layer-0 input projection (+ folded b_ih+b_hh): one big matmul
    # with M = T*B rows at full MXU utilization.
    pre0_2d = linear_pallas(
        x_tm.reshape(T * B, E).astype(compute_dtype),
        params["w_ih_l0"].astype(compute_dtype),
        params["b_l0"],
        out_dtype=compute_dtype,
    )
    pre0 = pre0_2d.reshape(T, B, H)

    # Fused 2-layer tanh recurrence (layer-1 input projection stays in-loop).
    h1_seq, hidden = fused_rnn(
        pre0,
        params["w_hh_l0"].astype(compute_dtype),
        params["w_ih_l1"].astype(compute_dtype),
        params["w_hh_l1"].astype(compute_dtype),
        params["b_l1"],
        out_dtype=compute_dtype,
    )

    # Dropout (p=0.2) layers are identity in eval mode.
    # One small bf16 (T,B,H)->(B,T,H) layout copy so logits come out batch-first
    # and the much larger (B,T,V) logits never need a transpose.
    out_2d = jnp.transpose(h1_seq, (1, 0, 2)).reshape(B * T, H)
    logits_2d = linear_pallas(
        out_2d,
        params["fc_w"].astype(compute_dtype),
        params["fc_b"],
        out_dtype=jnp.float32,
    )
    logits = logits_2d.reshape(B, T, V)
    return logits, hidden


# ---------------------------------------------------------------------------
# Pure-JAX f32 reference (PyTorch semantics) for correctness check
# ---------------------------------------------------------------------------

def reference_forward(params, input_ids):
    emb = jnp.take(params["embedding"], input_ids, axis=0).astype(jnp.float32)  # (B,T,E)
    x = jnp.transpose(emb, (1, 0, 2))                                           # (T,B,E)

    def run_layer(x_seq, w_ih, w_hh, b):
        h = jnp.zeros((x_seq.shape[1], w_hh.shape[0]), jnp.float32)

        def step(h, x_t):
            h_new = jnp.tanh(x_t @ w_ih + h @ w_hh + b)
            return h_new, h_new

        _, hs = jax.lax.scan(step, h, x_seq)
        return hs

    h0 = run_layer(x, params["w_ih_l0"], params["w_hh_l0"], params["b_l0"])
    h1 = run_layer(h0, params["w_ih_l1"], params["w_hh_l1"], params["b_l1"])
    hidden = jnp.stack([h0[-1], h1[-1]], axis=0)
    logits = jnp.transpose(h1, (1, 0, 2)) @ params["fc_w"] + params["fc_b"]
    return logits, hidden


# ---------------------------------------------------------------------------
# Deterministic parameter init (shapes mirror the nn.Module, scaled down)
# ---------------------------------------------------------------------------

def init_params(key, *, vocab_size, embedding_dim, hidden_dim):
    ks = jax.random.split(key, 8)
    bound = 1.0 / jnp.sqrt(hidden_dim)

    def unif(k, shape, b):
        return jax.random.uniform(k, shape, jnp.float32, -b, b)

    return {
        # nn.Embedding(vocab, emb): N(0, 1)
        "embedding": jax.random.normal(ks[0], (vocab_size, embedding_dim), jnp.float32),
        # nn.RNN weights stored pre-transposed: (in, out); biases b_ih + b_hh folded
        "w_ih_l0": unif(ks[1], (embedding_dim, hidden_dim), bound),
        "w_hh_l0": unif(ks[2], (hidden_dim, hidden_dim), bound),
        "b_l0": unif(ks[3], (1, hidden_dim), bound),
        "w_ih_l1": unif(ks[4], (hidden_dim, hidden_dim), bound),
        "w_hh_l1": unif(ks[5], (hidden_dim, hidden_dim), bound),
        "b_l1": unif(ks[6], (1, hidden_dim), bound),
        # nn.Linear(hidden, vocab), stored pre-transposed (H, V)
        "fc_w": unif(ks[7], (hidden_dim, vocab_size), bound),
        "fc_b": jnp.zeros((1, vocab_size), jnp.float32),
    }


# ---------------------------------------------------------------------------
# Main
# ---------------------------------------------------------------------------

if __name__ == "__main__":
    # Small shapes consistent with the module (scaled down from 256/512/10000).
    # VOCAB is deliberately not a multiple of 128 to exercise the padded FC path.
    B, T = 2, 8
    EMBEDDING_DIM, HIDDEN_DIM, VOCAB_SIZE = 128, 128, 1000

    key = jax.random.PRNGKey(0)
    pkey, ikey = jax.random.split(key)

    params = init_params(
        pkey,
        vocab_size=VOCAB_SIZE,
        embedding_dim=EMBEDDING_DIM,
        hidden_dim=HIDDEN_DIM,
    )
    input_ids = jax.random.randint(ikey, (B, T), 0, VOCAB_SIZE, dtype=jnp.int32)

    logits, hidden = jax.jit(vanilla_rnn_language_forward)(params, input_ids)
    jax.block_until_ready((logits, hidden))

    # Correctness vs. pure-f32 reference (kernel uses bf16 weights/activations
    # with f32 accumulation, so tolerance is loosened accordingly).
    ref_logits, ref_hidden = reference_forward(params, input_ids)
    assert logits.shape == (B, T, VOCAB_SIZE)
    assert hidden.shape == (2, B, HIDDEN_DIM)
    assert jnp.allclose(logits, ref_logits, atol=1e-1, rtol=1e-1), (
        float(jnp.max(jnp.abs(logits - ref_logits))))
    assert jnp.allclose(hidden, ref_hidden, atol=1e-1, rtol=1e-1), (
        float(jnp.max(jnp.abs(hidden - ref_hidden))))

    # TODO(synk): training-mode dropout and the sampling helpers
    # (predict_next_token/generate) are not part of the forward kernel.
    print("KERNEL_OK")
</pallas_src>

<mosaic_0001>
module attributes {stable_mosaic.version = 11 : i64} {
  func.func @_linear_kernel(%arg0: i32, %arg1: i32, %arg2: memref<16x128xbf16, #tpu.memory_space<vmem>>, %arg3: memref<128x128xbf16, #tpu.memory_space<vmem>>, %arg4: memref<1x128xf32, #tpu.memory_space<vmem>>, %arg5: memref<16x128xbf16, #tpu.memory_space<vmem>>) attributes {dimension_semantics = [#tpu.dimension_semantics<parallel>, #tpu.dimension_semantics<parallel>], iteration_bounds = array<i64: 1, 1>, scalar_prefetch = 0 : i64, scratch_operands = 0 : i64, tpu.core_type = #tpu.core_type<tc>, window_params = [{transform_indices = @transform_0, window_bounds = array<i64: 16, 128>}, {transform_indices = @transform_1, window_bounds = array<i64: 128, 128>}, {transform_indices = @transform_2, window_bounds = array<i64: 1, 128>}, {transform_indices = @transform_3, window_bounds = array<i64: 16, 128>}]} {
    %c0 = arith.constant 0 : index
    %c0_0 = arith.constant 0 : index
    %0 = vector.load %arg2[%c0, %c0_0] : memref<16x128xbf16, #tpu.memory_space<vmem>>, vector<16x128xbf16>
    %c0_1 = arith.constant 0 : index
    %c0_2 = arith.constant 0 : index
    %1 = vector.load %arg3[%c0_1, %c0_2] : memref<128x128xbf16, #tpu.memory_space<vmem>>, vector<128x128xbf16>
    %cst = arith.constant dense<0.000000e+00> : vector<16x128xf32>
    %2 = tpu.matmul %0, %1, %cst {dimension_numbers = #tpu.dot_dimension_numbers<[1], [0], [0], [1], [0, 0, 1, 1], [], []>} : vector<16x128xbf16>, vector<128x128xbf16>, vector<16x128xf32> -> vector<16x128xf32>
    %c0_3 = arith.constant 0 : index
    %c0_4 = arith.constant 0 : index
    %3 = vector.load %arg4[%c0_3, %c0_4] : memref<1x128xf32, #tpu.memory_space<vmem>>, vector<1x128xf32>
    %4 = vector.broadcast %3 : vector<1x128xf32> to vector<16x128xf32>
    %5 = arith.addf %2, %4 : vector<16x128xf32>
    %6 = arith.truncf %5 : vector<16x128xf32> to vector<16x128xbf16>
    %c0_5 = arith.constant 0 : index
    %c0_6 = arith.constant 0 : index
    %7 = vector.load %arg5[%c0_5, %c0_6] : memref<16x128xbf16, #tpu.memory_space<vmem>>, vector<16x128xbf16>
    tpu.vector_store %arg5[%c0_5, %c0_6], %6 {strides = array<i32>} : memref<16x128xbf16, #tpu.memory_space<vmem>>, vector<16x128xbf16>,
    return
  }
  func.func @transform_0(%arg0: i32, %arg1: i32) -> (i32, i32) {
    %c0_i32 = arith.constant 0 : i32
    %c0_i32_0 = arith.constant 0 : i32
    return %arg0, %c0_i32 : i32, i32
  }
  func.func @transform_1(%arg0: i32, %arg1: i32) -> (i32, i32) {
    %c0_i32 = arith.constant 0 : i32
    %c0_i32_0 = arith.constant 0 : i32
    return %c0_i32, %arg1 : i32, i32
  }
  func.func @transform_2(%arg0: i32, %arg1: i32) -> (i32, i32) {
    %c0_i32 = arith.constant 0 : i32
    %c0_i32_0 = arith.constant 0 : i32
    return %c0_i32, %arg1 : i32, i32
  }
  func.func @transform_3(%arg0: i32, %arg1: i32) -> (i32, i32) {
    %c0_i32 = arith.constant 0 : i32
    return %arg0, %arg1 : i32, i32
  }
}

module attributes {stable_mosaic.version = 11 : i64} {
  func.func @_fused_rnn_kernel(%arg0: i32, %arg1: memref<8x2x128xbf16, #tpu.memory_space<vmem>>, %arg2: memref<128x128xbf16, #tpu.memory_space<vmem>>, %arg3: memref<128x128xbf16, #tpu.memory_space<vmem>>, %arg4: memref<128x128xbf16, #tpu.memory_space<vmem>>, %arg5: memref<1x128xf32, #tpu.memory_space<vmem>>, %arg6: memref<8x2x128xbf16, #tpu.memory_space<vmem>>, %arg7: memref<2x2x128xf32, #tpu.memory_space<vmem>>, %arg8: memref<2x128xf32, #tpu.memory_space<vmem>>, %arg9: memref<2x128xf32, #tpu.memory_space<vmem>>) attributes {dimension_semantics = [#tpu.dimension_semantics<arbitrary>], iteration_bounds = array<i64: 1>, scalar_prefetch = 0 : i64, scratch_operands = 2 : i64, tpu.core_type = #tpu.core_type<tc>, window_params = [{transform_indices = @transform_0, window_bounds = array<i64: 8, 2, 128>}, {pipeline_mode = #tpu.pipeline_mode<synchronous>, transform_indices = @transform_1, window_bounds = array<i64: 128, 128>}, {pipeline_mode = #tpu.pipeline_mode<synchronous>, transform_indices = @transform_2, window_bounds = array<i64: 128, 128>}, {pipeline_mode = #tpu.pipeline_mode<synchronous>, transform_indices = @transform_3, window_bounds = array<i64: 128, 128>}, {pipeline_mode = #tpu.pipeline_mode<synchronous>, transform_indices = @transform_4, window_bounds = array<i64: 1, 128>}, {transform_indices = @transform_5, window_bounds = array<i64: 8, 2, 128>}, {pipeline_mode = #tpu.pipeline_mode<synchronous>, transform_indices = @transform_6, window_bounds = array<i64: 2, 2, 128>}]} {
    %c0_i32 = arith.constant 0 : i32
    %0 = arith.cmpi eq, %arg0, %c0_i32 : i32
    %1 = arith.extui %0 : i1 to i32
    %c0_i32_0 = arith.constant 0 : i32
    %2 = arith.cmpi ne, %1, %c0_i32_0 : i32
    scf.if %2 {
      %cst_179 = arith.constant 0.000000e+00 : f32
      %230 = vector.broadcast %cst_179 : f32 to vector<2x128xf32>
      %c0_180 = arith.constant 0 : index
      %c0_181 = arith.constant 0 : index
      %231 = vector.load %arg8[%c0_180, %c0_181] : memref<2x128xf32, #tpu.memory_space<vmem>>, vector<2x128xf32>
      tpu.vector_store %arg8[%c0_180, %c0_181], %230 {strides = array<i32>} : memref<2x128xf32, #tpu.memory_space<vmem>>, vector<2x128xf32>,
      %cst_182 = arith.constant 0.000000e+00 : f32
      %232 = vector.broadcast %cst_182 : f32 to vector<2x128xf32>
      %c0_183 = arith.constant 0 : index
      %c0_184 = arith.constant 0 : index
      %233 = vector.load %arg9[%c0_183, %c0_184] : memref<2x128xf32, #tpu.memory_space<vmem>>, vector<2x128xf32>
      tpu.vector_store %arg9[%c0_183, %c0_184], %232 {strides = array<i32>} : memref<2x128xf32, #tpu.memory_space<vmem>>, vector<2x128xf32>,
    } else {
    }
    %c0 = arith.constant 0 : index
    %c0_1 = arith.constant 0 : index
    %3 = vector.load %arg5[%c0, %c0_1] : memref<1x128xf32, #tpu.memory_space<vmem>>, vector<1x128xf32>
    %4 = vector.shape_cast %3 : vector<1x128xf32> to vector<1x128xf32>
    %5 = vector.broadcast %4 : vector<1x128xf32> to vector<2x128xf32>
    %c0_i32_2 = arith.constant 0 : i32
    %6 = arith.index_cast %c0_i32_2 : i32 to index
    %c0_3 = arith.constant 0 : index
    %c0_4 = arith.constant 0 : index
    %7 = vector.load %arg1[%6, %c0_3, %c0_4] : memref<8x2x128xbf16, #tpu.memory_space<vmem>>, vector<1x2x128xbf16>
    %8 = vector.shape_cast %7 : vector<1x2x128xbf16> to vector<2x128xbf16>
    %9 = arith.extf %8 : vector<2x128xbf16> to vector<2x128xf32>
    %c0_5 = arith.constant 0 : index
    %c0_6 = arith.constant 0 : index
    %10 = vector.load %arg8[%c0_5, %c0_6] : memref<2x128xf32, #tpu.memory_space<vmem>>, vector<2x128xf32>
    %11 = arith.truncf %10 : vector<2x128xf32> to vector<2x128xbf16>
    %c0_7 = arith.constant 0 : index
    %c0_8 = arith.constant 0 : index
    %12 = vector.load %arg2[%c0_7, %c0_8] : memref<128x128xbf16, #tpu.memory_space<vmem>>, vector<128x128xbf16>
    %cst = arith.constant dense<0.000000e+00> : vector<2x128xf32>
    %13 = tpu.matmul %11, %12, %cst {dimension_numbers = #tpu.dot_dimension_numbers<[1], [0], [0], [1], [0, 0, 1, 1], [], []>} : vector<2x128xbf16>, vector<128x128xbf16>, vector<2x128xf32> -> vector<2x128xf32>
    %14 = arith.addf %9, %13 : vector<2x128xf32>
    %15 = math.tanh %14 : vector<2x128xf32>
    %16 = arith.truncf %15 : vector<2x128xf32> to vector<2x128xbf16>
    %c0_9 = arith.constant 0 : index
    %c0_10 = arith.constant 0 : index
    %17 = vector.load %arg3[%c0_9, %c0_10] : memref<128x128xbf16, #tpu.memory_space<vmem>>, vector<128x128xbf16>
    %cst_11 = arith.constant dense<0.000000e+00> : vector<2x128xf32>
    %18 = tpu.matmul %16, %17, %cst_11 {dimension_numbers = #tpu.dot_dimension_numbers<[1], [0], [0], [1], [0, 0, 1, 1], [], []>} : vector<2x128xbf16>, vector<128x128xbf16>, vector<2x128xf32> -> vector<2x128xf32>
    %c0_12 = arith.constant 0 : index
    %c0_13 = arith.constant 0 : index
    %19 = vector.load %arg9[%c0_12, %c0_13] : memref<2x128xf32, #tpu.memory_space<vmem>>, vector<2x128xf32>
    %20 = arith.truncf %19 : vector<2x128xf32> to vector<2x128xbf16>
    %c0_14 = arith.constant 0 : index
    %c0_15 = arith.constant 0 : index
    %21 = vector.load %arg4[%c0_14, %c0_15] : memref<128x128xbf16, #tpu.memory_space<vmem>>, vector<128x128xbf16>
    %cst_16 = arith.constant dense<0.000000e+00> : vector<2x128xf32>
    %22 = tpu.matmul %20, %21, %cst_16 {dimension_numbers = #tpu.dot_dimension_numbers<[1], [0], [0], [1], [0, 0, 1, 1], [], []>} : vector<2x128xbf16>, vector<128x128xbf16>, vector<2x128xf32> -> vector<2x128xf32>
    %23 = arith.addf %18, %22 : vector<2x128xf32>
    %24 = arith.addf %23, %5 : vector<2x128xf32>
    %25 = math.tanh %24 : vector<2x128xf32>
    %c0_17 = arith.constant 0 : index
    %c0_18 = arith.constant 0 : index
    %26 = vector.load %arg8[%c0_17, %c0_18] : memref<2x128xf32, #tpu.memory_space<vmem>>, vector<2x128xf32>
    tpu.vector_store %arg8[%c0_17, %c0_18], %15 {strides = array<i32>} : memref<2x128xf32, #tpu.memory_space<vmem>>, vector<2x128xf32>,
    %c0_19 = arith.constant 0 : index
    %c0_20 = arith.constant 0 : index
    %27 = vector.load %arg9[%c0_19, %c0_20] : memref<2x128xf32, #tpu.memory_space<vmem>>, vector<2x128xf32>
    tpu.vector_store %arg9[%c0_19, %c0_20], %25 {strides = array<i32>} : memref<2x128xf32, #tpu.memory_space<vmem>>, vector<2x128xf32>,
    %28 = arith.truncf %25 : vector<2x128xf32> to vector<2x128xbf16>
    %29 = arith.index_cast %c0_i32_2 : i32 to index
    %c0_21 = arith.constant 0 : index
    %c0_22 = arith.constant 0 : index
    %30 = vector.load %arg6[%29, %c0_21, %c0_22] : memref<8x2x128xbf16, #tpu.memory_space<vmem>>, vector<1x2x128xbf16>
    %31 = vector.shape_cast %30 : vector<1x2x128xbf16> to vector<2x128xbf16>
    %32 = vector.shape_cast %28 : vector<2x128xbf16> to vector<1x2x128xbf16>
    tpu.vector_store %arg6[%29, %c0_21, %c0_22], %32 {strides = array<i32>} : memref<8x2x128xbf16, #tpu.memory_space<vmem>>, vector<1x2x128xbf16>,
    %c1_i32 = arith.constant 1 : i32
    %33 = arith.index_cast %c1_i32 : i32 to index
    %c0_23 = arith.constant 0 : index
    %c0_24 = arith.constant 0 : index
    %34 = vector.load %arg1[%33, %c0_23, %c0_24] : memref<8x2x128xbf16, #tpu.memory_space<vmem>>, vector<1x2x128xbf16>
    %35 = vector.shape_cast %34 : vector<1x2x128xbf16> to vector<2x128xbf16>
    %36 = arith.extf %35 : vector<2x128xbf16> to vector<2x128xf32>
    %c0_25 = arith.constant 0 : index
    %c0_26 = arith.constant 0 : index
    %37 = vector.load %arg8[%c0_25, %c0_26] : memref<2x128xf32, #tpu.memory_space<vmem>>, vector<2x128xf32>
    %38 = arith.truncf %37 : vector<2x128xf32> to vector<2x128xbf16>
    %c0_27 = arith.constant 0 : index
    %c0_28 = arith.constant 0 : index
    %39 = vector.load %arg2[%c0_27, %c0_28] : memref<128x128xbf16, #tpu.memory_space<vmem>>, vector<128x128xbf16>
    %cst_29 = arith.constant dense<0.000000e+00> : vector<2x128xf32>
    %40 = tpu.matmul %38, %39, %cst_29 {dimension_numbers = #tpu.dot_dimension_numbers<[1], [0], [0], [1], [0, 0, 1, 1], [], []>} : vector<2x128xbf16>, vector<128x128xbf16>, vector<2x128xf32> -> vector<2x128xf32>
    %41 = arith.addf %36, %40 : vector<2x128xf32>
    %42 = math.tanh %41 : vector<2x128xf32>
    %43 = arith.truncf %42 : vector<2x128xf32> to vector<2x128xbf16>
    %c0_30 = arith.constant 0 : index
    %c0_31 = arith.constant 0 : index
    %44 = vector.load %arg3[%c0_30, %c0_31] : memref<128x128xbf16, #tpu.memory_space<vmem>>, vector<128x128xbf16>
    %cst_32 = arith.constant dense<0.000000e+00> : vector<2x128xf32>
    %45 = tpu.matmul %43, %44, %cst_32 {dimension_numbers = #tpu.dot_dimension_numbers<[1], [0], [0], [1], [0, 0, 1, 1], [], []>} : vector<2x128xbf16>, vector<128x128xbf16>, vector<2x128xf32> -> vector<2x128xf32>
    %c0_33 = arith.constant 0 : index
    %c0_34 = arith.constant 0 : index
    %46 = vector.load %arg9[%c0_33, %c0_34] : memref<2x128xf32, #tpu.memory_space<vmem>>, vector<2x128xf32>
    %47 = arith.truncf %46 : vector<2x128xf32> to vector<2x128xbf16>
    %c0_35 = arith.constant 0 : index
    %c0_36 = arith.constant 0 : index
    %48 = vector.load %arg4[%c0_35, %c0_36] : memref<128x128xbf16, #tpu.memory_space<vmem>>, vector<128x128xbf16>
    %cst_37 = arith.constant dense<0.000000e+00> : vector<2x128xf32>
    %49 = tpu.matmul %47, %48, %cst_37 {dimension_numbers = #tpu.dot_dimension_numbers<[1], [0], [0], [1], [0, 0, 1, 1], [], []>} : vector<2x128xbf16>, vector<128x128xbf16>, vector<2x128xf32> -> vector<2x128xf32>
    %50 = arith.addf %45, %49 : vector<2x128xf32>
    %51 = arith.addf %50, %5 : vector<2x128xf32>
    %52 = math.tanh %51 : vector<2x128xf32>
    %c0_38 = arith.constant 0 : index
    %c0_39 = arith.constant 0 : index
    %53 = vector.load %arg8[%c0_38, %c0_39] : memref<2x128xf32, #tpu.memory_space<vmem>>, vector<2x128xf32>
    tpu.vector_store %arg8[%c0_38, %c0_39], %42 {strides = array<i32>} : memref<2x128xf32, #tpu.memory_space<vmem>>, vector<2x128xf32>,
    %c0_40 = arith.constant 0 : index
    %c0_41 = arith.constant 0 : index
    %54 = vector.load %arg9[%c0_40, %c0_41] : memref<2x128xf32, #tpu.memory_space<vmem>>, vector<2x128xf32>
    tpu.vector_store %arg9[%c0_40, %c0_41], %52 {strides = array<i32>} : memref<2x128xf32, #tpu.memory_space<vmem>>, vector<2x128xf32>,
    %55 = arith.truncf %52 : vector<2x128xf32> to vector<2x128xbf16>
    %56 = arith.index_cast %c1_i32 : i32 to index
    %c0_42 = arith.constant 0 : index
    %c0_43 = arith.constant 0 : index
    %57 = vector.load %arg6[%56, %c0_42, %c0_43] : memref<8x2x128xbf16, #tpu.memory_space<vmem>>, vector<1x2x128xbf16>
    %58 = vector.shape_cast %57 : vector<1x2x128xbf16> to vector<2x128xbf16>
    %59 = vector.shape_cast %55 : vector<2x128xbf16> to vector<1x2x128xbf16>
    tpu.vector_store %arg6[%56, %c0_42, %c0_43], %59 {strides = array<i32>} : memref<8x2x128xbf16, #tpu.memory_space<vmem>>, vector<1x2x128xbf16>,
    %c2_i32 = arith.constant 2 : i32
    %60 = arith.index_cast %c2_i32 : i32 to index
    %c0_44 = arith.constant 0 : index
    %c0_45 = arith.constant 0 : index
    %61 = vector.load %arg1[%60, %c0_44, %c0_45] : memref<8x2x128xbf16, #tpu.memory_space<vmem>>, vector<1x2x128xbf16>
    %62 = vector.shape_cast %61 : vector<1x2x128xbf16> to vector<2x128xbf16>
    %63 = arith.extf %62 : vector<2x128xbf16> to vector<2x128xf32>
    %c0_46 = arith.constant 0 : index
    %c0_47 = arith.constant 0 : index
    %64 = vector.load %arg8[%c0_46, %c0_47] : memref<2x128xf32, #tpu.memory_space<vmem>>, vector<2x128xf32>
    %65 = arith.truncf %64 : vector<2x128xf32> to vector<2x128xbf16>
    %c0_48 = arith.constant 0 : index
    %c0_49 = arith.constant 0 : index
    %66 = vector.load %arg2[%c0_48, %c0_49] : memref<128x128xbf16, #tpu.memory_space<vmem>>, vector<128x128xbf16>
    %cst_50 = arith.constant dense<0.000000e+00> : vector<2x128xf32>
    %67 = tpu.matmul %65, %66, %cst_50 {dimension_numbers = #tpu.dot_dimension_numbers<[1], [0], [0], [1], [0, 0, 1, 1], [], []>} : vector<2x128xbf16>, vector<128x128xbf16>, vector<2x128xf32> -> vector<2x128xf32>
    %68 = arith.addf %63, %67 : vector<2x128xf32>
    %69 = math.tanh %68 : vector<2x128xf32>
    %70 = arith.truncf %69 : vector<2x128xf32> to vector<2x128xbf16>
    %c0_51 = arith.constant 0 : index
    %c0_52 = arith.constant 0 : index
    %71 = vector.load %arg3[%c0_51, %c0_52] : memref<128x128xbf16, #tpu.memory_space<vmem>>, vector<128x128xbf16>
    %cst_53 = arith.constant dense<0.000000e+00> : vector<2x128xf32>
    %72 = tpu.matmul %70, %71, %cst_53 {dimension_numbers = #tpu.dot_dimension_numbers<[1], [0], [0], [1], [0, 0, 1, 1], [], []>} : vector<2x128xbf16>, vector<128x128xbf16>, vector<2x128xf32> -> vector<2x128xf32>
    %c0_54 = arith.constant 0 : index
    %c0_55 = arith.constant 0 : index
    %73 = vector.load %arg9[%c0_54, %c0_55] : memref<2x128xf32, #tpu.memory_space<vmem>>, vector<2x128xf32>
    %74 = arith.truncf %73 : vector<2x128xf32> to vector<2x128xbf16>
    %c0_56 = arith.constant 0 : index
    %c0_57 = arith.constant 0 : index
    %75 = vector.load %arg4[%c0_56, %c0_57] : memref<128x128xbf16, #tpu.memory_space<vmem>>, vector<128x128xbf16>
    %cst_58 = arith.constant dense<0.000000e+00> : vector<2x128xf32>
    %76 = tpu.matmul %74, %75, %cst_58 {dimension_numbers = #tpu.dot_dimension_numbers<[1], [0], [0], [1], [0, 0, 1, 1], [], []>} : vector<2x128xbf16>, vector<128x128xbf16>, vector<2x128xf32> -> vector<2x128xf32>
    %77 = arith.addf %72, %76 : vector<2x128xf32>
    %78 = arith.addf %77, %5 : vector<2x128xf32>
    %79 = math.tanh %78 : vector<2x128xf32>
    %c0_59 = arith.constant 0 : index
    %c0_60 = arith.constant 0 : index
    %80 = vector.load %arg8[%c0_59, %c0_60] : memref<2x128xf32, #tpu.memory_space<vmem>>, vector<2x128xf32>
    tpu.vector_store %arg8[%c0_59, %c0_60], %69 {strides = array<i32>} : memref<2x128xf32, #tpu.memory_space<vmem>>, vector<2x128xf32>,
    %c0_61 = arith.constant 0 : index
    %c0_62 = arith.constant 0 : index
    %81 = vector.load %arg9[%c0_61, %c0_62] : memref<2x128xf32, #tpu.memory_space<vmem>>, vector<2x128xf32>
    tpu.vector_store %arg9[%c0_61, %c0_62], %79 {strides = array<i32>} : memref<2x128xf32, #tpu.memory_space<vmem>>, vector<2x128xf32>,
    %82 = arith.truncf %79 : vector<2x128xf32> to vector<2x128xbf16>
    %83 = arith.index_cast %c2_i32 : i32 to index
    %c0_63 = arith.constant 0 : index
    %c0_64 = arith.constant 0 : index
    %84 = vector.load %arg6[%83, %c0_63, %c0_64] : memref<8x2x128xbf16, #tpu.memory_space<vmem>>, vector<1x2x128xbf16>
    %85 = vector.shape_cast %84 : vector<1x2x128xbf16> to vector<2x128xbf16>
    %86 = vector.shape_cast %82 : vector<2x128xbf16> to vector<1x2x128xbf16>
    tpu.vector_store %arg6[%83, %c0_63, %c0_64], %86 {strides = array<i32>} : memref<8x2x128xbf16, #tpu.memory_space<vmem>>, vector<1x2x128xbf16>,
    %c3_i32 = arith.constant 3 : i32
    %87 = arith.index_cast %c3_i32 : i32 to index
    %c0_65 = arith.constant 0 : index
    %c0_66 = arith.constant 0 : index
    %88 = vector.load %arg1[%87, %c0_65, %c0_66] : memref<8x2x128xbf16, #tpu.memory_space<vmem>>, vector<1x2x128xbf16>
    %89 = vector.shape_cast %88 : vector<1x2x128xbf16> to vector<2x128xbf16>
    %90 = arith.extf %89 : vector<2x128xbf16> to vector<2x128xf32>
    %c0_67 = arith.constant 0 : index
    %c0_68 = arith.constant 0 : index
    %91 = vector.load %arg8[%c0_67, %c0_68] : memref<2x128xf32, #tpu.memory_space<vmem>>, vector<2x128xf32>
    %92 = arith.truncf %91 : vector<2x128xf32> to vector<2x128xbf16>
    %c0_69 = arith.constant 0 : index
    %c0_70 = arith.constant 0 : index
    %93 = vector.load %arg2[%c0_69, %c0_70] : memref<128x128xbf16, #tpu.memory_space<vmem>>, vector<128x128xbf16>
    %cst_71 = arith.constant dense<0.000000e+00> : vector<2x128xf32>
    %94 = tpu.matmul %92, %93, %cst_71 {dimension_numbers = #tpu.dot_dimension_numbers<[1], [0], [0], [1], [0, 0, 1, 1], [], []>} : vector<2x128xbf16>, vector<128x128xbf16>, vector<2x128xf32> -> vector<2x128xf32>
    %95 = arith.addf %90, %94 : vector<2x128xf32>
    %96 = math.tanh %95 : vector<2x128xf32>
    %97 = arith.truncf %96 : vector<2x128xf32> to vector<2x128xbf16>
    %c0_72 = arith.constant 0 : index
    %c0_73 = arith.constant 0 : index
    %98 = vector.load %arg3[%c0_72, %c0_73] : memref<128x128xbf16, #tpu.memory_space<vmem>>, vector<128x128xbf16>
    %cst_74 = arith.constant dense<0.000000e+00> : vector<2x128xf32>
    %99 = tpu.matmul %97, %98, %cst_74 {dimension_numbers = #tpu.dot_dimension_numbers<[1], [0], [0], [1], [0, 0, 1, 1], [], []>} : vector<2x128xbf16>, vector<128x128xbf16>, vector<2x128xf32> -> vector<2x128xf32>
    %c0_75 = arith.constant 0 : index
    %c0_76 = arith.constant 0 : index
    %100 = vector.load %arg9[%c0_75, %c0_76] : memref<2x128xf32, #tpu.memory_space<vmem>>, vector<2x128xf32>
    %101 = arith.truncf %100 : vector<2x128xf32> to vector<2x128xbf16>
    %c0_77 = arith.constant 0 : index
    %c0_78 = arith.constant 0 : index
    %102 = vector.load %arg4[%c0_77, %c0_78] : memref<128x128xbf16, #tpu.memory_space<vmem>>, vector<128x128xbf16>
    %cst_79 = arith.constant dense<0.000000e+00> : vector<2x128xf32>
    %103 = tpu.matmul %101, %102, %cst_79 {dimension_numbers = #tpu.dot_dimension_numbers<[1], [0], [0], [1], [0, 0, 1, 1], [], []>} : vector<2x128xbf16>, vector<128x128xbf16>, vector<2x128xf32> -> vector<2x128xf32>
    %104 = arith.addf %99, %103 : vector<2x128xf32>
    %105 = arith.addf %104, %5 : vector<2x128xf32>
    %106 = math.tanh %105 : vector<2x128xf32>
    %c0_80 = arith.constant 0 : index
    %c0_81 = arith.constant 0 : index
    %107 = vector.load %arg8[%c0_80, %c0_81] : memref<2x128xf32, #tpu.memory_space<vmem>>, vector<2x128xf32>
    tpu.vector_store %arg8[%c0_80, %c0_81], %96 {strides = array<i32>} : memref<2x128xf32, #tpu.memory_space<vmem>>, vector<2x128xf32>,
    %c0_82 = arith.constant 0 : index
    %c0_83 = arith.constant 0 : index
    %108 = vector.load %arg9[%c0_82, %c0_83] : memref<2x128xf32, #tpu.memory_space<vmem>>, vector<2x128xf32>
    tpu.vector_store %arg9[%c0_82, %c0_83], %106 {strides = array<i32>} : memref<2x128xf32, #tpu.memory_space<vmem>>, vector<2x128xf32>,
    %109 = arith.truncf %106 : vector<2x128xf32> to vector<2x128xbf16>
    %110 = arith.index_cast %c3_i32 : i32 to index
    %c0_84 = arith.constant 0 : index
    %c0_85 = arith.constant 0 : index
    %111 = vector.load %arg6[%110, %c0_84, %c0_85] : memref<8x2x128xbf16, #tpu.memory_space<vmem>>, vector<1x2x128xbf16>
    %112 = vector.shape_cast %111 : vector<1x2x128xbf16> to vector<2x128xbf16>
    %113 = vector.shape_cast %109 : vector<2x128xbf16> to vector<1x2x128xbf16>
    tpu.vector_store %arg6[%110, %c0_84, %c0_85], %113 {strides = array<i32>} : memref<8x2x128xbf16, #tpu.memory_space<vmem>>, vector<1x2x128xbf16>,
    %c4_i32 = arith.constant 4 : i32
    %114 = arith.index_cast %c4_i32 : i32 to index
    %c0_86 = arith.constant 0 : index
    %c0_87 = arith.constant 0 : index
    %115 = vector.load %arg1[%114, %c0_86, %c0_87] : memref<8x2x128xbf16, #tpu.memory_space<vmem>>, vector<1x2x128xbf16>
    %116 = vector.shape_cast %115 : vector<1x2x128xbf16> to vector<2x128xbf16>
    %117 = arith.extf %116 : vector<2x128xbf16> to vector<2x128xf32>
    %c0_88 = arith.constant 0 : index
    %c0_89 = arith.constant 0 : index
    %118 = vector.load %arg8[%c0_88, %c0_89] : memref<2x128xf32, #tpu.memory_space<vmem>>, vector<2x128xf32>
    %119 = arith.truncf %118 : vector<2x128xf32> to vector<2x128xbf16>
    %c0_90 = arith.constant 0 : index
    %c0_91 = arith.constant 0 : index
    %120 = vector.load %arg2[%c0_90, %c0_91] : memref<128x128xbf16, #tpu.memory_space<vmem>>, vector<128x128xbf16>
    %cst_92 = arith.constant dense<0.000000e+00> : vector<2x128xf32>
    %121 = tpu.matmul %119, %120, %cst_92 {dimension_numbers = #tpu.dot_dimension_numbers<[1], [0], [0], [1], [0, 0, 1, 1], [], []>} : vector<2x128xbf16>, vector<128x128xbf16>, vector<2x128xf32> -> vector<2x128xf32>
    %122 = arith.addf %117, %121 : vector<2x128xf32>
    %123 = math.tanh %122 : vector<2x128xf32>
    %124 = arith.truncf %123 : vector<2x128xf32> to vector<2x128xbf16>
    %c0_93 = arith.constant 0 : index
    %c0_94 = arith.constant 0 : index
    %125 = vector.load %arg3[%c0_93, %c0_94] : memref<128x128xbf16, #tpu.memory_space<vmem>>, vector<128x128xbf16>
    %cst_95 = arith.constant dense<0.000000e+00> : vector<2x128xf32>
    %126 = tpu.matmul %124, %125, %cst_95 {dimension_numbers = #tpu.dot_dimension_numbers<[1], [0], [0], [1], [0, 0, 1, 1], [], []>} : vector<2x128xbf16>, vector<128x128xbf16>, vector<2x128xf32> -> vector<2x128xf32>
    %c0_96 = arith.constant 0 : index
    %c0_97 = arith.constant 0 : index
    %127 = vector.load %arg9[%c0_96, %c0_97] : memref<2x128xf32, #tpu.memory_space<vmem>>, vector<2x128xf32>
    %128 = arith.truncf %127 : vector<2x128xf32> to vector<2x128xbf16>
    %c0_98 = arith.constant 0 : index
    %c0_99 = arith.constant 0 : index
    %129 = vector.load %arg4[%c0_98, %c0_99] : memref<128x128xbf16, #tpu.memory_space<vmem>>, vector<128x128xbf16>
    %cst_100 = arith.constant dense<0.000000e+00> : vector<2x128xf32>
    %130 = tpu.matmul %128, %129, %cst_100 {dimension_numbers = #tpu.dot_dimension_numbers<[1], [0], [0], [1], [0, 0, 1, 1], [], []>} : vector<2x128xbf16>, vector<128x128xbf16>, vector<2x128xf32> -> vector<2x128xf32>
    %131 = arith.addf %126, %130 : vector<2x128xf32>
    %132 = arith.addf %131, %5 : vector<2x128xf32>
    %133 = math.tanh %132 : vector<2x128xf32>
    %c0_101 = arith.constant 0 : index
    %c0_102 = arith.constant 0 : index
    %134 = vector.load %arg8[%c0_101, %c0_102] : memref<2x128xf32, #tpu.memory_space<vmem>>, vector<2x128xf32>
    tpu.vector_store %arg8[%c0_101, %c0_102], %123 {strides = array<i32>} : memref<2x128xf32, #tpu.memory_space<vmem>>, vector<2x128xf32>,
    %c0_103 = arith.constant 0 : index
    %c0_104 = arith.constant 0 : index
    %135 = vector.load %arg9[%c0_103, %c0_104] : memref<2x128xf32, #tpu.memory_space<vmem>>, vector<2x128xf32>
    tpu.vector_store %arg9[%c0_103, %c0_104], %133 {strides = array<i32>} : memref<2x128xf32, #tpu.memory_space<vmem>>, vector<2x128xf32>,
    %136 = arith.truncf %133 : vector<2x128xf32> to vector<2x128xbf16>
    %137 = arith.index_cast %c4_i32 : i32 to index
    %c0_105 = arith.constant 0 : index
    %c0_106 = arith.constant 0 : index
    %138 = vector.load %arg6[%137, %c0_105, %c0_106] : memref<8x2x128xbf16, #tpu.memory_space<vmem>>, vector<1x2x128xbf16>
    %139 = vector.shape_cast %138 : vector<1x2x128xbf16> to vector<2x128xbf16>
    %140 = vector.shape_cast %136 : vector<2x128xbf16> to vector<1x2x128xbf16>
    tpu.vector_store %arg6[%137, %c0_105, %c0_106], %140 {strides = array<i32>} : memref<8x2x128xbf16, #tpu.memory_space<vmem>>, vector<1x2x128xbf16>,
    %c5_i32 = arith.constant 5 : i32
    %141 = arith.index_cast %c5_i32 : i32 to index
    %c0_107 = arith.constant 0 : index
    %c0_108 = arith.constant 0 : index
    %142 = vector.load %arg1[%141, %c0_107, %c0_108] : memref<8x2x128xbf16, #tpu.memory_space<vmem>>, vector<1x2x128xbf16>
    %143 = vector.shape_cast %142 : vector<1x2x128xbf16> to vector<2x128xbf16>
    %144 = arith.extf %143 : vector<2x128xbf16> to vector<2x128xf32>
    %c0_109 = arith.constant 0 : index
    %c0_110 = arith.constant 0 : index
    %145 = vector.load %arg8[%c0_109, %c0_110] : memref<2x128xf32, #tpu.memory_space<vmem>>, vector<2x128xf32>
    %146 = arith.truncf %145 : vector<2x128xf32> to vector<2x128xbf16>
    %c0_111 = arith.constant 0 : index
    %c0_112 = arith.constant 0 : index
    %147 = vector.load %arg2[%c0_111, %c0_112] : memref<128x128xbf16, #tpu.memory_space<vmem>>, vector<128x128xbf16>
    %cst_113 = arith.constant dense<0.000000e+00> : vector<2x128xf32>
    %148 = tpu.matmul %146, %147, %cst_113 {dimension_numbers = #tpu.dot_dimension_numbers<[1], [0], [0], [1], [0, 0, 1, 1], [], []>} : vector<2x128xbf16>, vector<128x128xbf16>, vector<2x128xf32> -> vector<2x128xf32>
    %149 = arith.addf %144, %148 : vector<2x128xf32>
    %150 = math.tanh %149 : vector<2x128xf32>
    %151 = arith.truncf %150 : vector<2x128xf32> to vector<2x128xbf16>
    %c0_114 = arith.constant 0 : index
    %c0_115 = arith.constant 0 : index
    %152 = vector.load %arg3[%c0_114, %c0_115] : memref<128x128xbf16, #tpu.memory_space<vmem>>, vector<128x128xbf16>
    %cst_116 = arith.constant dense<0.000000e+00> : vector<2x128xf32>
    %153 = tpu.matmul %151, %152, %cst_116 {dimension_numbers = #tpu.dot_dimension_numbers<[1], [0], [0], [1], [0, 0, 1, 1], [], []>} : vector<2x128xbf16>, vector<128x128xbf16>, vector<2x128xf32> -> vector<2x128xf32>
    %c0_117 = arith.constant 0 : index
    %c0_118 = arith.constant 0 : index
    %154 = vector.load %arg9[%c0_117, %c0_118] : memref<2x128xf32, #tpu.memory_space<vmem>>, vector<2x128xf32>
    %155 = arith.truncf %154 : vector<2x128xf32> to vector<2x128xbf16>
    %c0_119 = arith.constant 0 : index
    %c0_120 = arith.constant 0 : index
    %156 = vector.load %arg4[%c0_119, %c0_120] : memref<128x128xbf16, #tpu.memory_space<vmem>>, vector<128x128xbf16>
    %cst_121 = arith.constant dense<0.000000e+00> : vector<2x128xf32>
    %157 = tpu.matmul %155, %156, %cst_121 {dimension_numbers = #tpu.dot_dimension_numbers<[1], [0], [0], [1], [0, 0, 1, 1], [], []>} : vector<2x128xbf16>, vector<128x128xbf16>, vector<2x128xf32> -> vector<2x128xf32>
    %158 = arith.addf %153, %157 : vector<2x128xf32>
    %159 = arith.addf %158, %5 : vector<2x128xf32>
    %160 = math.tanh %159 : vector<2x128xf32>
    %c0_122 = arith.constant 0 : index
    %c0_123 = arith.constant 0 : index
    %161 = vector.load %arg8[%c0_122, %c0_123] : memref<2x128xf32, #tpu.memory_space<vmem>>, vector<2x128xf32>
    tpu.vector_store %arg8[%c0_122, %c0_123], %150 {strides = array<i32>} : memref<2x128xf32, #tpu.memory_space<vmem>>, vector<2x128xf32>,
    %c0_124 = arith.constant 0 : index
    %c0_125 = arith.constant 0 : index
    %162 = vector.load %arg9[%c0_124, %c0_125] : memref<2x128xf32, #tpu.memory_space<vmem>>, vector<2x128xf32>
    tpu.vector_store %arg9[%c0_124, %c0_125], %160 {strides = array<i32>} : memref<2x128xf32, #tpu.memory_space<vmem>>, vector<2x128xf32>,
    %163 = arith.truncf %160 : vector<2x128xf32> to vector<2x128xbf16>
    %164 = arith.index_cast %c5_i32 : i32 to index
    %c0_126 = arith.constant 0 : index
    %c0_127 = arith.constant 0 : index
    %165 = vector.load %arg6[%164, %c0_126, %c0_127] : memref<8x2x128xbf16, #tpu.memory_space<vmem>>, vector<1x2x128xbf16>
    %166 = vector.shape_cast %165 : vector<1x2x128xbf16> to vector<2x128xbf16>
    %167 = vector.shape_cast %163 : vector<2x128xbf16> to vector<1x2x128xbf16>
    tpu.vector_store %arg6[%164, %c0_126, %c0_127], %167 {strides = array<i32>} : memref<8x2x128xbf16, #tpu.memory_space<vmem>>, vector<1x2x128xbf16>,
    %c6_i32 = arith.constant 6 : i32
    %168 = arith.index_cast %c6_i32 : i32 to index
    %c0_128 = arith.constant 0 : index
    %c0_129 = arith.constant 0 : index
    %169 = vector.load %arg1[%168, %c0_128, %c0_129] : memref<8x2x128xbf16, #tpu.memory_space<vmem>>, vector<1x2x128xbf16>
    %170 = vector.shape_cast %169 : vector<1x2x128xbf16> to vector<2x128xbf16>
    %171 = arith.extf %170 : vector<2x128xbf16> to vector<2x128xf32>
    %c0_130 = arith.constant 0 : index
    %c0_131 = arith.constant 0 : index
    %172 = vector.load %arg8[%c0_130, %c0_131] : memref<2x128xf32, #tpu.memory_space<vmem>>, vector<2x128xf32>
    %173 = arith.truncf %172 : vector<2x128xf32> to vector<2x128xbf16>
    %c0_132 = arith.constant 0 : index
    %c0_133 = arith.constant 0 : index
    %174 = vector.load %arg2[%c0_132, %c0_133] : memref<128x128xbf16, #tpu.memory_space<vmem>>, vector<128x128xbf16>
    %cst_134 = arith.constant dense<0.000000e+00> : vector<2x128xf32>
    %175 = tpu.matmul %173, %174, %cst_134 {dimension_numbers = #tpu.dot_dimension_numbers<[1], [0], [0], [1], [0, 0, 1, 1], [], []>} : vector<2x128xbf16>, vector<128x128xbf16>, vector<2x128xf32> -> vector<2x128xf32>
    %176 = arith.addf %171, %175 : vector<2x128xf32>
    %177 = math.tanh %176 : vector<2x128xf32>
    %178 = arith.truncf %177 : vector<2x128xf32> to vector<2x128xbf16>
    %c0_135 = arith.constant 0 : index
    %c0_136 = arith.constant 0 : index
    %179 = vector.load %arg3[%c0_135, %c0_136] : memref<128x128xbf16, #tpu.memory_space<vmem>>, vector<128x128xbf16>
    %cst_137 = arith.constant dense<0.000000e+00> : vector<2x128xf32>
    %180 = tpu.matmul %178, %179, %cst_137 {dimension_numbers = #tpu.dot_dimension_numbers<[1], [0], [0], [1], [0, 0, 1, 1], [], []>} : vector<2x128xbf16>, vector<128x128xbf16>, vector<2x128xf32> -> vector<2x128xf32>
    %c0_138 = arith.constant 0 : index
    %c0_139 = arith.constant 0 : index
    %181 = vector.load %arg9[%c0_138, %c0_139] : memref<2x128xf32, #tpu.memory_space<vmem>>, vector<2x128xf32>
    %182 = arith.truncf %181 : vector<2x128xf32> to vector<2x128xbf16>
    %c0_140 = arith.constant 0 : index
    %c0_141 = arith.constant 0 : index
    %183 = vector.load %arg4[%c0_140, %c0_141] : memref<128x128xbf16, #tpu.memory_space<vmem>>, vector<128x128xbf16>
    %cst_142 = arith.constant dense<0.000000e+00> : vector<2x128xf32>
    %184 = tpu.matmul %182, %183, %cst_142 {dimension_numbers = #tpu.dot_dimension_numbers<[1], [0], [0], [1], [0, 0, 1, 1], [], []>} : vector<2x128xbf16>, vector<128x128xbf16>, vector<2x128xf32> -> vector<2x128xf32>
    %185 = arith.addf %180, %184 : vector<2x128xf32>
    %186 = arith.addf %185, %5 : vector<2x128xf32>
    %187 = math.tanh %186 : vector<2x128xf32>
    %c0_143 = arith.constant 0 : index
    %c0_144 = arith.constant 0 : index
    %188 = vector.load %arg8[%c0_143, %c0_144] : memref<2x128xf32, #tpu.memory_space<vmem>>, vector<2x128xf32>
    tpu.vector_store %arg8[%c0_143, %c0_144], %177 {strides = array<i32>} : memref<2x128xf32, #tpu.memory_space<vmem>>, vector<2x128xf32>,
    %c0_145 = arith.constant 0 : index
    %c0_146 = arith.constant 0 : index
    %189 = vector.load %arg9[%c0_145, %c0_146] : memref<2x128xf32, #tpu.memory_space<vmem>>, vector<2x128xf32>
    tpu.vector_store %arg9[%c0_145, %c0_146], %187 {strides = array<i32>} : memref<2x128xf32, #tpu.memory_space<vmem>>, vector<2x128xf32>,
    %190 = arith.truncf %187 : vector<2x128xf32> to vector<2x128xbf16>
    %191 = arith.index_cast %c6_i32 : i32 to index
    %c0_147 = arith.constant 0 : index
    %c0_148 = arith.constant 0 : index
    %192 = vector.load %arg6[%191, %c0_147, %c0_148] : memref<8x2x128xbf16, #tpu.memory_space<vmem>>, vector<1x2x128xbf16>
    %193 = vector.shape_cast %192 : vector<1x2x128xbf16> to vector<2x128xbf16>
    %194 = vector.shape_cast %190 : vector<2x128xbf16> to vector<1x2x128xbf16>
    tpu.vector_store %arg6[%191, %c0_147, %c0_148], %194 {strides = array<i32>} : memref<8x2x128xbf16, #tpu.memory_space<vmem>>, vector<1x2x128xbf16>,
    %c7_i32 = arith.constant 7 : i32
    %195 = arith.index_cast %c7_i32 : i32 to index
    %c0_149 = arith.constant 0 : index
    %c0_150 = arith.constant 0 : index
    %196 = vector.load %arg1[%195, %c0_149, %c0_150] : memref<8x2x128xbf16, #tpu.memory_space<vmem>>, vector<1x2x128xbf16>
    %197 = vector.shape_cast %196 : vector<1x2x128xbf16> to vector<2x128xbf16>
    %198 = arith.extf %197 : vector<2x128xbf16> to vector<2x128xf32>
    %c0_151 = arith.constant 0 : index
    %c0_152 = arith.constant 0 : index
    %199 = vector.load %arg8[%c0_151, %c0_152] : memref<2x128xf32, #tpu.memory_space<vmem>>, vector<2x128xf32>
    %200 = arith.truncf %199 : vector<2x128xf32> to vector<2x128xbf16>
    %c0_153 = arith.constant 0 : index
    %c0_154 = arith.constant 0 : index
    %201 = vector.load %arg2[%c0_153, %c0_154] : memref<128x128xbf16, #tpu.memory_space<vmem>>, vector<128x128xbf16>
    %cst_155 = arith.constant dense<0.000000e+00> : vector<2x128xf32>
    %202 = tpu.matmul %200, %201, %cst_155 {dimension_numbers = #tpu.dot_dimension_numbers<[1], [0], [0], [1], [0, 0, 1, 1], [], []>} : vector<2x128xbf16>, vector<128x128xbf16>, vector<2x128xf32> -> vector<2x128xf32>
    %203 = arith.addf %198, %202 : vector<2x128xf32>
    %204 = math.tanh %203 : vector<2x128xf32>
    %205 = arith.truncf %204 : vector<2x128xf32> to vector<2x128xbf16>
    %c0_156 = arith.constant 0 : index
    %c0_157 = arith.constant 0 : index
    %206 = vector.load %arg3[%c0_156, %c0_157] : memref<128x128xbf16, #tpu.memory_space<vmem>>, vector<128x128xbf16>
    %cst_158 = arith.constant dense<0.000000e+00> : vector<2x128xf32>
    %207 = tpu.matmul %205, %206, %cst_158 {dimension_numbers = #tpu.dot_dimension_numbers<[1], [0], [0], [1], [0, 0, 1, 1], [], []>} : vector<2x128xbf16>, vector<128x128xbf16>, vector<2x128xf32> -> vector<2x128xf32>
    %c0_159 = arith.constant 0 : index
    %c0_160 = arith.constant 0 : index
    %208 = vector.load %arg9[%c0_159, %c0_160] : memref<2x128xf32, #tpu.memory_space<vmem>>, vector<2x128xf32>
    %209 = arith.truncf %208 : vector<2x128xf32> to vector<2x128xbf16>
    %c0_161 = arith.constant 0 : index
    %c0_162 = arith.constant 0 : index
    %210 = vector.load %arg4[%c0_161, %c0_162] : memref<128x128xbf16, #tpu.memory_space<vmem>>, vector<128x128xbf16>
    %cst_163 = arith.constant dense<0.000000e+00> : vector<2x128xf32>
    %211 = tpu.matmul %209, %210, %cst_163 {dimension_numbers = #tpu.dot_dimension_numbers<[1], [0], [0], [1], [0, 0, 1, 1], [], []>} : vector<2x128xbf16>, vector<128x128xbf16>, vector<2x128xf32> -> vector<2x128xf32>
    %212 = arith.addf %207, %211 : vector<2x128xf32>
    %213 = arith.addf %212, %5 : vector<2x128xf32>
    %214 = math.tanh %213 : vector<2x128xf32>
    %c0_164 = arith.constant 0 : index
    %c0_165 = arith.constant 0 : index
    %215 = vector.load %arg8[%c0_164, %c0_165] : memref<2x128xf32, #tpu.memory_space<vmem>>, vector<2x128xf32>
    tpu.vector_store %arg8[%c0_164, %c0_165], %204 {strides = array<i32>} : memref<2x128xf32, #tpu.memory_space<vmem>>, vector<2x128xf32>,
    %c0_166 = arith.constant 0 : index
    %c0_167 = arith.constant 0 : index
    %216 = vector.load %arg9[%c0_166, %c0_167] : memref<2x128xf32, #tpu.memory_space<vmem>>, vector<2x128xf32>
    tpu.vector_store %arg9[%c0_166, %c0_167], %214 {strides = array<i32>} : memref<2x128xf32, #tpu.memory_space<vmem>>, vector<2x128xf32>,
    %217 = arith.truncf %214 : vector<2x128xf32> to vector<2x128xbf16>
    %218 = arith.index_cast %c7_i32 : i32 to index
    %c0_168 = arith.constant 0 : index
    %c0_169 = arith.constant 0 : index
    %219 = vector.load %arg6[%218, %c0_168, %c0_169] : memref<8x2x128xbf16, #tpu.memory_space<vmem>>, vector<1x2x128xbf16>
    %220 = vector.shape_cast %219 : vector<1x2x128xbf16> to vector<2x128xbf16>
    %221 = vector.shape_cast %217 : vector<2x128xbf16> to vector<1x2x128xbf16>
    tpu.vector_store %arg6[%218, %c0_168, %c0_169], %221 {strides = array<i32>} : memref<8x2x128xbf16, #tpu.memory_space<vmem>>, vector<1x2x128xbf16>,
    %c8_i32 = arith.constant 8 : i32
    %c0_170 = arith.constant 0 : index
    %c0_171 = arith.constant 0 : index
    %222 = vector.load %arg8[%c0_170, %c0_171] : memref<2x128xf32, #tpu.memory_space<vmem>>, vector<2x128xf32>
    %c0_172 = arith.constant 0 : index
    %c0_173 = arith.constant 0 : index
    %c0_174 = arith.constant 0 : index
    %223 = vector.load %arg7[%c0_172, %c0_173, %c0_174] : memref<2x2x128xf32, #tpu.memory_space<vmem>>, vector<1x2x128xf32>
    %224 = vector.shape_cast %223 : vector<1x2x128xf32> to vector<2x128xf32>
    %225 = vector.shape_cast %222 : vector<2x128xf32> to vector<1x2x128xf32>
    tpu.vector_store %arg7[%c0_172, %c0_173, %c0_174], %225 {strides = array<i32>} : memref<2x2x128xf32, #tpu.memory_space<vmem>>, vector<1x2x128xf32>,
    %c0_175 = arith.constant 0 : index
    %c0_176 = arith.constant 0 : index
    %226 = vector.load %arg9[%c0_175, %c0_176] : memref<2x128xf32, #tpu.memory_space<vmem>>, vector<2x128xf32>
    %c1 = arith.constant 1 : index
    %c0_177 = arith.constant 0 : index
    %c0_178 = arith.constant 0 : index
    %227 = vector.load %arg7[%c1, %c0_177, %c0_178] : memref<2x2x128xf32, #tpu.memory_space<vmem>>, vector<1x2x128xf32>
    %228 = vector.shape_cast %227 : vector<1x2x128xf32> to vector<2x128xf32>
    %229 = vector.shape_cast %226 : vector<2x128xf32> to vector<1x2x128xf32>
    tpu.vector_store %arg7[%c1, %c0_177, %c0_178], %229 {strides = array<i32>} : memref<2x2x128xf32, #tpu.memory_space<vmem>>, vector<1x2x128xf32>,
    return
  }
  func.func @transform_0(%arg0: i32) -> (i32, i32, i32) {
    %c0_i32 = arith.constant 0 : i32
    %c0_i32_0 = arith.constant 0 : i32
    %c0_i32_1 = arith.constant 0 : i32
    return %arg0, %c0_i32, %c0_i32_0 : i32, i32, i32
  }
  func.func @transform_1(%arg0: i32) -> (i32, i32) {
    %c0_i32 = arith.constant 0 : i32
    %c0_i32_0 = arith.constant 0 : i32
    %c0_i32_1 = arith.constant 0 : i32
    return %c0_i32, %c0_i32_0 : i32, i32
  }
  func.func @transform_2(%arg0: i32) -> (i32, i32) {
    %c0_i32 = arith.constant 0 : i32
    %c0_i32_0 = arith.constant 0 : i32
    %c0_i32_1 = arith.constant 0 : i32
    return %c0_i32, %c0_i32_0 : i32, i32
  }
  func.func @transform_3(%arg0: i32) -> (i32, i32) {
    %c0_i32 = arith.constant 0 : i32
    %c0_i32_0 = arith.constant 0 : i32
    %c0_i32_1 = arith.constant 0 : i32
    return %c0_i32, %c0_i32_0 : i32, i32
  }
  func.func @transform_4(%arg0: i32) -> (i32, i32) {
    %c0_i32 = arith.constant 0 : i32
    %c0_i32_0 = arith.constant 0 : i32
    %c0_i32_1 = arith.constant 0 : i32
    return %c0_i32, %c0_i32_0 : i32, i32
  }
  func.func @transform_5(%arg0: i32) -> (i32, i32, i32) {
    %c0_i32 = arith.constant 0 : i32
    %c0_i32_0 = arith.constant 0 : i32
    %c0_i32_1 = arith.constant 0 : i32
    return %arg0, %c0_i32, %c0_i32_0 : i32, i32, i32
  }
  func.func @transform_6(%arg0: i32) -> (i32, i32, i32) {
    %c0_i32 = arith.constant 0 : i32
    %c0_i32_0 = arith.constant 0 : i32
    %c0_i32_1 = arith.constant 0 : i32
    %c0_i32_2 = arith.constant 0 : i32
    return %c0_i32, %c0_i32_0, %c0_i32_1 : i32, i32, i32
  }
}

module attributes {stable_mosaic.version = 11 : i64} {
  func.func @_linear_kernel(%arg0: i32, %arg1: i32, %arg2: memref<16x128xbf16, #tpu.memory_space<vmem>>, %arg3: memref<128x512xbf16, #tpu.memory_space<vmem>>, %arg4: memref<1x512xf32, #tpu.memory_space<vmem>>, %arg5: memref<16x512xf32, #tpu.memory_space<vmem>>) attributes {dimension_semantics = [#tpu.dimension_semantics<parallel>, #tpu.dimension_semantics<parallel>], iteration_bounds = array<i64: 1, 2>, scalar_prefetch = 0 : i64, scratch_operands = 0 : i64, tpu.core_type = #tpu.core_type<tc>, window_params = [{transform_indices = @transform_0, window_bounds = array<i64: 16, 128>}, {transform_indices = @transform_1, window_bounds = array<i64: 128, 512>}, {transform_indices = @transform_2, window_bounds = array<i64: 1, 512>}, {transform_indices = @transform_3, window_bounds = array<i64: 16, 512>}]} {
    %c0 = arith.constant 0 : index
    %c0_0 = arith.constant 0 : index
    %0 = vector.load %arg2[%c0, %c0_0] : memref<16x128xbf16, #tpu.memory_space<vmem>>, vector<16x128xbf16>
    %c0_1 = arith.constant 0 : index
    %c0_2 = arith.constant 0 : index
    %1 = vector.load %arg3[%c0_1, %c0_2] : memref<128x512xbf16, #tpu.memory_space<vmem>>, vector<128x512xbf16>
    %cst = arith.constant dense<0.000000e+00> : vector<16x512xf32>
    %2 = tpu.matmul %0, %1, %cst {dimension_numbers = #tpu.dot_dimension_numbers<[1], [0], [0], [1], [0, 0, 1, 1], [], []>} : vector<16x128xbf16>, vector<128x512xbf16>, vector<16x512xf32> -> vector<16x512xf32>
    %c0_3 = arith.constant 0 : index
    %c0_4 = arith.constant 0 : index
    %3 = vector.load %arg4[%c0_3, %c0_4] : memref<1x512xf32, #tpu.memory_space<vmem>>, vector<1x512xf32>
    %4 = vector.broadcast %3 : vector<1x512xf32> to vector<16x512xf32>
    %5 = arith.addf %2, %4 : vector<16x512xf32>
    %c0_5 = arith.constant 0 : index
    %c0_6 = arith.constant 0 : index
    %6 = vector.load %arg5[%c0_5, %c0_6] : memref<16x512xf32, #tpu.memory_space<vmem>>, vector<16x512xf32>
    tpu.vector_store %arg5[%c0_5, %c0_6], %5 {strides = array<i32>} : memref<16x512xf32, #tpu.memory_space<vmem>>, vector<16x512xf32>,
    return
  }
  func.func @transform_0(%arg0: i32, %arg1: i32) -> (i32, i32) {
    %c0_i32 = arith.constant 0 : i32
    %c0_i32_0 = arith.constant 0 : i32
    return %arg0, %c0_i32 : i32, i32
  }
  func.func @transform_1(%arg0: i32, %arg1: i32) -> (i32, i32) {
    %c0_i32 = arith.constant 0 : i32
    %c0_i32_0 = arith.constant 0 : i32
    return %c0_i32, %arg1 : i32, i32
  }
  func.func @transform_2(%arg0: i32, %arg1: i32) -> (i32, i32) {
    %c0_i32 = arith.constant 0 : i32
    %c0_i32_0 = arith.constant 0 : i32
    return %c0_i32, %arg1 : i32, i32
  }
  func.func @transform_3(%arg0: i32, %arg1: i32) -> (i32, i32) {
    %c0_i32 = arith.constant 0 : i32
    return %arg0, %arg1 : i32, i32
  }
}

</mosaic_0001>

<llo_original>
// kernel: vanilla_rnn_language_forward.3
$region0: #{vanilla_rnn_language_forward.3}
  #allocation0 [shape = 'u32[]', space=smem, size = 0x4, offset = 0x4, fixed_abs, tag = 'smem constant byte address 0x4 - core index']
  #allocation1 [shape = 'u32[144,128]{1,0:T(1,128)}', space=vmem, size = 0x12000, scoped, tag = 'internal scratch']
  %s0 = inlined_call_operand.vmem [shape: bf16[16,128], index: 0, kind: input, shape index: {}]
  %s1 = inlined_call_operand.vmem [shape: bf16[128,128], index: 1, kind: input, shape index: {}]
  %s2 = inlined_call_operand.vmem [shape: f32[1,128], index: 2, kind: input, shape index: {}]
  %s3 = inlined_call_operand.vmem [shape: bf16[16,128], index: 3, kind: output, shape index: {}]
  %s4 = sld [smem:[#allocation0]]
  $region22: #{vanilla_rnn_language_forward.3} parent=0
    _
  %s6 = ssub.s32 1, %s4
  %s7 = scalar_select 0, %s6, %s4
  // Predicated region
  $region2: #{vanilla_rnn_language_forward.3} parent=0 // pred_check
    _
  $region3: #{vanilla_rnn_language_forward.3} parent=0 // pred_check_branch
    %9 = sbr.rel (0) target = $region5
  $region4: #{vanilla_rnn_language_forward.3} parent=0 // pred_region
    _
  $region5: #{vanilla_rnn_language_forward.3} parent=0 // pred_fallthru
    _
  // Predicated region
  $region6: #{vanilla_rnn_language_forward.3} parent=0 // pred_check
    _
  $region7: #{vanilla_rnn_language_forward.3} parent=0 // pred_check_branch
    %11 = sbr.rel (0) target = $region9
  $region8: #{vanilla_rnn_language_forward.3} parent=0 // pred_region
    _
  $region9: #{vanilla_rnn_language_forward.3} parent=0 // pred_fallthru
    _
  // Predicated region
  $region10: #{vanilla_rnn_language_forward.3} parent=0 // pred_check
    _
  $region11: #{vanilla_rnn_language_forward.3} parent=0 // pred_check_branch
    %13 = sbr.rel (0) target = $region13
  $region12: #{vanilla_rnn_language_forward.3} parent=0 // pred_region
    _
  $region13: #{vanilla_rnn_language_forward.3} parent=0 // pred_fallthru
    _
  %v15 = vld [vmem:[%s0] sm:$0xf]
  %v16 = vld [vmem:[%s0 + $0x4] sm:$0xf]
  %v17 = vld [vmem:[%s1] sm:$0xf]
  %v18 = vld [vmem:[%s1 + $0x4] sm:$0xf]
  %v19 = vld [vmem:[%s1 + $0x8] sm:$0xf]
  %v20 = vld [vmem:[%s1 + $0xc] sm:$0xf]
  %v21 = vld [vmem:[%s1 + $0x10] sm:$0xf]
  %v22 = vld [vmem:[%s1 + $0x14] sm:$0xf]
  %v23 = vld [vmem:[%s1 + $0x18] sm:$0xf]
  %v24 = vld [vmem:[%s1 + $0x1c] sm:$0xf]
  %v25 = vld [vmem:[%s1 + $0x20] sm:$0xf]
  %v26 = vld [vmem:[%s1 + $0x24] sm:$0xf]
  %v27 = vld [vmem:[%s1 + $0x28] sm:$0xf]
  %v28 = vld [vmem:[%s1 + $0x2c] sm:$0xf]
  %v29 = vld [vmem:[%s1 + $0x30] sm:$0xf]
  %v30 = vld [vmem:[%s1 + $0x34] sm:$0xf]
  %v31 = vld [vmem:[%s1 + $0x38] sm:$0xf]
  %v32 = vld [vmem:[%s1 + $0x3c] sm:$0xf]
  %v33 = vld [vmem:[%s2] sm:$0x1]
  %v35 = vlaneseq
  %v36 = vshrl.u32 %v35, 7
  %v37 = vsub.s32 0, %v36
  %v38 = vrot.slane %v33, %v37
  %v42 = vunpack.c.l.b16 %v15
  %v43 = vunpack.c.l.b16 %v16
  %v44 = vpack.c.b16 %v43, %v42
  %v62 = vunpack.c.l.b16 %v17
  %v63 = vunpack.c.l.b16 %v18
  %v64 = vunpack.c.l.b16 %v19
  %v65 = vunpack.c.l.b16 %v20
  %v66 = vunpack.c.l.b16 %v21
  %v67 = vunpack.c.l.b16 %v22
  %v68 = vunpack.c.l.b16 %v23
  %v69 = vunpack.c.l.b16 %v24
  %v70 = vunpack.c.l.b16 %v25
  %v71 = vunpack.c.l.b16 %v26
  %v72 = vunpack.c.l.b16 %v27
  %v73 = vunpack.c.l.b16 %v28
  %v74 = vunpack.c.l.b16 %v29
  %v75 = vunpack.c.l.b16 %v30
  %v76 = vunpack.c.l.b16 %v31
  %v77 = vunpack.c.l.b16 %v32
  %v78 = vpack.c.b16 %v63, %v62
  %v79 = vpack.c.b16 %v65, %v64
  %v80 = vpack.c.b16 %v67, %v66
  %v81 = vpack.c.b16 %v69, %v68
  %v82 = vpack.c.b16 %v71, %v70
  %v83 = vpack.c.b16 %v73, %v72
  %v84 = vpack.c.b16 %v75, %v74
  %v85 = vpack.c.b16 %v77, %v76
  %94 = vmatprep.subr.bf16.mxu0 0
  %95 = vmatpush1.bf16.msra.mxu0 %v78
  %96 = vmatprep.subr.bf16.mxu0 0
  %97 = vmatpush1.bf16.msra.mxu0 %v79
  %98 = vmatprep.subr.bf16.mxu0 0
  %99 = vmatpush1.bf16.msra.mxu0 %v80
  %100 = vmatprep.subr.bf16.mxu0 0
  %101 = vmatpush1.bf16.msra.mxu0 %v81
  %102 = vmatprep.subr.bf16.mxu0 0
  %103 = vmatpush1.bf16.msra.mxu0 %v82
  %104 = vmatprep.subr.bf16.mxu0 0
  %105 = vmatpush1.bf16.msra.mxu0 %v83
  %106 = vmatprep.subr.bf16.mxu0 0
  %107 = vmatpush1.bf16.msra.mxu0 %v84
  %108 = vmatprep.subr.bf16.mxu0 0
  %109 = vmatpush1.bf16.msra.mxu0 %v85
  %110 = vmatprep.subr.bf16.mxu0 0
  %111 = vmatpush1.bf16.msra.mxu0 0
  %112 = vmatprep.subr.bf16.mxu0 0
  %113 = vmatpush1.bf16.msra.mxu0 0
  %114 = vmatprep.subr.bf16.mxu0 0
  %115 = vmatpush1.bf16.msra.mxu0 0
  %116 = vmatprep.subr.bf16.mxu0 0
  %117 = vmatpush1.bf16.msra.mxu0 0
  %118 = vmatprep.subr.bf16.mxu0 0
  %119 = vmatpush1.bf16.msra.mxu0 0
  %120 = vmatprep.subr.bf16.mxu0 0
  %121 = vmatpush1.bf16.msra.mxu0 0
  %122 = vmatprep.subr.bf16.mxu0 0
  %123 = vmatpush1.bf16.msra.mxu0 0
  %124 = vmatprep.subr.bf16.mxu0 0
  %125 = vmatpush1.bf16.msra.mxu0 0
  %126 = vmatprep.mubr.bf16.mxu0 0
  %127 = vmatmul.mubr.bf16.gmra.mrb[0].mxu0 %v44
  %v128 = vpop.f32.mrb[0].mxu0
  %v129 = vadd.f32 %v38, %v128
  %v130 = vpop.f32.mrb[0].mxu0
  %v131 = vpop.f32.mrb[0].mxu0
  %v132 = vadd.f32 %v38, %v131
  %v133 = vpop.f32.mrb[0].mxu0
  %134 = vdwg.mxu0
  %v135 = vpack.c.bf16 %v132, %v129
  %v137 = vunpack.c.l.b16 %v135
  %v138 = vunpack.c.h.b16 %v135
  %v139 = vpack.c.b16 %v137, %v137
  %v140 = vpack.c.b16 %v138, %v138
  %143 = vst [vmem:[%s3] sm:$0xf] %v139
  %144 = vst [vmem:[%s3 + $0x4] sm:$0xf] %v140
  // Predicated region
  $region14: #{vanilla_rnn_language_forward.3} parent=0 // pred_check
    _
  $region15: #{vanilla_rnn_language_forward.3} parent=0 // pred_check_branch
    %146 = sbr.rel (0) target = $region17
  $region16: #{vanilla_rnn_language_forward.3} parent=0 // pred_region
    _
  $region17: #{vanilla_rnn_language_forward.3} parent=0 // pred_fallthru
    _
  // Predicated region
  $region18: #{vanilla_rnn_language_forward.3} parent=0 // pred_check
    _
  $region19: #{vanilla_rnn_language_forward.3} parent=0 // pred_check_branch
    %148 = sbr.rel (0) target = $region21
  $region20: #{vanilla_rnn_language_forward.3} parent=0 // pred_region
    _
  $region21: #{vanilla_rnn_language_forward.3} parent=0 // pred_fallthru
    _

// kernel: vanilla_rnn_language_forward.5
$region0: #{vanilla_rnn_language_forward.5}
  #allocation0 [shape = 'u32[]', space=smem, size = 0x4, offset = 0x4, fixed_abs, tag = 'smem constant byte address 0x4 - core index']
  #allocation1 [shape = 'u32[144,128]{1,0:T(1,128)}', space=vmem, size = 0x12000, scoped, tag = 'internal scratch']
  %s0 = inlined_call_operand.vmem [shape: bf16[16,128], index: 0, kind: input, shape index: {}]
  %s1 = inlined_call_operand.vmem [shape: bf16[128,1024], index: 1, kind: input, shape index: {}]
  %s2 = inlined_call_operand.vmem [shape: f32[1,1024], index: 2, kind: input, shape index: {}]
  %s3 = inlined_call_operand.vmem [shape: f32[16,1024], index: 3, kind: output, shape index: {}]
  %s4 = sld [smem:[#allocation0]]
  $region87: #{vanilla_rnn_language_forward.5} parent=0
    _
  %s6 = ssub.s32 1, %s4
  %s7 = scalar_select 0, %s6, %s4
  $region1: #{vanilla_rnn_language_forward.5} parent=0
    #allocation2 [shape = 'u8[262144]{0}', space=vmem, size = 0x40000, scoped, tag = 'input window, operand 1']
    #allocation3 [shape = 'u8[65536]{0}', space=vmem, size = 0x10000, scoped, tag = 'output window, operand 0']
    loop: start=0, step=1, limit=4
    $region2: #{vanilla_rnn_language_forward.5} parent=1 // loop_pre_header
      _
    $region3: #{vanilla_rnn_language_forward.5} parent=1 // loop_header
      %s9 = sphi 0, %s13
      %p10 = scmp.ge.s32.totalorder %s9, 4
      %s16 = sphi 0, %s28
      %s17 = sphi 0, %s24
      %s18 = sphi 0, %s16
      %s19 = sphi 0, %s17
      %s20 = sphi 0, %s18
      %s21 = sphi 0, %s19
      %s31 = sphi 0, %s33
      %s34 = sphi 0, %s31
      %s35 = sphi 0, %s34
      %s51 = sphi 0, %s35
      %s57 = sphi 0, %s59
      %s60 = sphi 0, %s57
      %s61 = sphi 0, %s60
      %s77 = sphi 0, %s61
      %s83 = sphi 0, %s85
      %s86 = sphi 0, %s83
      %s87 = sphi 0, %s86
      %s103 = sphi 0, %s87
      %s111 = sphi 0, %s113
      %s114 = sphi 0, %s111
      %s115 = sphi 0, %s114
      %s131 = sphi 0, %s115
    $region4: #{vanilla_rnn_language_forward.5} parent=1 // loop_header_branch
      %12 = sbr.rel (%p10) target = $region8
    $region5: #{vanilla_rnn_language_forward.5} parent=1 // loop_body
      %s14 = ssub.s32 %s9, 1
      %s15 = ssub.s32 %s9, 2
      %s22 = sadd.s32 1, %s17
      %p23 = scmp.ge.s32.totalorder %s22, 2
      %s24 = scalar_select %p23, 0, %s22
      %s25 = sadd.s32 1, %s16
      %s26 = scalar_select %p23, %s25, %s16
      %p27 = scmp.ge.s32.totalorder %s26, 1
      %s28 = scalar_select %p27, 0, %s26
      %s29 = ssub.s32 %s16, %s28
      %p30 = scmp.eq.s32.totalorder %s29, 0
      %s32 = sadd.s32 %s31, 1
      %s33 = scalar_select %p30, %s31, %s32
      %p36 = pneg %p30
      %p37 = scmp.eq.s32.totalorder %s9, 1
      %p38 = por %p36, %p37
      %p39 = scmp.ne.s32.totalorder %s31, %s34
      %p40 = scmp.eq.s32.totalorder %s9, 0
      %p41 = por %p39, %p40
      %p42 = scmp.ne.s32.totalorder %s31, %s34
      %p43 = scmp.eq.s32.totalorder %s14, 1
      %p44 = por %p42, %p43
      %p45 = scmp.ne.s32.totalorder %s34, %s35
      %p46 = scmp.eq.s32.totalorder %s14, 0
      %p47 = por %p45, %p46
      %p48 = scmp.ne.s32.totalorder %s34, %s35
      %p49 = scmp.eq.s32.totalorder %s15, 1
      %p50 = por %p48, %p49
      %p52 = scmp.ne.s32.totalorder %s35, %s51
      %p53 = scmp.eq.s32.totalorder %s15, 0
      %p54 = por %p52, %p53
      %s55 = ssub.s32 %s17, %s24
      %p56 = scmp.eq.s32.totalorder %s55, 0
      %s58 = sadd.s32 %s57, 1
      %s59 = scalar_select %p56, %s57, %s58
      %p62 = pneg %p56
      %p63 = scmp.eq.s32.totalorder %s9, 1
      %p64 = por %p62, %p63
      %p65 = scmp.ne.s32.totalorder %s57, %s60
      %p66 = scmp.eq.s32.totalorder %s9, 0
      %p67 = por %p65, %p66
      %p68 = scmp.ne.s32.totalorder %s57, %s60
      %p69 = scmp.eq.s32.totalorder %s14, 1
      %p70 = por %p68, %p69
      %p71 = scmp.ne.s32.totalorder %s60, %s61
      %p72 = scmp.eq.s32.totalorder %s14, 0
      %p73 = por %p71, %p72
      %p74 = scmp.ne.s32.totalorder %s60, %s61
      %p75 = scmp.eq.s32.totalorder %s15, 1
      %p76 = por %p74, %p75
      %p78 = scmp.ne.s32.totalorder %s61, %s77
      %p79 = scmp.eq.s32.totalorder %s15, 0
      %p80 = por %p78, %p79
      %s81 = ssub.s32 %s17, %s24
      %p82 = scmp.eq.s32.totalorder %s81, 0
      %s84 = sadd.s32 %s83, 1
      %s85 = scalar_select %p82, %s83, %s84
      %p88 = pneg %p82
      %p89 = scmp.eq.s32.totalorder %s9, 1
      %p90 = por %p88, %p89
      %p91 = scmp.ne.s32.totalorder %s83, %s86
      %p92 = scmp.eq.s32.totalorder %s9, 0
      %p93 = por %p91, %p92
      %p94 = scmp.ne.s32.totalorder %s83, %s86
      %p95 = scmp.eq.s32.totalorder %s14, 1
      %p96 = por %p94, %p95
      %p97 = scmp.ne.s32.totalorder %s86, %s87
      %p98 = scmp.eq.s32.totalorder %s14, 0
      %p99 = por %p97, %p98
      %p100 = scmp.ne.s32.totalorder %s86, %s87
      %p101 = scmp.eq.s32.totalorder %s15, 1
      %p102 = por %p100, %p101
      %p104 = scmp.ne.s32.totalorder %s87, %s103
      %p105 = scmp.eq.s32.totalorder %s15, 0
      %p106 = por %p104, %p105
      %s107 = ssub.s32 %s16, %s28
      %s108 = ssub.s32 %s17, %s24
      %s109 = sor.u32 %s107, %s108
      %p110 = scmp.eq.s32.totalorder %s109, 0
      %s112 = sadd.s32 %s111, 1
      %s113 = scalar_select %p110, %s111, %s112
      %p116 = pneg %p110
      %p117 = scmp.eq.s32.totalorder %s9, 1
      %p118 = por %p116, %p117
      %p119 = scmp.ne.s32.totalorder %s111, %s114
      %p120 = scmp.eq.s32.totalorder %s9, 0
      %p121 = por %p119, %p120
      %p122 = scmp.ne.s32.totalorder %s111, %s114
      %p123 = scmp.eq.s32.totalorder %s14, 1
      %p124 = por %p122, %p123
      %p125 = scmp.ne.s32.totalorder %s114, %s115
      %p126 = scmp.eq.s32.totalorder %s14, 0
      %p127 = por %p125, %p126
      %p128 = scmp.ne.s32.totalorder %s114, %s115
      %p129 = scmp.eq.s32.totalorder %s15, 1
      %p130 = por %p128, %p129
      %p132 = scmp.ne.s32.totalorder %s115, %s131
      %p133 = scmp.eq.s32.totalorder %s15, 0
      %p134 = por %p132, %p133
      %p135 = scmp.le.s32.totalorder 1, %s9
      %p136 = scmp.lt.s32.totalorder %s9, 3
      %p137 = pnand %p135, %p136
      %p138 = pneg %p137
      // Predicated region
      $region9: #{vanilla_rnn_language_forward.5} parent=5 // pred_check
        _
      $region10: #{vanilla_rnn_language_forward.5} parent=5 // pred_check_branch
        %140 = sbr.rel (%p137) target = $region12
      $region11: #{vanilla_rnn_language_forward.5} parent=5 // pred_region
        %s141 = ssub.s32 %s9, 1
        // Predicated region
        $region13: #{vanilla_rnn_language_forward.5} parent=11 // pred_check
          %p142 = pneg %p47
        $region14: #{vanilla_rnn_language_forward.5} parent=11 // pred_check_branch
          %144 = sbr.rel (%p142) target = $region16
        $region15: #{vanilla_rnn_language_forward.5} parent=11 // pred_region
          %s145 = smul.u32 2, %s18
          %p146 = scmp.lt.s32.totalorder %s145, 1
          %s147 = scalar_select %p146, %s145, 1
          %s148 = smul.addr %s147, 4
          %s149 = scalar_lea.vmem %s0, %s148
          %s150 = smul.u32 2, %s18
        $region16: #{vanilla_rnn_language_forward.5} parent=11 // pred_fallthru
          _
      $region12: #{vanilla_rnn_language_forward.5} parent=5 // pred_fallthru
        _
      %p151 = scmp.lt.s32.totalorder %s9, 2
      // Predicated region
      $region17: #{vanilla_rnn_language_forward.5} parent=5 // pred_check
        %p152 = pneg %p151
      $region18: #{vanilla_rnn_language_forward.5} parent=5 // pred_check_branch
        %154 = sbr.rel (%p152) target = $region20
      $region19: #{vanilla_rnn_language_forward.5} parent=5 // pred_region
        // Predicated region
        $region21: #{vanilla_rnn_language_forward.5} parent=19 // pred_check
          %p155 = pneg %p67
        $region22: #{vanilla_rnn_language_forward.5} parent=19 // pred_check_branch
          %157 = sbr.rel (%p155) target = $region24
        $region23: #{vanilla_rnn_language_forward.5} parent=19 // pred_region
          %s158 = sand.u32 %s57, 1
          %s159 = sand.u32 %s57, 1
          %s160 = smul.addr %s159, 256
          %s161 = scalar_lea.vmem [#allocation2], %s160
          %s162 = smul.u32 4, %s17
          %s163 = smul.addr %s162, 4
          %s164 = scalar_lea.vmem %s1, %s163
          // Predicated region
          $region25: #{vanilla_rnn_language_forward.5} parent=23 // pred_check
            _
          $region26: #{vanilla_rnn_language_forward.5} parent=23 // pred_check_branch
            %166 = sbr.rel (0) target = $region28
          $region27: #{vanilla_rnn_language_forward.5} parent=23 // pred_region
            // Predicated region
            $region29: #{vanilla_rnn_language_forward.5} parent=27 // pred_check
              _
            $region30: #{vanilla_rnn_language_forward.5} parent=27 // pred_check_branch
              %168 = sbr.rel (0) target = $region32
            $region31: #{vanilla_rnn_language_forward.5} parent=27 // pred_region
              loop: start=0, step=1, limit=1
              $region33: #{vanilla_rnn_language_forward.5} parent=31 // loop_pre_header
                _
              $region34: #{vanilla_rnn_language_forward.5} parent=31 // loop_header
                %s170 = sphi 0, %s174
                %p171 = scmp.ge.s32.totalorder %s170, 1
                %s175 = sphi %s164, %s164
                %s176 = sphi %s161, %s161
              $region35: #{vanilla_rnn_language_forward.5} parent=31 // loop_header_branch
                %173 = sbr.rel (%p171) target = $region39
              $region36: #{vanilla_rnn_language_forward.5} parent=31 // loop_body
                %v177 = vld [vmem:[%s175] sm:$0xff]
                %178 = vst [vmem:[%s176] sm:$0xff] %v177
                %v179 = vld [vmem:[%s175 + $0x8] sm:$0xff]
                %180 = vst [vmem:[%s176 + $0x8] sm:$0xff] %v179
                %v181 = vld [vmem:[%s175 + $0x20] sm:$0xff]
                %182 = vst [vmem:[%s176 + $0x10] sm:$0xff] %v181
                %v183 = vld [vmem:[%s175 + $0x28] sm:$0xff]
                %184 = vst [vmem:[%s176 + $0x18] sm:$0xff] %v183
                %v185 = vld [vmem:[%s175 + $0x40] sm:$0xff]
                %186 = vst [vmem:[%s176 + $0x20] sm:$0xff] %v185
                %v187 = vld [vmem:[%s175 + $0x48] sm:$0xff]
                %188 = vst [vmem:[%s176 + $0x28] sm:$0xff] %v187
                %v189 = vld [vmem:[%s175 + $0x60] sm:$0xff]
                %190 = vst [vmem:[%s176 + $0x30] sm:$0xff] %v189
                %v191 = vld [vmem:[%s175 + $0x68] sm:$0xff]
                %192 = vst [vmem:[%s176 + $0x38] sm:$0xff] %v191
                %v193 = vld [vmem:[%s175 + $0x80] sm:$0xff]
                %194 = vst [vmem:[%s176 + $0x40] sm:$0xff] %v193
                %v195 = vld [vmem:[%s175 + $0x88] sm:$0xff]
                %196 = vst [vmem:[%s176 + $0x48] sm:$0xff] %v195
                %v197 = vld [vmem:[%s175 + $0xa0] sm:$0xff]
                %198 = vst [vmem:[%s176 + $0x50] sm:$0xff] %v197
                %v199 = vld [vmem:[%s175 + $0xa8] sm:$0xff]
                %200 = vst [vmem:[%s176 + $0x58] sm:$0xff] %v199
                %v201 = vld [vmem:[%s175 + $0xc0] sm:$0xff]
                %202 = vst [vmem:[%s176 + $0x60] sm:$0xff] %v201
                %v203 = vld [vmem:[%s175 + $0xc8] sm:$0xff]
                %204 = vst [vmem:[%s176 + $0x68] sm:$0xff] %v203
                %v205 = vld [vmem:[%s175 + $0xe0] sm:$0xff]
                %206 = vst [vmem:[%s176 + $0x70] sm:$0xff] %v205
                %v207 = vld [vmem:[%s175 + $0xe8] sm:$0xff]
                %208 = vst [vmem:[%s176 + $0x78] sm:$0xff] %v207
                %v209 = vld [vmem:[%s175 + $0x100] sm:$0xff]
                %210 = vst [vmem:[%s176 + $0x80] sm:$0xff] %v209
                %v211 = vld [vmem:[%s175 + $0x108] sm:$0xff]
                %212 = vst [vmem:[%s176 + $0x88] sm:$0xff] %v211
                %v213 = vld [vmem:[%s175 + $0x120] sm:$0xff]
                %214 = vst [vmem:[%s176 + $0x90] sm:$0xff] %v213
                %v215 = vld [vmem:[%s175 + $0x128] sm:$0xff]
                %216 = vst [vmem:[%s176 + $0x98] sm:$0xff] %v215
                %v217 = vld [vmem:[%s175 + $0x140] sm:$0xff]
                %218 = vst [vmem:[%s176 + $0xa0] sm:$0xff] %v217
                %v219 = vld [vmem:[%s175 + $0x148] sm:$0xff]
                %220 = vst [vmem:[%s176 + $0xa8] sm:$0xff] %v219
                %v221 = vld [vmem:[%s175 + $0x160] sm:$0xff]
                %222 = vst [vmem:[%s176 + $0xb0] sm:$0xff] %v221
                %v223 = vld [vmem:[%s175 + $0x168] sm:$0xff]
                %224 = vst [vmem:[%s176 + $0xb8] sm:$0xff] %v223
                %v225 = vld [vmem:[%s175 + $0x180] sm:$0xff]
                %226 = vst [vmem:[%s176 + $0xc0] sm:$0xff] %v225
                %v227 = vld [vmem:[%s175 + $0x188] sm:$0xff]
                %228 = vst [vmem:[%s176 + $0xc8] sm:$0xff] %v227
                %v229 = vld [vmem:[%s175 + $0x1a0] sm:$0xff]
                %230 = vst [vmem:[%s176 + $0xd0] sm:$0xff] %v229
                %v231 = vld [vmem:[%s175 + $0x1a8] sm:$0xff]
                %232 = vst [vmem:[%s176 + $0xd8] sm:$0xff] %v231
                %v233 = vld [vmem:[%s175 + $0x1c0] sm:$0xff]
                %234 = vst [vmem:[%s176 + $0xe0] sm:$0xff] %v233
                %v235 = vld [vmem:[%s175 + $0x1c8] sm:$0xff]
                %236 = vst [vmem:[%s176 + $0xe8] sm:$0xff] %v235
                %v237 = vld [vmem:[%s175 + $0x1e0] sm:$0xff]
                %238 = vst [vmem:[%s176 + $0xf0] sm:$0xff] %v237
                %v239 = vld [vmem:[%s175 + $0x1e8] sm:$0xff]
                %240 = vst [vmem:[%s176 + $0xf8] sm:$0xff] %v239
              $region37: #{vanilla_rnn_language_forward.5} parent=31 // loop_footer
                %s174 = sadd.s32 1, %s170
              $region38: #{vanilla_rnn_language_forward.5} parent=31 // loop_footer_branch
                %169 = sbr.rel target = $region34
              $region39: #{vanilla_rnn_language_forward.5} parent=31 // loop_exit
                _
            $region32: #{vanilla_rnn_language_forward.5} parent=27 // pred_fallthru
              _
            // Predicated region
            $region40: #{vanilla_rnn_language_forward.5} parent=27 // pred_check
              _
            $region41: #{vanilla_rnn_language_forward.5} parent=27 // pred_check_branch
              %242 = sbr.rel target = $region43
            $region42: #{vanilla_rnn_language_forward.5} parent=27 // pred_region
              _
            $region43: #{vanilla_rnn_language_forward.5} parent=27 // pred_fallthru
              _
          $region28: #{vanilla_rnn_language_forward.5} parent=23 // pred_fallthru
            _
          %243 = vnop
        $region24: #{vanilla_rnn_language_forward.5} parent=19 // pred_fallthru
          _
        // Predicated region
        $region44: #{vanilla_rnn_language_forward.5} parent=19 // pred_check
          %p244 = pneg %p93
        $region45: #{vanilla_rnn_language_forward.5} parent=19 // pred_check_branch
          %246 = sbr.rel (%p244) target = $region47
        $region46: #{vanilla_rnn_language_forward.5} parent=19 // pred_region
          %s247 = smul.u32 4, %s17
          %p248 = scmp.lt.s32.totalorder %s247, 7
          %s249 = scalar_select %p248, %s247, 7
          %s250 = scalar_lea.vmem %s2, %s249
          %s251 = smul.u32 4, %s17
        $region47: #{vanilla_rnn_language_forward.5} parent=19 // pred_fallthru
          _
      $region20: #{vanilla_rnn_language_forward.5} parent=5 // pred_fallthru
        _
      %p252 = scmp.le.s32.totalorder 1, %s9
      %p253 = scmp.lt.s32.totalorder %s9, 3
      %p254 = pnand %p252, %p253
      %p255 = pneg %p254
      // Predicated region
      $region48: #{vanilla_rnn_language_forward.5} parent=5 // pred_check
        _
      $region49: #{vanilla_rnn_language_forward.5} parent=5 // pred_check_branch
        %257 = sbr.rel (%p254) target = $region51
      $region50: #{vanilla_rnn_language_forward.5} parent=5 // pred_region
        %s258 = ssub.s32 %s9, 1
        %s259 = sand.u32 %s60, 1
        %s260 = sand.u32 %s60, 1
        %s261 = smul.addr %s260, 256
        %s262 = scalar_lea.vmem [#allocation2], %s261
        // Predicated region
        $region52: #{vanilla_rnn_language_forward.5} parent=50 // pred_check
          %p263 = pneg %p73
        $region53: #{vanilla_rnn_language_forward.5} parent=50 // pred_check_branch
          %265 = sbr.rel (%p263) target = $region55
        $region54: #{vanilla_rnn_language_forward.5} parent=50 // pred_region
          _
        $region55: #{vanilla_rnn_language_forward.5} parent=50 // pred_fallthru
          _
        %s266 = smul.u32 2, %s18
        %p267 = scmp.lt.s32.totalorder %s266, 1
        %s268 = scalar_select %p267, %s266, 1
        %s269 = smul.addr %s268, 4
        %s270 = scalar_lea.vmem %s0, %s269
        %p271 = pneg %p47
        %p272 = pneg %p44
        %s273 = sand.u32 %s60, 1
        %s274 = sand.u32 %s60, 1
        %s275 = smul.addr %s274, 256
        %s276 = scalar_lea.vmem [#allocation2], %s275
        %p277 = pneg %p73
        %p278 = pneg %p70
        %s279 = smul.u32 4, %s19
        %p280 = scmp.lt.s32.totalorder %s279, 7
        %s281 = scalar_select %p280, %s279, 7
        %s282 = scalar_lea.vmem %s2, %s281
        %p283 = pneg %p99
        %p284 = pneg %p96
        %p285 = pneg %p127
        %p286 = pneg %p124
        %s287 = sand.u32 %s114, 1
        %s288 = sand.u32 %s114, 1
        %s289 = smul.addr %s288, 64
        %s290 = scalar_lea.vmem [#allocation3], %s289
        %s291 = smul.u32 2, %s18
        %p292 = scmp.lt.s32.totalorder %s291, 1
        %s293 = scalar_select %p292, %s291, 1
        %s294 = smul.addr %s293, 4
        %s295 = scalar_lea.vmem %s0, %s294
        %s296 = smul.u32 2, %s18
        %s297 = smul.u32 4, %s19
        %s298 = smul.u32 4, %s19
        %p299 = scmp.lt.s32.totalorder %s298, 7
        %s300 = scalar_select %p299, %s298, 7
        %s301 = scalar_lea.vmem %s2, %s300
        %s302 = smul.u32 4, %s19
        %s303 = smul.u32 2, %s18
        %s304 = smul.u32 4, %s19
        %v306 = vld [vmem:[%s295] sm:$0xf]
        %v307 = vld [vmem:[%s295 + $0x4] sm:$0xf]
        %v308 = vld [vmem:[%s262] sm:$0xff]
        %v309 = vld [vmem:[%s262 + $0x8] sm:$0xff]
        %v310 = vld [vmem:[%s262 + $0x10] sm:$0xff]
        %v311 = vld [vmem:[%s262 + $0x18] sm:$0xff]
        %v312 = vld [vmem:[%s262 + $0x20] sm:$0xff]
        %v313 = vld [vmem:[%s262 + $0x28] sm:$0xff]
        %v314 = vld [vmem:[%s262 + $0x30] sm:$0xff]
        %v315 = vld [vmem:[%s262 + $0x38] sm:$0xff]
        %v316 = vld [vmem:[%s262 + $0x40] sm:$0xff]
        %v317 = vld [vmem:[%s262 + $0x48] sm:$0xff]
        %v318 = vld [vmem:[%s262 + $0x50] sm:$0xff]
        %v319 = vld [vmem:[%s262 + $0x58] sm:$0xff]
        %v320 = vld [vmem:[%s262 + $0x60] sm:$0xff]
        %v321 = vld [vmem:[%s262 + $0x68] sm:$0xff]
        %v322 = vld [vmem:[%s262 + $0x70] sm:$0xff]
        %v323 = vld [vmem:[%s262 + $0x78] sm:$0xff]
        %v324 = vld [vmem:[%s262 + $0x80] sm:$0xff]
        %v325 = vld [vmem:[%s262 + $0x88] sm:$0xff]
        %v326 = vld [vmem:[%s262 + $0x90] sm:$0xff]
        %v327 = vld [vmem:[%s262 + $0x98] sm:$0xff]
        %v328 = vld [vmem:[%s262 + $0xa0] sm:$0xff]
        %v329 = vld [vmem:[%s262 + $0xa8] sm:$0xff]
        %v330 = vld [vmem:[%s262 + $0xb0] sm:$0xff]
        %v331 = vld [vmem:[%s262 + $0xb8] sm:$0xff]
        %v332 = vld [vmem:[%s262 + $0xc0] sm:$0xff]
        %v333 = vld [vmem:[%s262 + $0xc8] sm:$0xff]
        %v334 = vld [vmem:[%s262 + $0xd0] sm:$0xff]
        %v335 = vld [vmem:[%s262 + $0xd8] sm:$0xff]
        %v336 = vld [vmem:[%s262 + $0xe0] sm:$0xff]
        %v337 = vld [vmem:[%s262 + $0xe8] sm:$0xff]
        %v338 = vld [vmem:[%s262 + $0xf0] sm:$0xff]
        %v339 = vld [vmem:[%s262 + $0xf8] sm:$0xff]
        %v340 = vld [vmem:[%s301] sm:$0xf]
        %v342 = vlaneseq
        %v343 = vshrl.u32 %v342, 7
        %v344 = vsub.s32 0, %v343
        %v345 = vrot.slane %v340, %v344
        %v346 = vlaneseq
        %v347 = vshrl.u32 %v346, 7
        %v348 = vsub.s32 1, %v347
        %v349 = vrot.slane %v340, %v348
        %v350 = vlaneseq
        %v351 = vshrl.u32 %v350, 7
        %v352 = vsub.s32 2, %v351
        %v353 = vrot.slane %v340, %v352
        %v354 = vlaneseq
        %v355 = vshrl.u32 %v354, 7
        %v356 = vsub.s32 3, %v355
        %v357 = vrot.slane %v340, %v356
        %v364 = vunpack.c.l.b16 %v306
        %v365 = vunpack.c.l.b16 %v307
        %v366 = vpack.c.b16 %v365, %v364
        %v400 = vunpack.c.l.b16 %v308
        %v401 = vunpack.c.h.b16 %v308
        %v402 = vunpack.c.l.b16 %v309
        %v403 = vunpack.c.h.b16 %v309
        %v404 = vunpack.c.l.b16 %v310
        %v405 = vunpack.c.h.b16 %v310
        %v406 = vunpack.c.l.b16 %v311
        %v407 = vunpack.c.h.b16 %v311
        %v408 = vunpack.c.l.b16 %v312
        %v409 = vunpack.c.h.b16 %v312
        %v410 = vunpack.c.l.b16 %v313
        %v411 = vunpack.c.h.b16 %v313
        %v412 = vunpack.c.l.b16 %v314
        %v413 = vunpack.c.h.b16 %v314
        %v414 = vunpack.c.l.b16 %v315
        %v415 = vunpack.c.h.b16 %v315
        %v416 = vunpack.c.l.b16 %v316
        %v417 = vunpack.c.h.b16 %v316
        %v418 = vunpack.c.l.b16 %v317
        %v419 = vunpack.c.h.b16 %v317
        %v420 = vunpack.c.l.b16 %v318
        %v421 = vunpack.c.h.b16 %v318
        %v422 = vunpack.c.l.b16 %v319
        %v423 = vunpack.c.h.b16 %v319
        %v424 = vunpack.c.l.b16 %v320
        %v425 = vunpack.c.h.b16 %v320
        %v426 = vunpack.c.l.b16 %v321
        %v427 = vunpack.c.h.b16 %v321
        %v428 = vunpack.c.l.b16 %v322
        %v429 = vunpack.c.h.b16 %v322
        %v430 = vunpack.c.l.b16 %v323
        %v431 = vunpack.c.h.b16 %v323
        %v432 = vunpack.c.l.b16 %v324
        %v433 = vunpack.c.h.b16 %v324
        %v434 = vunpack.c.l.b16 %v325
        %v435 = vunpack.c.h.b16 %v325
        %v436 = vunpack.c.l.b16 %v326
        %v437 = vunpack.c.h.b16 %v326
        %v438 = vunpack.c.l.b16 %v327
        %v439 = vunpack.c.h.b16 %v327
        %v440 = vunpack.c.l.b16 %v328
        %v441 = vunpack.c.h.b16 %v328
        %v442 = vunpack.c.l.b16 %v329
        %v443 = vunpack.c.h.b16 %v329
        %v444 = vunpack.c.l.b16 %v330
        %v445 = vunpack.c.h.b16 %v330
        %v446 = vunpack.c.l.b16 %v331
        %v447 = vunpack.c.h.b16 %v331
        %v448 = vunpack.c.l.b16 %v332
        %v449 = vunpack.c.h.b16 %v332
        %v450 = vunpack.c.l.b16 %v333
        %v451 = vunpack.c.h.b16 %v333
        %v452 = vunpack.c.l.b16 %v334
        %v453 = vunpack.c.h.b16 %v334
        %v454 = vunpack.c.l.b16 %v335
        %v455 = vunpack.c.h.b16 %v335
        %v456 = vunpack.c.l.b16 %v336
        %v457 = vunpack.c.h.b16 %v336
        %v458 = vunpack.c.l.b16 %v337
        %v459 = vunpack.c.h.b16 %v337
        %v460 = vunpack.c.l.b16 %v338
        %v461 = vunpack.c.h.b16 %v338
        %v462 = vunpack.c.l.b16 %v339
        %v463 = vunpack.c.h.b16 %v339
        %v464 = vpack.c.b16 %v404, %v400
        %v465 = vpack.c.b16 %v405, %v401
        %v466 = vpack.c.b16 %v406, %v402
        %v467 = vpack.c.b16 %v407, %v403
        %v468 = vpack.c.b16 %v412, %v408
        %v469 = vpack.c.b16 %v413, %v409
        %v470 = vpack.c.b16 %v414, %v410
        %v471 = vpack.c.b16 %v415, %v411
        %v472 = vpack.c.b16 %v420, %v416
        %v473 = vpack.c.b16 %v421, %v417
        %v474 = vpack.c.b16 %v422, %v418
        %v475 = vpack.c.b16 %v423, %v419
        %v476 = vpack.c.b16 %v428, %v424
        %v477 = vpack.c.b16 %v429, %v425
        %v478 = vpack.c.b16 %v430, %v426
        %v479 = vpack.c.b16 %v431, %v427
        %v480 = vpack.c.b16 %v436, %v432
        %v481 = vpack.c.b16 %v437, %v433
        %v482 = vpack.c.b16 %v438, %v434
        %v483 = vpack.c.b16 %v439, %v435
        %v484 = vpack.c.b16 %v444, %v440
        %v485 = vpack.c.b16 %v445, %v441
        %v486 = vpack.c.b16 %v446, %v442
        %v487 = vpack.c.b16 %v447, %v443
        %v488 = vpack.c.b16 %v452, %v448
        %v489 = vpack.c.b16 %v453, %v449
        %v490 = vpack.c.b16 %v454, %v450
        %v491 = vpack.c.b16 %v455, %v451
        %v492 = vpack.c.b16 %v460, %v456
        %v493 = vpack.c.b16 %v461, %v457
        %v494 = vpack.c.b16 %v462, %v458
        %v495 = vpack.c.b16 %v463, %v459
        %528 = vmatprep.subr.bf16.mxu0 %v465
        %529 = vmatpush1.bf16.msra.mxu0 %v464
        %530 = vmatprep.subr.bf16.mxu0 %v469
        %531 = vmatpush1.bf16.msra.mxu0 %v468
        %532 = vmatprep.subr.bf16.mxu0 %v473
        %533 = vmatpush1.bf16.msra.mxu0 %v472
        %534 = vmatprep.subr.bf16.mxu0 %v477
        %535 = vmatpush1.bf16.msra.mxu0 %v476
        %536 = vmatprep.subr.bf16.mxu0 %v481
        %537 = vmatpush1.bf16.msra.mxu0 %v480
        %538 = vmatprep.subr.bf16.mxu0 %v485
        %539 = vmatpush1.bf16.msra.mxu0 %v484
        %540 = vmatprep.subr.bf16.mxu0 %v489
        %541 = vmatpush1.bf16.msra.mxu0 %v488
        %542 = vmatprep.subr.bf16.mxu0 %v493
        %543 = vmatpush1.bf16.msra.mxu0 %v492
        %544 = vmatprep.subr.bf16.mxu0 0
        %545 = vmatpush1.bf16.msra.mxu0 0
        %546 = vmatprep.subr.bf16.mxu0 0
        %547 = vmatpush1.bf16.msra.mxu0 0
        %548 = vmatprep.subr.bf16.mxu0 0
        %549 = vmatpush1.bf16.msra.mxu0 0
        %550 = vmatprep.subr.bf16.mxu0 0
        %551 = vmatpush1.bf16.msra.mxu0 0
        %552 = vmatprep.subr.bf16.mxu0 0
        %553 = vmatpush1.bf16.msra.mxu0 0
        %554 = vmatprep.subr.bf16.mxu0 0
        %555 = vmatpush1.bf16.msra.mxu0 0
        %556 = vmatprep.subr.bf16.mxu0 0
        %557 = vmatpush1.bf16.msra.mxu0 0
        %558 = vmatprep.subr.bf16.mxu0 0
        %559 = vmatpush1.bf16.msra.mxu0 0
        %560 = vmatprep.mubr.bf16.mxu0 0
        %561 = vmatmul.mubr.bf16.gmra.mrb[0].mxu0 %v366
        %v562 = vpop.f32.mrb[0].mxu0
        %v563 = vadd.f32 %v345, %v562
        %v564 = vpop.f32.mrb[0].mxu0
        %v565 = vadd.f32 %v349, %v564
        %v566 = vpop.f32.mrb[0].mxu0
        %v567 = vadd.f32 %v345, %v566
        %v568 = vpop.f32.mrb[0].mxu0
        %v569 = vadd.f32 %v349, %v568
        %570 = vdwg.mxu0
        %571 = vmatprep.subr.bf16.mxu0 %v467
        %572 = vmatpush1.bf16.msra.mxu0 %v466
        %573 = vmatprep.subr.bf16.mxu0 %v471
        %574 = vmatpush1.bf16.msra.mxu0 %v470
        %575 = vmatprep.subr.bf16.mxu0 %v475
        %576 = vmatpush1.bf16.msra.mxu0 %v474
        %577 = vmatprep.subr.bf16.mxu0 %v479
        %578 = vmatpush1.bf16.msra.mxu0 %v478
        %579 = vmatprep.subr.bf16.mxu0 %v483
        %580 = vmatpush1.bf16.msra.mxu0 %v482
        %581 = vmatprep.subr.bf16.mxu0 %v487
        %582 = vmatpush1.bf16.msra.mxu0 %v486
        %583 = vmatprep.subr.bf16.mxu0 %v491
        %584 = vmatpush1.bf16.msra.mxu0 %v490
        %585 = vmatprep.subr.bf16.mxu0 %v495
        %586 = vmatpush1.bf16.msra.mxu0 %v494
        %587 = vmatprep.subr.bf16.mxu0 0
        %588 = vmatpush1.bf16.msra.mxu0 0
        %589 = vmatprep.subr.bf16.mxu0 0
        %590 = vmatpush1.bf16.msra.mxu0 0
        %591 = vmatprep.subr.bf16.mxu0 0
        %592 = vmatpush1.bf16.msra.mxu0 0
        %593 = vmatprep.subr.bf16.mxu0 0
        %594 = vmatpush1.bf16.msra.mxu0 0
        %595 = vmatprep.subr.bf16.mxu0 0
        %596 = vmatpush1.bf16.msra.mxu0 0
        %597 = vmatprep.subr.bf16.mxu0 0
        %598 = vmatpush1.bf16.msra.mxu0 0
        %599 = vmatprep.subr.bf16.mxu0 0
        %600 = vmatpush1.bf16.msra.mxu0 0
        %601 = vmatprep.subr.bf16.mxu0 0
        %602 = vmatpush1.bf16.msra.mxu0 0
        %603 = vmatprep.mubr.bf16.mxu0 0
        %604 = vmatmul.mubr.bf16.gmra.mrb[0].mxu0 %v366
        %v605 = vpop.f32.mrb[0].mxu0
        %v606 = vadd.f32 %v353, %v605
        %v607 = vpop.f32.mrb[0].mxu0
        %v608 = vadd.f32 %v357, %v607
        %v609 = vpop.f32.mrb[0].mxu0
        %v610 = vadd.f32 %v353, %v609
        %v611 = vpop.f32.mrb[0].mxu0
        %v612 = vadd.f32 %v357, %v611
        %613 = vdwg.mxu0
        %614 = vst [vmem:[%s290] sm:$0xff] %v563
        %615 = vst [vmem:[%s290 + $0x8] sm:$0xff] %v565
        %616 = vst [vmem:[%s290 + $0x10] sm:$0xff] %v606
        %617 = vst [vmem:[%s290 + $0x18] sm:$0xff] %v608
        %618 = vst [vmem:[%s290 + $0x20] sm:$0xff] %v567
        %619 = vst [vmem:[%s290 + $0x28] sm:$0xff] %v569
        %620 = vst [vmem:[%s290 + $0x30] sm:$0xff] %v610
        %621 = vst [vmem:[%s290 + $0x38] sm:$0xff] %v612
        %s622 = sand.u32 %s114, 1
        %s623 = sand.u32 %s114, 1
        %s624 = smul.addr %s623, 64
        %s625 = scalar_lea.vmem [#allocation3], %s624
        // Predicated region
        $region56: #{vanilla_rnn_language_forward.5} parent=50 // pred_check
          %p626 = pneg %p124
        $region57: #{vanilla_rnn_language_forward.5} parent=50 // pred_check_branch
          %628 = sbr.rel (%p626) target = $region59
        $region58: #{vanilla_rnn_language_forward.5} parent=50 // pred_region
          %s629 = smul.u32 2, %s18
          %s630 = smul.u32 4, %s19
          %s631 = smul.addr %s629, 8
          %s632 = sadd.s32 %s630, %s631
          %s633 = smul.addr %s632, 8
          %s634 = scalar_lea.vmem %s3, %s633
          // Predicated region
          $region60: #{vanilla_rnn_language_forward.5} parent=58 // pred_check
            _
          $region61: #{vanilla_rnn_language_forward.5} parent=58 // pred_check_branch
            %636 = sbr.rel (0) target = $region63
          $region62: #{vanilla_rnn_language_forward.5} parent=58 // pred_region
            // Predicated region
            $region64: #{vanilla_rnn_language_forward.5} parent=62 // pred_check
              _
            $region65: #{vanilla_rnn_language_forward.5} parent=62 // pred_check_branch
              %638 = sbr.rel (0) target = $region67
            $region66: #{vanilla_rnn_language_forward.5} parent=62 // pred_region
              loop: start=0, step=1, limit=1
              $region68: #{vanilla_rnn_language_forward.5} parent=66 // loop_pre_header
                _
              $region69: #{vanilla_rnn_language_forward.5} parent=66 // loop_header
                %s640 = sphi 0, %s644
                %p641 = scmp.ge.s32.totalorder %s640, 1
                %s645 = sphi %s625, %s625
                %s646 = sphi %s634, %s634
              $region70: #{vanilla_rnn_language_forward.5} parent=66 // loop_header_branch
                %643 = sbr.rel (%p641) target = $region74
              $region71: #{vanilla_rnn_language_forward.5} parent=66 // loop_body
                %v647 = vld [vmem:[%s645] sm:$0xff]
                %648 = vst [vmem:[%s646] sm:$0xff] %v647
                %v649 = vld [vmem:[%s645 + $0x8] sm:$0xff]
                %650 = vst [vmem:[%s646 + $0x8] sm:$0xff] %v649
                %v651 = vld [vmem:[%s645 + $0x10] sm:$0xff]
                %652 = vst [vmem:[%s646 + $0x10] sm:$0xff] %v651
                %v653 = vld [vmem:[%s645 + $0x18] sm:$0xff]
                %654 = vst [vmem:[%s646 + $0x18] sm:$0xff] %v653
                %v655 = vld [vmem:[%s645 + $0x20] sm:$0xff]
                %656 = vst [vmem:[%s646 + $0x40] sm:$0xff] %v655
                %v657 = vld [vmem:[%s645 + $0x28] sm:$0xff]
                %658 = vst [vmem:[%s646 + $0x48] sm:$0xff] %v657
                %v659 = vld [vmem:[%s645 + $0x30] sm:$0xff]
                %660 = vst [vmem:[%s646 + $0x50] sm:$0xff] %v659
                %v661 = vld [vmem:[%s645 + $0x38] sm:$0xff]
                %662 = vst [vmem:[%s646 + $0x58] sm:$0xff] %v661
              $region72: #{vanilla_rnn_language_forward.5} parent=66 // loop_footer
                %s644 = sadd.s32 1, %s640
              $region73: #{vanilla_rnn_language_forward.5} parent=66 // loop_footer_branch
                %639 = sbr.rel target = $region69
              $region74: #{vanilla_rnn_language_forward.5} parent=66 // loop_exit
                _
            $region67: #{vanilla_rnn_language_forward.5} parent=62 // pred_fallthru
              _
            // Predicated region
            $region75: #{vanilla_rnn_language_forward.5} parent=62 // pred_check
              _
            $region76: #{vanilla_rnn_language_forward.5} parent=62 // pred_check_branch
              %664 = sbr.rel target = $region78
            $region77: #{vanilla_rnn_language_forward.5} parent=62 // pred_region
              _
            $region78: #{vanilla_rnn_language_forward.5} parent=62 // pred_fallthru
              _
          $region63: #{vanilla_rnn_language_forward.5} parent=58 // pred_fallthru
            _
          %665 = vnop
        $region59: #{vanilla_rnn_language_forward.5} parent=50 // pred_fallthru
          _
      $region51: #{vanilla_rnn_language_forward.5} parent=5 // pred_fallthru
        _
      %p666 = scmp.le.s32.totalorder 2, %s9
      // Predicated region
      $region79: #{vanilla_rnn_language_forward.5} parent=5 // pred_check
        %p667 = pneg %p666
      $region80: #{vanilla_rnn_language_forward.5} parent=5 // pred_check_branch
        %669 = sbr.rel (%p667) target = $region82
      $region81: #{vanilla_rnn_language_forward.5} parent=5 // pred_region
        %s670 = ssub.s32 %s9, 2
        // Predicated region
        $region83: #{vanilla_rnn_language_forward.5} parent=81 // pred_check
          %p671 = pneg %p130
        $region84: #{vanilla_rnn_language_forward.5} parent=81 // pred_check_branch
          %673 = sbr.rel (%p671) target = $region86
        $region85: #{vanilla_rnn_language_forward.5} parent=81 // pred_region
          %s674 = sand.u32 %s115, 1
          %s675 = sand.u32 %s115, 1
          %s676 = smul.addr %s675, 64
          %s677 = scalar_lea.vmem [#allocation3], %s676
        $region86: #{vanilla_rnn_language_forward.5} parent=81 // pred_fallthru
          _
      $region82: #{vanilla_rnn_language_forward.5} parent=5 // pred_fallthru
        _
    $region6: #{vanilla_rnn_language_forward.5} parent=1 // loop_footer
      %s13 = sadd.s32 1, %s9
    $region7: #{vanilla_rnn_language_forward.5} parent=1 // loop_footer_branch
      %8 = sbr.rel target = $region3
    $region8: #{vanilla_rnn_language_forward.5} parent=1 // loop_exit
      _

// kernel: vanilla_rnn_language_forward.4
$region0: #{vanilla_rnn_language_forward.4}
  #allocation0 [shape = 'u32[]', space=smem, size = 0x4, offset = 0x4, fixed_abs, tag = 'smem constant byte address 0x4 - core index']
  #allocation1 [shape = 'u32[144,128]{1,0:T(1,128)}', space=vmem, size = 0x12000, scoped, tag = 'internal scratch']
  #allocation2 [shape = 'f32[2,128]{1,0:T(2,128)}', space=vmem, size = 0x400, scoped, tag = 'scratch operand']
  #allocation3 [shape = 'f32[2,128]{1,0:T(2,128)}', space=vmem, size = 0x400, scoped, tag = 'scratch operand']
  %s0 = inlined_call_operand.vmem [shape: bf16[8,2,128], index: 0, kind: input, shape index: {}]
  %s1 = inlined_call_operand.vmem [shape: bf16[128,128], index: 1, kind: input, shape index: {}]
  %s2 = inlined_call_operand.vmem [shape: bf16[128,128], index: 2, kind: input, shape index: {}]
  %s3 = inlined_call_operand.vmem [shape: bf16[128,128], index: 3, kind: input, shape index: {}]
  %s4 = inlined_call_operand.hbm [shape: f32[1,128], index: 4, kind: input, shape index: {}]
  %s5 = inlined_call_operand.vmem [shape: bf16[8,2,128], index: 5, kind: output, shape index: {0}]
  %s6 = inlined_call_operand.hbm [shape: f32[2,2,128], index: 6, kind: output, shape index: {1}]
  %7 = xla_tuple %s5, %s6
  %s8 = sld [smem:[#allocation0]]
  $region46: #{vanilla_rnn_language_forward.4} parent=0
    _
  %s10 = ssub.s32 1, %s8
  %s11 = scalar_select 0, %s10, %s8
  $region1: #{vanilla_rnn_language_forward.4} parent=0
    #allocation4 [shape = 'u8[512]{0}', space=vmem, size = 0x400, scoped, tag = 'input window, operand 4, single buffered']
    #allocation5 [shape = 's32[1]{0}', space=sflag, size = 0x4, scoped, tag = 'scoped memory for vanilla_rnn_language_forward.4']
    #allocation6 [shape = 's32[1]{0}', space=sflag, size = 0x4, scoped, tag = 'scoped memory for vanilla_rnn_language_forward.4']
    #allocation7 [shape = 'u8[2048]{0}', space=vmem, size = 0x800, scoped, tag = 'output window, operand 1, single buffered']
    %12 = vsyncpa [#allocation5], 0
    %13 = vsyncpa [#allocation6], 0
    // Predicated region
    $region2: #{vanilla_rnn_language_forward.4} parent=1 // pred_check
      _
    $region3: #{vanilla_rnn_language_forward.4} parent=1 // pred_check_branch
      %15 = sbr.rel (0) target = $region5
    $region4: #{vanilla_rnn_language_forward.4} parent=1 // pred_region
      _
    $region5: #{vanilla_rnn_language_forward.4} parent=1 // pred_fallthru
      _
    // Predicated region
    $region6: #{vanilla_rnn_language_forward.4} parent=1 // pred_check
      _
    $region7: #{vanilla_rnn_language_forward.4} parent=1 // pred_check_branch
      %17 = sbr.rel (0) target = $region9
    $region8: #{vanilla_rnn_language_forward.4} parent=1 // pred_region
      _
    $region9: #{vanilla_rnn_language_forward.4} parent=1 // pred_fallthru
      _
    // Predicated region
    $region10: #{vanilla_rnn_language_forward.4} parent=1 // pred_check
      _
    $region11: #{vanilla_rnn_language_forward.4} parent=1 // pred_check_branch
      %19 = sbr.rel (0) target = $region13
    $region12: #{vanilla_rnn_language_forward.4} parent=1 // pred_region
      _
    $region13: #{vanilla_rnn_language_forward.4} parent=1 // pred_fallthru
      _
    // Predicated region
    $region14: #{vanilla_rnn_language_forward.4} parent=1 // pred_check
      _
    $region15: #{vanilla_rnn_language_forward.4} parent=1 // pred_check_branch
      %21 = sbr.rel (0) target = $region17
    $region16: #{vanilla_rnn_language_forward.4} parent=1 // pred_region
      _
    $region17: #{vanilla_rnn_language_forward.4} parent=1 // pred_fallthru
      _
    // Predicated region
    $region18: #{vanilla_rnn_language_forward.4} parent=1 // pred_check
      _
    $region19: #{vanilla_rnn_language_forward.4} parent=1 // pred_check_branch
      %23 = sbr.rel (0) target = $region21
    $region20: #{vanilla_rnn_language_forward.4} parent=1 // pred_region
      %s25 = ssub.s32 16, 16
      %26 = vsyncadd [#allocation5], %s25
      %s28 = sshll.u32 [#allocation4], 4
      %s29 = int_to_ptr.vmem [resolvable:$true] %s28
      %31 = dma.hbm_to_vmem [thread:$0]  %s4, 16, %s29, [#allocation5]
    $region21: #{vanilla_rnn_language_forward.4} parent=1 // pred_fallthru
      _
    // Predicated region
    $region22: #{vanilla_rnn_language_forward.4} parent=1 // pred_check
      _
    $region23: #{vanilla_rnn_language_forward.4} parent=1 // pred_check_branch
      %33 = sbr.rel (0) target = $region25
    $region24: #{vanilla_rnn_language_forward.4} parent=1 // pred_region
      %34 = dma.done [#allocation5], 16
    $region25: #{vanilla_rnn_language_forward.4} parent=1 // pred_fallthru
      _
    %p36 = scmp.eq.s32.totalorder 0, 0
    // Predicated region
    $region26: #{vanilla_rnn_language_forward.4} parent=1 // pred_check
      %p37 = pneg %p36
    $region27: #{vanilla_rnn_language_forward.4} parent=1 // pred_check_branch
      %39 = sbr.rel (%p37) target = $region29
    $region28: #{vanilla_rnn_language_forward.4} parent=1 // pred_region
      %40 = vst [vmem:[#allocation2] sm:$0x3] 0.0
      %41 = vst [vmem:[#allocation3] sm:$0x3] 0.0
    $region29: #{vanilla_rnn_language_forward.4} parent=1 // pred_fallthru
      _
    %v42 = vld [vmem:[#allocation4] sm:$0x1]
    %v44 = vlaneseq
    %v45 = vshrl.u32 %v44, 7
    %v46 = vsub.s32 0, %v45
    %v47 = vrot.slane %v42, %v46
    %v49 = vld [vmem:[%s0] sm:$0x1]
    %v50 = vunpack.c.l.bf16 %v49
    %v51 = vld [vmem:[#allocation2] sm:$0x3]
    %v52 = vpack.c.bf16 %v51, %v51
    %v53 = vld [vmem:[%s1] sm:$0xf]
    %v54 = vld [vmem:[%s1 + $0x4] sm:$0xf]
    %v55 = vld [vmem:[%s1 + $0x8] sm:$0xf]
    %v56 = vld [vmem:[%s1 + $0xc] sm:$0xf]
    %v57 = vld [vmem:[%s1 + $0x10] sm:$0xf]
    %v58 = vld [vmem:[%s1 + $0x14] sm:$0xf]
    %v59 = vld [vmem:[%s1 + $0x18] sm:$0xf]
    %v60 = vld [vmem:[%s1 + $0x1c] sm:$0xf]
    %v61 = vld [vmem:[%s1 + $0x20] sm:$0xf]
    %v62 = vld [vmem:[%s1 + $0x24] sm:$0xf]
    %v63 = vld [vmem:[%s1 + $0x28] sm:$0xf]
    %v64 = vld [vmem:[%s1 + $0x2c] sm:$0xf]
    %v65 = vld [vmem:[%s1 + $0x30] sm:$0xf]
    %v66 = vld [vmem:[%s1 + $0x34] sm:$0xf]
    %v67 = vld [vmem:[%s1 + $0x38] sm:$0xf]
    %v68 = vld [vmem:[%s1 + $0x3c] sm:$0xf]
    %v85 = vunpack.c.l.b16 %v53
    %v86 = vunpack.c.l.b16 %v54
    %v87 = vunpack.c.l.b16 %v55
    %v88 = vunpack.c.l.b16 %v56
    %v89 = vunpack.c.l.b16 %v57
    %v90 = vunpack.c.l.b16 %v58
    %v91 = vunpack.c.l.b16 %v59
    %v92 = vunpack.c.l.b16 %v60
    %v93 = vunpack.c.l.b16 %v61
    %v94 = vunpack.c.l.b16 %v62
    %v95 = vunpack.c.l.b16 %v63
    %v96 = vunpack.c.l.b16 %v64
    %v97 = vunpack.c.l.b16 %v65
    %v98 = vunpack.c.l.b16 %v66
    %v99 = vunpack.c.l.b16 %v67
    %v100 = vunpack.c.l.b16 %v68
    %v101 = vpack.c.b16 %v86, %v85
    %v102 = vpack.c.b16 %v88, %v87
    %v103 = vpack.c.b16 %v90, %v89
    %v104 = vpack.c.b16 %v92, %v91
    %v105 = vpack.c.b16 %v94, %v93
    %v106 = vpack.c.b16 %v96, %v95
    %v107 = vpack.c.b16 %v98, %v97
    %v108 = vpack.c.b16 %v100, %v99
    %117 = vmatprep.subr.bf16.mxu0 0
    %118 = vmatpush1.bf16.msra.mxu0 %v101
    %119 = vmatprep.subr.bf16.mxu0 0
    %120 = vmatpush1.bf16.msra.mxu0 %v102
    %121 = vmatprep.subr.bf16.mxu0 0
    %122 = vmatpush1.bf16.msra.mxu0 %v103
    %123 = vmatprep.subr.bf16.mxu0 0
    %124 = vmatpush1.bf16.msra.mxu0 %v104
    %125 = vmatprep.subr.bf16.mxu0 0
    %126 = vmatpush1.bf16.msra.mxu0 %v105
    %127 = vmatprep.subr.bf16.mxu0 0
    %128 = vmatpush1.bf16.msra.mxu0 %v106
    %129 = vmatprep.subr.bf16.mxu0 0
    %130 = vmatpush1.bf16.msra.mxu0 %v107
    %131 = vmatprep.subr.bf16.mxu0 0
    %132 = vmatpush1.bf16.msra.mxu0 %v108
    %133 = vmatprep.subr.bf16.mxu0 0
    %134 = vmatpush1.bf16.msra.mxu0 0
    %135 = vmatprep.subr.bf16.mxu0 0
    %136 = vmatpush1.bf16.msra.mxu0 0
    %137 = vmatprep.subr.bf16.mxu0 0
    %138 = vmatpush1.bf16.msra.mxu0 0
    %139 = vmatprep.subr.bf16.mxu0 0
    %140 = vmatpush1.bf16.msra.mxu0 0
    %141 = vmatprep.subr.bf16.mxu0 0
    %142 = vmatpush1.bf16.msra.mxu0 0
    %143 = vmatprep.subr.bf16.mxu0 0
    %144 = vmatpush1.bf16.msra.mxu0 0
    %145 = vmatprep.subr.bf16.mxu0 0
    %146 = vmatpush1.bf16.msra.mxu0 0
    %147 = vmatprep.subr.bf16.mxu0 0
    %148 = vmatpush1.bf16.msra.mxu0 0
    %149 = vmatprep.mubr.bf16.mxu0 0
    %150 = vmatmul.mubr.bf16.gmra.mrb[0].mxu0 %v52
    %v151 = vpop.f32.mrb[0].mxu0
    %v152 = vadd.f32 0.0, %v151
    %v153 = vpop.f32.mrb[0].mxu0
    %v154 = vpop.f32.mrb[0].mxu0
    %v155 = vpop.f32.mrb[0].mxu0
    %156 = vdwg.mxu0
    %v157 = vadd.f32 %v50, %v152
    %v158 = vtanh.pop %v157
    %v159 = vpack.c.bf16 %v158, %v158
    %v160 = vld [vmem:[%s2] sm:$0xf]
    %v161 = vld [vmem:[%s2 + $0x4] sm:$0xf]
    %v162 = vld [vmem:[%s2 + $0x8] sm:$0xf]
    %v163 = vld [vmem:[%s2 + $0xc] sm:$0xf]
    %v164 = vld [vmem:[%s2 + $0x10] sm:$0xf]
    %v165 = vld [vmem:[%s2 + $0x14] sm:$0xf]
    %v166 = vld [vmem:[%s2 + $0x18] sm:$0xf]
    %v167 = vld [vmem:[%s2 + $0x1c] sm:$0xf]
    %v168 = vld [vmem:[%s2 + $0x20] sm:$0xf]
    %v169 = vld [vmem:[%s2 + $0x24] sm:$0xf]
    %v170 = vld [vmem:[%s2 + $0x28] sm:$0xf]
    %v171 = vld [vmem:[%s2 + $0x2c] sm:$0xf]
    %v172 = vld [vmem:[%s2 + $0x30] sm:$0xf]
    %v173 = vld [vmem:[%s2 + $0x34] sm:$0xf]
    %v174 = vld [vmem:[%s2 + $0x38] sm:$0xf]
    %v175 = vld [vmem:[%s2 + $0x3c] sm:$0xf]
    %v176 = vld [vmem:[#allocation3] sm:$0x3]
    %v177 = vpack.c.bf16 %v176, %v176
    %v178 = vld [vmem:[%s3] sm:$0xf]
    %v179 = vld [vmem:[%s3 + $0x4] sm:$0xf]
    %v180 = vld [vmem:[%s3 + $0x8] sm:$0xf]
    %v181 = vld [vmem:[%s3 + $0xc] sm:$0xf]
    %v182 = vld [vmem:[%s3 + $0x10] sm:$0xf]
    %v183 = vld [vmem:[%s3 + $0x14] sm:$0xf]
    %v184 = vld [vmem:[%s3 + $0x18] sm:$0xf]
    %v185 = vld [vmem:[%s3 + $0x1c] sm:$0xf]
    %v186 = vld [vmem:[%s3 + $0x20] sm:$0xf]
    %v187 = vld [vmem:[%s3 + $0x24] sm:$0xf]
    %v188 = vld [vmem:[%s3 + $0x28] sm:$0xf]
    %v189 = vld [vmem:[%s3 + $0x2c] sm:$0xf]
    %v190 = vld [vmem:[%s3 + $0x30] sm:$0xf]
    %v191 = vld [vmem:[%s3 + $0x34] sm:$0xf]
    %v192 = vld [vmem:[%s3 + $0x38] sm:$0xf]
    %v193 = vld [vmem:[%s3 + $0x3c] sm:$0xf]
    %v210 = vunpack.c.l.b16 %v178
    %v211 = vunpack.c.l.b16 %v179
    %v212 = vunpack.c.l.b16 %v180
    %v213 = vunpack.c.l.b16 %v181
    %v214 = vunpack.c.l.b16 %v182
    %v215 = vunpack.c.l.b16 %v183
    %v216 = vunpack.c.l.b16 %v184
    %v217 = vunpack.c.l.b16 %v185
    %v218 = vunpack.c.l.b16 %v186
    %v219 = vunpack.c.l.b16 %v187
    %v220 = vunpack.c.l.b16 %v188
    %v221 = vunpack.c.l.b16 %v189
    %v222 = vunpack.c.l.b16 %v190
    %v223 = vunpack.c.l.b16 %v191
    %v224 = vunpack.c.l.b16 %v192
    %v225 = vunpack.c.l.b16 %v193
    %v226 = vpack.c.b16 %v211, %v210
    %v227 = vpack.c.b16 %v213, %v212
    %v228 = vpack.c.b16 %v215, %v214
    %v229 = vpack.c.b16 %v217, %v216
    %v230 = vpack.c.b16 %v219, %v218
    %v231 = vpack.c.b16 %v221, %v220
    %v232 = vpack.c.b16 %v223, %v222
    %v233 = vpack.c.b16 %v225, %v224
    %242 = vmatprep.subr.bf16.mxu0 0
    %243 = vmatpush1.bf16.msra.mxu0 %v226
    %244 = vmatprep.subr.bf16.mxu0 0
    %245 = vmatpush1.bf16.msra.mxu0 %v227
    %246 = vmatprep.subr.bf16.mxu0 0
    %247 = vmatpush1.bf16.msra.mxu0 %v228
    %248 = vmatprep.subr.bf16.mxu0 0
    %249 = vmatpush1.bf16.msra.mxu0 %v229
    %250 = vmatprep.subr.bf16.mxu0 0
    %251 = vmatpush1.bf16.msra.mxu0 %v230
    %252 = vmatprep.subr.bf16.mxu0 0
    %253 = vmatpush1.bf16.msra.mxu0 %v231
    %254 = vmatprep.subr.bf16.mxu0 0
    %255 = vmatpush1.bf16.msra.mxu0 %v232
    %256 = vmatprep.subr.bf16.mxu0 0
    %257 = vmatpush1.bf16.msra.mxu0 %v233
    %258 = vmatprep.subr.bf16.mxu0 0
    %259 = vmatpush1.bf16.msra.mxu0 0
    %260 = vmatprep.subr.bf16.mxu0 0
    %261 = vmatpush1.bf16.msra.mxu0 0
    %262 = vmatprep.subr.bf16.mxu0 0
    %263 = vmatpush1.bf16.msra.mxu0 0
    %264 = vmatprep.subr.bf16.mxu0 0
    %265 = vmatpush1.bf16.msra.mxu0 0
    %266 = vmatprep.subr.bf16.mxu0 0
    %267 = vmatpush1.bf16.msra.mxu0 0
    %268 = vmatprep.subr.bf16.mxu0 0
    %269 = vmatpush1.bf16.msra.mxu0 0
    %270 = vmatprep.subr.bf16.mxu0 0
    %271 = vmatpush1.bf16.msra.mxu0 0
    %272 = vmatprep.subr.bf16.mxu0 0
    %273 = vmatpush1.bf16.msra.mxu0 0
    %274 = vmatprep.mubr.bf16.mxu0 0
    %275 = vmatmul.mubr.bf16.gmra.mrb[0].mxu0 %v177
    %v276 = vpop.f32.mrb[0].mxu0
    %v277 = vadd.f32 0.0, %v276
    %v278 = vpop.f32.mrb[0].mxu0
    %v279 = vpop.f32.mrb[0].mxu0
    %v280 = vpop.f32.mrb[0].mxu0
    %281 = vdwg.mxu0
    %v298 = vunpack.c.l.b16 %v160
    %v299 = vunpack.c.l.b16 %v161
    %v300 = vunpack.c.l.b16 %v162
    %v301 = vunpack.c.l.b16 %v163
    %v302 = vunpack.c.l.b16 %v164
    %v303 = vunpack.c.l.b16 %v165
    %v304 = vunpack.c.l.b16 %v166
    %v305 = vunpack.c.l.b16 %v167
    %v306 = vunpack.c.l.b16 %v168
    %v307 = vunpack.c.l.b16 %v169
    %v308 = vunpack.c.l.b16 %v170
    %v309 = vunpack.c.l.b16 %v171
    %v310 = vunpack.c.l.b16 %v172
    %v311 = vunpack.c.l.b16 %v173
    %v312 = vunpack.c.l.b16 %v174
    %v313 = vunpack.c.l.b16 %v175
    %v314 = vpack.c.b16 %v299, %v298
    %v315 = vpack.c.b16 %v301, %v300
    %v316 = vpack.c.b16 %v303, %v302
    %v317 = vpack.c.b16 %v305, %v304
    %v318 = vpack.c.b16 %v307, %v306
    %v319 = vpack.c.b16 %v309, %v308
    %v320 = vpack.c.b16 %v311, %v310
    %v321 = vpack.c.b16 %v313, %v312
    %330 = vmatprep.subr.bf16.mxu0 0
    %331 = vmatpush1.bf16.msra.mxu0 %v314
    %332 = vmatprep.subr.bf16.mxu0 0
    %333 = vmatpush1.bf16.msra.mxu0 %v315
    %334 = vmatprep.subr.bf16.mxu0 0
    %335 = vmatpush1.bf16.msra.mxu0 %v316
    %336 = vmatprep.subr.bf16.mxu0 0
    %337 = vmatpush1.bf16.msra.mxu0 %v317
    %338 = vmatprep.subr.bf16.mxu0 0
    %339 = vmatpush1.bf16.msra.mxu0 %v318
    %340 = vmatprep.subr.bf16.mxu0 0
    %341 = vmatpush1.bf16.msra.mxu0 %v319
    %342 = vmatprep.subr.bf16.mxu0 0
    %343 = vmatpush1.bf16.msra.mxu0 %v320
    %344 = vmatprep.subr.bf16.mxu0 0
    %345 = vmatpush1.bf16.msra.mxu0 %v321
    %346 = vmatprep.subr.bf16.mxu0 0
    %347 = vmatpush1.bf16.msra.mxu0 0
    %348 = vmatprep.subr.bf16.mxu0 0
    %349 = vmatpush1.bf16.msra.mxu0 0
    %350 = vmatprep.subr.bf16.mxu0 0
    %351 = vmatpush1.bf16.msra.mxu0 0
    %352 = vmatprep.subr.bf16.mxu0 0
    %353 = vmatpush1.bf16.msra.mxu0 0
    %354 = vmatprep.subr.bf16.mxu0 0
    %355 = vmatpush1.bf16.msra.mxu0 0
    %356 = vmatprep.subr.bf16.mxu0 0
    %357 = vmatpush1.bf16.msra.mxu0 0
    %358 = vmatprep.subr.bf16.mxu0 0
    %359 = vmatpush1.bf16.msra.mxu0 0
    %360 = vmatprep.subr.bf16.mxu0 0
    %361 = vmatpush1.bf16.msra.mxu0 0
    %362 = vmatprep.mubr.bf16.mxu0 0
    %363 = vmatmul.mubr.bf16.gmra.mrb[0].mxu0 %v159
    %v364 = vpop.f32.mrb[0].mxu0
    %v365 = vadd.f32 %v277, %v364
    %v366 = vpop.f32.mrb[0].mxu0
    %v367 = vpop.f32.mrb[0].mxu0
    %v368 = vpop.f32.mrb[0].mxu0
    %369 = vdwg.mxu0
    %v370 = vadd.f32 %v365, %v47
    %v371 = vtanh.pop %v370
    %372 = vst [vmem:[#allocation2] sm:$0x3] %v158
    %373 = vst [vmem:[#allocation3] sm:$0x3] %v371
    %v374 = vpack.c.bf16 %v371, %v371
    %375 = vst [vmem:[%s5] sm:$0x1] %v374
    %s376 = scalar_lea.vmem %s0, 1
    %v377 = vld [vmem:[%s376] sm:$0x1]
    %v378 = vunpack.c.l.bf16 %v377
    %v379 = vld [vmem:[#allocation2] sm:$0x3]
    %v380 = vpack.c.bf16 %v379, %v379
    %v381 = vld [vmem:[%s1] sm:$0xf]
    %v382 = vld [vmem:[%s1 + $0x4] sm:$0xf]
    %v383 = vld [vmem:[%s1 + $0x8] sm:$0xf]
    %v384 = vld [vmem:[%s1 + $0xc] sm:$0xf]
    %v385 = vld [vmem:[%s1 + $0x10] sm:$0xf]
    %v386 = vld [vmem:[%s1 + $0x14] sm:$0xf]
    %v387 = vld [vmem:[%s1 + $0x18] sm:$0xf]
    %v388 = vld [vmem:[%s1 + $0x1c] sm:$0xf]
    %v389 = vld [vmem:[%s1 + $0x20] sm:$0xf]
    %v390 = vld [vmem:[%s1 + $0x24] sm:$0xf]
    %v391 = vld [vmem:[%s1 + $0x28] sm:$0xf]
    %v392 = vld [vmem:[%s1 + $0x2c] sm:$0xf]
    %v393 = vld [vmem:[%s1 + $0x30] sm:$0xf]
    %v394 = vld [vmem:[%s1 + $0x34] sm:$0xf]
    %v395 = vld [vmem:[%s1 + $0x38] sm:$0xf]
    %v396 = vld [vmem:[%s1 + $0x3c] sm:$0xf]
    %v413 = vunpack.c.l.b16 %v381
    %v414 = vunpack.c.l.b16 %v382
    %v415 = vunpack.c.l.b16 %v383
    %v416 = vunpack.c.l.b16 %v384
    %v417 = vunpack.c.l.b16 %v385
    %v418 = vunpack.c.l.b16 %v386
    %v419 = vunpack.c.l.b16 %v387
    %v420 = vunpack.c.l.b16 %v388
    %v421 = vunpack.c.l.b16 %v389
    %v422 = vunpack.c.l.b16 %v390
    %v423 = vunpack.c.l.b16 %v391
    %v424 = vunpack.c.l.b16 %v392
    %v425 = vunpack.c.l.b16 %v393
    %v426 = vunpack.c.l.b16 %v394
    %v427 = vunpack.c.l.b16 %v395
    %v428 = vunpack.c.l.b16 %v396
    %v429 = vpack.c.b16 %v414, %v413
    %v430 = vpack.c.b16 %v416, %v415
    %v431 = vpack.c.b16 %v418, %v417
    %v432 = vpack.c.b16 %v420, %v419
    %v433 = vpack.c.b16 %v422, %v421
    %v434 = vpack.c.b16 %v424, %v423
    %v435 = vpack.c.b16 %v426, %v425
    %v436 = vpack.c.b16 %v428, %v427
    %445 = vmatprep.subr.bf16.mxu0 0
    %446 = vmatpush1.bf16.msra.mxu0 %v429
    %447 = vmatprep.subr.bf16.mxu0 0
    %448 = vmatpush1.bf16.msra.mxu0 %v430
    %449 = vmatprep.subr.bf16.mxu0 0
    %450 = vmatpush1.bf16.msra.mxu0 %v431
    %451 = vmatprep.subr.bf16.mxu0 0
    %452 = vmatpush1.bf16.msra.mxu0 %v432
    %453 = vmatprep.subr.bf16.mxu0 0
    %454 = vmatpush1.bf16.msra.mxu0 %v433
    %455 = vmatprep.subr.bf16.mxu0 0
    %456 = vmatpush1.bf16.msra.mxu0 %v434
    %457 = vmatprep.subr.bf16.mxu0 0
    %458 = vmatpush1.bf16.msra.mxu0 %v435
    %459 = vmatprep.subr.bf16.mxu0 0
    %460 = vmatpush1.bf16.msra.mxu0 %v436
    %461 = vmatprep.subr.bf16.mxu0 0
    %462 = vmatpush1.bf16.msra.mxu0 0
    %463 = vmatprep.subr.bf16.mxu0 0
    %464 = vmatpush1.bf16.msra.mxu0 0
    %465 = vmatprep.subr.bf16.mxu0 0
    %466 = vmatpush1.bf16.msra.mxu0 0
    %467 = vmatprep.subr.bf16.mxu0 0
    %468 = vmatpush1.bf16.msra.mxu0 0
    %469 = vmatprep.subr.bf16.mxu0 0
    %470 = vmatpush1.bf16.msra.mxu0 0
    %471 = vmatprep.subr.bf16.mxu0 0
    %472 = vmatpush1.bf16.msra.mxu0 0
    %473 = vmatprep.subr.bf16.mxu0 0
    %474 = vmatpush1.bf16.msra.mxu0 0
    %475 = vmatprep.subr.bf16.mxu0 0
    %476 = vmatpush1.bf16.msra.mxu0 0
    %477 = vmatprep.mubr.bf16.mxu0 0
    %478 = vmatmul.mubr.bf16.gmra.mrb[0].mxu0 %v380
    %v479 = vpop.f32.mrb[0].mxu0
    %v480 = vadd.f32 0.0, %v479
    %v481 = vpop.f32.mrb[0].mxu0
    %v482 = vpop.f32.mrb[0].mxu0
    %v483 = vpop.f32.mrb[0].mxu0
    %484 = vdwg.mxu0
    %v485 = vadd.f32 %v378, %v480
    %v486 = vtanh.pop %v485
    %v487 = vpack.c.bf16 %v486, %v486
    %v488 = vld [vmem:[%s2] sm:$0xf]
    %v489 = vld [vmem:[%s2 + $0x4] sm:$0xf]
    %v490 = vld [vmem:[%s2 + $0x8] sm:$0xf]
    %v491 = vld [vmem:[%s2 + $0xc] sm:$0xf]
    %v492 = vld [vmem:[%s2 + $0x10] sm:$0xf]
    %v493 = vld [vmem:[%s2 + $0x14] sm:$0xf]
    %v494 = vld [vmem:[%s2 + $0x18] sm:$0xf]
    %v495 = vld [vmem:[%s2 + $0x1c] sm:$0xf]
    %v496 = vld [vmem:[%s2 + $0x20] sm:$0xf]
    %v497 = vld [vmem:[%s2 + $0x24] sm:$0xf]
    %v498 = vld [vmem:[%s2 + $0x28] sm:$0xf]
    %v499 = vld [vmem:[%s2 + $0x2c] sm:$0xf]
    %v500 = vld [vmem:[%s2 + $0x30] sm:$0xf]
    %v501 = vld [vmem:[%s2 + $0x34] sm:$0xf]
    %v502 = vld [vmem:[%s2 + $0x38] sm:$0xf]
    %v503 = vld [vmem:[%s2 + $0x3c] sm:$0xf]
    %v504 = vld [vmem:[#allocation3] sm:$0x3]
    %v505 = vpack.c.bf16 %v504, %v504
    %v506 = vld [vmem:[%s3] sm:$0xf]
    %v507 = vld [vmem:[%s3 + $0x4] sm:$0xf]
    %v508 = vld [vmem:[%s3 + $0x8] sm:$0xf]
    %v509 = vld [vmem:[%s3 + $0xc] sm:$0xf]
    %v510 = vld [vmem:[%s3 + $0x10] sm:$0xf]
    %v511 = vld [vmem:[%s3 + $0x14] sm:$0xf]
    %v512 = vld [vmem:[%s3 + $0x18] sm:$0xf]
    %v513 = vld [vmem:[%s3 + $0x1c] sm:$0xf]
    %v514 = vld [vmem:[%s3 + $0x20] sm:$0xf]
    %v515 = vld [vmem:[%s3 + $0x24] sm:$0xf]
    %v516 = vld [vmem:[%s3 + $0x28] sm:$0xf]
    %v517 = vld [vmem:[%s3 + $0x2c] sm:$0xf]
    %v518 = vld [vmem:[%s3 + $0x30] sm:$0xf]
    %v519 = vld [vmem:[%s3 + $0x34] sm:$0xf]
    %v520 = vld [vmem:[%s3 + $0x38] sm:$0xf]
    %v521 = vld [vmem:[%s3 + $0x3c] sm:$0xf]
    %v538 = vunpack.c.l.b16 %v506
    %v539 = vunpack.c.l.b16 %v507
    %v540 = vunpack.c.l.b16 %v508
    %v541 = vunpack.c.l.b16 %v509
    %v542 = vunpack.c.l.b16 %v510
    %v543 = vunpack.c.l.b16 %v511
    %v544 = vunpack.c.l.b16 %v512
    %v545 = vunpack.c.l.b16 %v513
    %v546 = vunpack.c.l.b16 %v514
    %v547 = vunpack.c.l.b16 %v515
    %v548 = vunpack.c.l.b16 %v516
    %v549 = vunpack.c.l.b16 %v517
    %v550 = vunpack.c.l.b16 %v518
    %v551 = vunpack.c.l.b16 %v519
    %v552 = vunpack.c.l.b16 %v520
    %v553 = vunpack.c.l.b16 %v521
    %v554 = vpack.c.b16 %v539, %v538
    %v555 = vpack.c.b16 %v541, %v540
    %v556 = vpack.c.b16 %v543, %v542
    %v557 = vpack.c.b16 %v545, %v544
    %v558 = vpack.c.b16 %v547, %v546
    %v559 = vpack.c.b16 %v549, %v548
    %v560 = vpack.c.b16 %v551, %v550
    %v561 = vpack.c.b16 %v553, %v552
    %570 = vmatprep.subr.bf16.mxu0 0
    %571 = vmatpush1.bf16.msra.mxu0 %v554
    %572 = vmatprep.subr.bf16.mxu0 0
    %573 = vmatpush1.bf16.msra.mxu0 %v555
    %574 = vmatprep.subr.bf16.mxu0 0
    %575 = vmatpush1.bf16.msra.mxu0 %v556
    %576 = vmatprep.subr.bf16.mxu0 0
    %577 = vmatpush1.bf16.msra.mxu0 %v557
    %578 = vmatprep.subr.bf16.mxu0 0
    %579 = vmatpush1.bf16.msra.mxu0 %v558
    %580 = vmatprep.subr.bf16.mxu0 0
    %581 = vmatpush1.bf16.msra.mxu0 %v559
    %582 = vmatprep.subr.bf16.mxu0 0
    %583 = vmatpush1.bf16.msra.mxu0 %v560
    %584 = vmatprep.subr.bf16.mxu0 0
    %585 = vmatpush1.bf16.msra.mxu0 %v561
    %586 = vmatprep.subr.bf16.mxu0 0
    %587 = vmatpush1.bf16.msra.mxu0 0
    %588 = vmatprep.subr.bf16.mxu0 0
    %589 = vmatpush1.bf16.msra.mxu0 0
    %590 = vmatprep.subr.bf16.mxu0 0
    %591 = vmatpush1.bf16.msra.mxu0 0
    %592 = vmatprep.subr.bf16.mxu0 0
    %593 = vmatpush1.bf16.msra.mxu0 0
    %594 = vmatprep.subr.bf16.mxu0 0
    %595 = vmatpush1.bf16.msra.mxu0 0
    %596 = vmatprep.subr.bf16.mxu0 0
    %597 = vmatpush1.bf16.msra.mxu0 0
    %598 = vmatprep.subr.bf16.mxu0 0
    %599 = vmatpush1.bf16.msra.mxu0 0
    %600 = vmatprep.subr.bf16.mxu0 0
    %601 = vmatpush1.bf16.msra.mxu0 0
    %602 = vmatprep.mubr.bf16.mxu0 0
    %603 = vmatmul.mubr.bf16.gmra.mrb[0].mxu0 %v505
    %v604 = vpop.f32.mrb[0].mxu0
    %v605 = vadd.f32 0.0, %v604
    %v606 = vpop.f32.mrb[0].mxu0
    %v607 = vpop.f32.mrb[0].mxu0
    %v608 = vpop.f32.mrb[0].mxu0
    %609 = vdwg.mxu0
    %v626 = vunpack.c.l.b16 %v488
    %v627 = vunpack.c.l.b16 %v489
    %v628 = vunpack.c.l.b16 %v490
    %v629 = vunpack.c.l.b16 %v491
    %v630 = vunpack.c.l.b16 %v492
    %v631 = vunpack.c.l.b16 %v493
    %v632 = vunpack.c.l.b16 %v494
    %v633 = vunpack.c.l.b16 %v495
    %v634 = vunpack.c.l.b16 %v496
    %v635 = vunpack.c.l.b16 %v497
    %v636 = vunpack.c.l.b16 %v498
    %v637 = vunpack.c.l.b16 %v499
    %v638 = vunpack.c.l.b16 %v500
    %v639 = vunpack.c.l.b16 %v501
    %v640 = vunpack.c.l.b16 %v502
    %v641 = vunpack.c.l.b16 %v503
    %v642 = vpack.c.b16 %v627, %v626
    %v643 = vpack.c.b16 %v629, %v628
    %v644 = vpack.c.b16 %v631, %v630
    %v645 = vpack.c.b16 %v633, %v632
    %v646 = vpack.c.b16 %v635, %v634
    %v647 = vpack.c.b16 %v637, %v636
    %v648 = vpack.c.b16 %v639, %v638
    %v649 = vpack.c.b16 %v641, %v640
    %658 = vmatprep.subr.bf16.mxu0 0
    %659 = vmatpush1.bf16.msra.mxu0 %v642
    %660 = vmatprep.subr.bf16.mxu0 0
    %661 = vmatpush1.bf16.msra.mxu0 %v643
    %662 = vmatprep.subr.bf16.mxu0 0
    %663 = vmatpush1.bf16.msra.mxu0 %v644
    %664 = vmatprep.subr.bf16.mxu0 0
    %665 = vmatpush1.bf16.msra.mxu0 %v645
    %666 = vmatprep.subr.bf16.mxu0 0
    %667 = vmatpush1.bf16.msra.mxu0 %v646
    %668 = vmatprep.subr.bf16.mxu0 0
    %669 = vmatpush1.bf16.msra.mxu0 %v647
    %670 = vmatprep.subr.bf16.mxu0 0
    %671 = vmatpush1.bf16.msra.mxu0 %v648
    %672 = vmatprep.subr.bf16.mxu0 0
    %673 = vmatpush1.bf16.msra.mxu0 %v649
    %674 = vmatprep.subr.bf16.mxu0 0
    %675 = vmatpush1.bf16.msra.mxu0 0
    %676 = vmatprep.subr.bf16.mxu0 0
    %677 = vmatpush1.bf16.msra.mxu0 0
    %678 = vmatprep.subr.bf16.mxu0 0
    %679 = vmatpush1.bf16.msra.mxu0 0
    %680 = vmatprep.subr.bf16.mxu0 0
    %681 = vmatpush1.bf16.msra.mxu0 0
    %682 = vmatprep.subr.bf16.mxu0 0
    %683 = vmatpush1.bf16.msra.mxu0 0
    %684 = vmatprep.subr.bf16.mxu0 0
    %685 = vmatpush1.bf16.msra.mxu0 0
    %686 = vmatprep.subr.bf16.mxu0 0
    %687 = vmatpush1.bf16.msra.mxu0 0
    %688 = vmatprep.subr.bf16.mxu0 0
    %689 = vmatpush1.bf16.msra.mxu0 0
    %690 = vmatprep.mubr.bf16.mxu0 0
    %691 = vmatmul.mubr.bf16.gmra.mrb[0].mxu0 %v487
    %v692 = vpop.f32.mrb[0].mxu0
    %v693 = vadd.f32 %v605, %v692
    %v694 = vpop.f32.mrb[0].mxu0
    %v695 = vpop.f32.mrb[0].mxu0
    %v696 = vpop.f32.mrb[0].mxu0
    %697 = vdwg.mxu0
    %v698 = vadd.f32 %v693, %v47
    %v699 = vtanh.pop %v698
    %700 = vst [vmem:[#allocation2] sm:$0x3] %v486
    %701 = vst [vmem:[#allocation3] sm:$0x3] %v699
    %v702 = vpack.c.bf16 %v699, %v699
    %s703 = scalar_lea.vmem %s5, 1
    %704 = vst [vmem:[%s703] sm:$0x1] %v702
    %s705 = scalar_lea.vmem %s0, 2
    %v706 = vld [vmem:[%s705] sm:$0x1]
    %v707 = vunpack.c.l.bf16 %v706
    %v708 = vld [vmem:[#allocation2] sm:$0x3]
    %v709 = vpack.c.bf16 %v708, %v708
    %v710 = vld [vmem:[%s1] sm:$0xf]
    %v711 = vld [vmem:[%s1 + $0x4] sm:$0xf]
    %v712 = vld [vmem:[%s1 + $0x8] sm:$0xf]
    %v713 = vld [vmem:[%s1 + $0xc] sm:$0xf]
    %v714 = vld [vmem:[%s1 + $0x10] sm:$0xf]
    %v715 = vld [vmem:[%s1 + $0x14] sm:$0xf]
    %v716 = vld [vmem:[%s1 + $0x18] sm:$0xf]
    %v717 = vld [vmem:[%s1 + $0x1c] sm:$0xf]
    %v718 = vld [vmem:[%s1 + $0x20] sm:$0xf]
    %v719 = vld [vmem:[%s1 + $0x24] sm:$0xf]
    %v720 = vld [vmem:[%s1 + $0x28] sm:$0xf]
    %v721 = vld [vmem:[%s1 + $0x2c] sm:$0xf]
    %v722 = vld [vmem:[%s1 + $0x30] sm:$0xf]
    %v723 = vld [vmem:[%s1 + $0x34] sm:$0xf]
    %v724 = vld [vmem:[%s1 + $0x38] sm:$0xf]
    %v725 = vld [vmem:[%s1 + $0x3c] sm:$0xf]
    %v742 = vunpack.c.l.b16 %v710
    %v743 = vunpack.c.l.b16 %v711
    %v744 = vunpack.c.l.b16 %v712
    %v745 = vunpack.c.l.b16 %v713
    %v746 = vunpack.c.l.b16 %v714
    %v747 = vunpack.c.l.b16 %v715
    %v748 = vunpack.c.l.b16 %v716
    %v749 = vunpack.c.l.b16 %v717
    %v750 = vunpack.c.l.b16 %v718
    %v751 = vunpack.c.l.b16 %v719
    %v752 = vunpack.c.l.b16 %v720
    %v753 = vunpack.c.l.b16 %v721
    %v754 = vunpack.c.l.b16 %v722
    %v755 = vunpack.c.l.b16 %v723
    %v756 = vunpack.c.l.b16 %v724
    %v757 = vunpack.c.l.b16 %v725
    %v758 = vpack.c.b16 %v743, %v742
    %v759 = vpack.c.b16 %v745, %v744
    %v760 = vpack.c.b16 %v747, %v746
    %v761 = vpack.c.b16 %v749, %v748
    %v762 = vpack.c.b16 %v751, %v750
    %v763 = vpack.c.b16 %v753, %v752
    %v764 = vpack.c.b16 %v755, %v754
    %v765 = vpack.c.b16 %v757, %v756
    %774 = vmatprep.subr.bf16.mxu0 0
    %775 = vmatpush1.bf16.msra.mxu0 %v758
    %776 = vmatprep.subr.bf16.mxu0 0
    %777 = vmatpush1.bf16.msra.mxu0 %v759
    %778 = vmatprep.subr.bf16.mxu0 0
    %779 = vmatpush1.bf16.msra.mxu0 %v760
    %780 = vmatprep.subr.bf16.mxu0 0
    %781 = vmatpush1.bf16.msra.mxu0 %v761
    %782 = vmatprep.subr.bf16.mxu0 0
    %783 = vmatpush1.bf16.msra.mxu0 %v762
    %784 = vmatprep.subr.bf16.mxu0 0
    %785 = vmatpush1.bf16.msra.mxu0 %v763
    %786 = vmatprep.subr.bf16.mxu0 0
    %787 = vmatpush1.bf16.msra.mxu0 %v764
    %788 = vmatprep.subr.bf16.mxu0 0
    %789 = vmatpush1.bf16.msra.mxu0 %v765
    %790 = vmatprep.subr.bf16.mxu0 0
    %791 = vmatpush1.bf16.msra.mxu0 0
    %792 = vmatprep.subr.bf16.mxu0 0
    %793 = vmatpush1.bf16.msra.mxu0 0
    %794 = vmatprep.subr.bf16.mxu0 0
    %795 = vmatpush1.bf16.msra.mxu0 0
    %796 = vmatprep.subr.bf16.mxu0 0
    %797 = vmatpush1.bf16.msra.mxu0 0
    %798 = vmatprep.subr.bf16.mxu0 0
    %799 = vmatpush1.bf16.msra.mxu0 0
    %800 = vmatprep.subr.bf16.mxu0 0
    %801 = vmatpush1.bf16.msra.mxu0 0
    %802 = vmatprep.subr.bf16.mxu0 0
    %803 = vmatpush1.bf16.msra.mxu0 0
    %804 = vmatprep.subr.bf16.mxu0 0
    %805 = vmatpush1.bf16.msra.mxu0 0
    %806 = vmatprep.mubr.bf16.mxu0 0
    %807 = vmatmul.mubr.bf16.gmra.mrb[0].mxu0 %v709
    %v808 = vpop.f32.mrb[0].mxu0
    %v809 = vadd.f32 0.0, %v808
    %v810 = vpop.f32.mrb[0].mxu0
    %v811 = vpop.f32.mrb[0].mxu0
    %v812 = vpop.f32.mrb[0].mxu0
    %813 = vdwg.mxu0
    %v814 = vadd.f32 %v707, %v809
    %v815 = vtanh.pop %v814
    %v816 = vpack.c.bf16 %v815, %v815
    %v817 = vld [vmem:[%s2] sm:$0xf]
    %v818 = vld [vmem:[%s2 + $0x4] sm:$0xf]
    %v819 = vld [vmem:[%s2 + $0x8] sm:$0xf]
    %v820 = vld [vmem:[%s2 + $0xc] sm:$0xf]
    %v821 = vld [vmem:[%s2 + $0x10] sm:$0xf]
    %v822 = vld [vmem:[%s2 + $0x14] sm:$0xf]
    %v823 = vld [vmem:[%s2 + $0x18] sm:$0xf]
    %v824 = vld [vmem:[%s2 + $0x1c] sm:$0xf]
    %v825 = vld [vmem:[%s2 + $0x20] sm:$0xf]
    %v826 = vld [vmem:[%s2 + $0x24] sm:$0xf]
    %v827 = vld [vmem:[%s2 + $0x28] sm:$0xf]
    %v828 = vld [vmem:[%s2 + $0x2c] sm:$0xf]
    %v829 = vld [vmem:[%s2 + $0x30] sm:$0xf]
    %v830 = vld [vmem:[%s2 + $0x34] sm:$0xf]
    %v831 = vld [vmem:[%s2 + $0x38] sm:$0xf]
    %v832 = vld [vmem:[%s2 + $0x3c] sm:$0xf]
    %v833 = vld [vmem:[#allocation3] sm:$0x3]
    %v834 = vpack.c.bf16 %v833, %v833
    %v835 = vld [vmem:[%s3] sm:$0xf]
    %v836 = vld [vmem:[%s3 + $0x4] sm:$0xf]
    %v837 = vld [vmem:[%s3 + $0x8] sm:$0xf]
    %v838 = vld [vmem:[%s3 + $0xc] sm:$0xf]
    %v839 = vld [vmem:[%s3 + $0x10] sm:$0xf]
    %v840 = vld [vmem:[%s3 + $0x14] sm:$0xf]
    %v841 = vld [vmem:[%s3 + $0x18] sm:$0xf]
    %v842 = vld [vmem:[%s3 + $0x1c] sm:$0xf]
    %v843 = vld [vmem:[%s3 + $0x20] sm:$0xf]
    %v844 = vld [vmem:[%s3 + $0x24] sm:$0xf]
    %v845 = vld [vmem:[%s3 + $0x28] sm:$0xf]
    %v846 = vld [vmem:[%s3 + $0x2c] sm:$0xf]
    %v847 = vld [vmem:[%s3 + $0x30] sm:$0xf]
    %v848 = vld [vmem:[%s3 + $0x34] sm:$0xf]
    %v849 = vld [vmem:[%s3 + $0x38] sm:$0xf]
    %v850 = vld [vmem:[%s3 + $0x3c] sm:$0xf]
    %v867 = vunpack.c.l.b16 %v835
    %v868 = vunpack.c.l.b16 %v836
    %v869 = vunpack.c.l.b16 %v837
    %v870 = vunpack.c.l.b16 %v838
    %v871 = vunpack.c.l.b16 %v839
    %v872 = vunpack.c.l.b16 %v840
    %v873 = vunpack.c.l.b16 %v841
    %v874 = vunpack.c.l.b16 %v842
    %v875 = vunpack.c.l.b16 %v843
    %v876 = vunpack.c.l.b16 %v844
    %v877 = vunpack.c.l.b16 %v845
    %v878 = vunpack.c.l.b16 %v846
    %v879 = vunpack.c.l.b16 %v847
    %v880 = vunpack.c.l.b16 %v848
    %v881 = vunpack.c.l.b16 %v849
    %v882 = vunpack.c.l.b16 %v850
    %v883 = vpack.c.b16 %v868, %v867
    %v884 = vpack.c.b16 %v870, %v869
    %v885 = vpack.c.b16 %v872, %v871
    %v886 = vpack.c.b16 %v874, %v873
    %v887 = vpack.c.b16 %v876, %v875
    %v888 = vpack.c.b16 %v878, %v877
    %v889 = vpack.c.b16 %v880, %v879
    %v890 = vpack.c.b16 %v882, %v881
    %899 = vmatprep.subr.bf16.mxu0 0
    %900 = vmatpush1.bf16.msra.mxu0 %v883
    %901 = vmatprep.subr.bf16.mxu0 0
    %902 = vmatpush1.bf16.msra.mxu0 %v884
    %903 = vmatprep.subr.bf16.mxu0 0
    %904 = vmatpush1.bf16.msra.mxu0 %v885
    %905 = vmatprep.subr.bf16.mxu0 0
    %906 = vmatpush1.bf16.msra.mxu0 %v886
    %907 = vmatprep.subr.bf16.mxu0 0
    %908 = vmatpush1.bf16.msra.mxu0 %v887
    %909 = vmatprep.subr.bf16.mxu0 0
    %910 = vmatpush1.bf16.msra.mxu0 %v888
    %911 = vmatprep.subr.bf16.mxu0 0
    %912 = vmatpush1.bf16.msra.mxu0 %v889
    %913 = vmatprep.subr.bf16.mxu0 0
    %914 = vmatpush1.bf16.msra.mxu0 %v890
    %915 = vmatprep.subr.bf16.mxu0 0
    %916 = vmatpush1.bf16.msra.mxu0 0
    %917 = vmatprep.subr.bf16.mxu0 0
    %918 = vmatpush1.bf16.msra.mxu0 0
    %919 = vmatprep.subr.bf16.mxu0 0
    %920 = vmatpush1.bf16.msra.mxu0 0
    %921 = vmatprep.subr.bf16.mxu0 0
    %922 = vmatpush1.bf16.msra.mxu0 0
    %923 = vmatprep.subr.bf16.mxu0 0
    %924 = vmatpush1.bf16.msra.mxu0 0
    %925 = vmatprep.subr.bf16.mxu0 0
    %926 = vmatpush1.bf16.msra.mxu0 0
    %927 = vmatprep.subr.bf16.mxu0 0
    %928 = vmatpush1.bf16.msra.mxu0 0
    %929 = vmatprep.subr.bf16.mxu0 0
    %930 = vmatpush1.bf16.msra.mxu0 0
    %931 = vmatprep.mubr.bf16.mxu0 0
    %932 = vmatmul.mubr.bf16.gmra.mrb[0].mxu0 %v834
    %v933 = vpop.f32.mrb[0].mxu0
    %v934 = vadd.f32 0.0, %v933
    %v935 = vpop.f32.mrb[0].mxu0
    %v936 = vpop.f32.mrb[0].mxu0
    %v937 = vpop.f32.mrb[0].mxu0
    %938 = vdwg.mxu0
    %v955 = vunpack.c.l.b16 %v817
    %v956 = vunpack.c.l.b16 %v818
    %v957 = vunpack.c.l.b16 %v819
    %v958 = vunpack.c.l.b16 %v820
    %v959 = vunpack.c.l.b16 %v821
    %v960 = vunpack.c.l.b16 %v822
    %v961 = vunpack.c.l.b16 %v823
    %v962 = vunpack.c.l.b16 %v824
    %v963 = vunpack.c.l.b16 %v825
    %v964 = vunpack.c.l.b16 %v826
    %v965 = vunpack.c.l.b16 %v827
    %v966 = vunpack.c.l.b16 %v828
    %v967 = vunpack.c.l.b16 %v829
    %v968 = vunpack.c.l.b16 %v830
    %v969 = vunpack.c.l.b16 %v831
    %v970 = vunpack.c.l.b16 %v832
    %v971 = vpack.c.b16 %v956, %v955
    %v972 = vpack.c.b16 %v958, %v957
    %v973 = vpack.c.b16 %v960, %v959
    %v974 = vpack.c.b16 %v962, %v961
    %v975 = vpack.c.b16 %v964, %v963
    %v976 = vpack.c.b16 %v966, %v965
    %v977 = vpack.c.b16 %v968, %v967
    %v978 = vpack.c.b16 %v970, %v969
    %987 = vmatprep.subr.bf16.mxu0 0
    %988 = vmatpush1.bf16.msra.mxu0 %v971
    %989 = vmatprep.subr.bf16.mxu0 0
    %990 = vmatpush1.bf16.msra.mxu0 %v972
    %991 = vmatprep.subr.bf16.mxu0 0
    %992 = vmatpush1.bf16.msra.mxu0 %v973
    %993 = vmatprep.subr.bf16.mxu0 0
    %994 = vmatpush1.bf16.msra.mxu0 %v974
    %995 = vmatprep.subr.bf16.mxu0 0
    %996 = vmatpush1.bf16.msra.mxu0 %v975
    %997 = vmatprep.subr.bf16.mxu0 0
    %998 = vmatpush1.bf16.msra.mxu0 %v976
    %999 = vmatprep.subr.bf16.mxu0 0
    %1000 = vmatpush1.bf16.msra.mxu0 %v977
    %1001 = vmatprep.subr.bf16.mxu0 0
    %1002 = vmatpush1.bf16.msra.mxu0 %v978
    %1003 = vmatprep.subr.bf16.mxu0 0
    %1004 = vmatpush1.bf16.msra.mxu0 0
    %1005 = vmatprep.subr.bf16.mxu0 0
    %1006 = vmatpush1.bf16.msra.mxu0 0
    %1007 = vmatprep.subr.bf16.mxu0 0
    %1008 = vmatpush1.bf16.msra.mxu0 0
    %1009 = vmatprep.subr.bf16.mxu0 0
    %1010 = vmatpush1.bf16.msra.mxu0 0
    %1011 = vmatprep.subr.bf16.mxu0 0
    %1012 = vmatpush1.bf16.msra.mxu0 0
    %1013 = vmatprep.subr.bf16.mxu0 0
    %1014 = vmatpush1.bf16.msra.mxu0 0
    %1015 = vmatprep.subr.bf16.mxu0 0
    %1016 = vmatpush1.bf16.msra.mxu0 0
    %1017 = vmatprep.subr.bf16.mxu0 0
    %1018 = vmatpush1.bf16.msra.mxu0 0
    %1019 = vmatprep.mubr.bf16.mxu0 0
    %1020 = vmatmul.mubr.bf16.gmra.mrb[0].mxu0 %v816
    %v1021 = vpop.f32.mrb[0].mxu0
    %v1022 = vadd.f32 %v934, %v1021
    %v1023 = vpop.f32.mrb[0].mxu0
    %v1024 = vpop.f32.mrb[0].mxu0
    %v1025 = vpop.f32.mrb[0].mxu0
    %1026 = vdwg.mxu0
    %v1027 = vadd.f32 %v1022, %v47
    %v1028 = vtanh.pop %v1027
    %1029 = vst [vmem:[#allocation2] sm:$0x3] %v815
    %1030 = vst [vmem:[#allocation3] sm:$0x3] %v1028
    %v1031 = vpack.c.bf16 %v1028, %v1028
    %s1032 = scalar_lea.vmem %s5, 2
    %1033 = vst [vmem:[%s1032] sm:$0x1] %v1031
    %s1034 = scalar_lea.vmem %s0, 3
    %v1035 = vld [vmem:[%s1034] sm:$0x1]
    %v1036 = vunpack.c.l.bf16 %v1035
    %v1037 = vld [vmem:[#allocation2] sm:$0x3]
    %v1038 = vpack.c.bf16 %v1037, %v1037
    %v1039 = vld [vmem:[%s1] sm:$0xf]
    %v1040 = vld [vmem:[%s1 + $0x4] sm:$0xf]
    %v1041 = vld [vmem:[%s1 + $0x8] sm:$0xf]
    %v1042 = vld [vmem:[%s1 + $0xc] sm:$0xf]
    %v1043 = vld [vmem:[%s1 + $0x10] sm:$0xf]
    %v1044 = vld [vmem:[%s1 + $0x14] sm:$0xf]
    %v1045 = vld [vmem:[%s1 + $0x18] sm:$0xf]
    %v1046 = vld [vmem:[%s1 + $0x1c] sm:$0xf]
    %v1047 = vld [vmem:[%s1 + $0x20] sm:$0xf]
    %v1048 = vld [vmem:[%s1 + $0x24] sm:$0xf]
    %v1049 = vld [vmem:[%s1 + $0x28] sm:$0xf]
    %v1050 = vld [vmem:[%s1 + $0x2c] sm:$0xf]
    %v1051 = vld [vmem:[%s1 + $0x30] sm:$0xf]
    %v1052 = vld [vmem:[%s1 + $0x34] sm:$0xf]
    %v1053 = vld [vmem:[%s1 + $0x38] sm:$0xf]
    %v1054 = vld [vmem:[%s1 + $0x3c] sm:$0xf]
    %v1071 = vunpack.c.l.b16 %v1039
    %v1072 = vunpack.c.l.b16 %v1040
    %v1073 = vunpack.c.l.b16 %v1041
    %v1074 = vunpack.c.l.b16 %v1042
    %v1075 = vunpack.c.l.b16 %v1043
    %v1076 = vunpack.c.l.b16 %v1044
    %v1077 = vunpack.c.l.b16 %v1045
    %v1078 = vunpack.c.l.b16 %v1046
    %v1079 = vunpack.c.l.b16 %v1047
    %v1080 = vunpack.c.l.b16 %v1048
    %v1081 = vunpack.c.l.b16 %v1049
    %v1082 = vunpack.c.l.b16 %v1050
    %v1083 = vunpack.c.l.b16 %v1051
    %v1084 = vunpack.c.l.b16 %v1052
    %v1085 = vunpack.c.l.b16 %v1053
    %v1086 = vunpack.c.l.b16 %v1054
    %v1087 = vpack.c.b16 %v1072, %v1071
    %v1088 = vpack.c.b16 %v1074, %v1073
    %v1089 = vpack.c.b16 %v1076, %v1075
    %v1090 = vpack.c.b16 %v1078, %v1077
    %v1091 = vpack.c.b16 %v1080, %v1079
    %v1092 = vpack.c.b16 %v1082, %v1081
    %v1093 = vpack.c.b16 %v1084, %v1083
    %v1094 = vpack.c.b16 %v1086, %v1085
    %1103 = vmatprep.subr.bf16.mxu0 0
    %1104 = vmatpush1.bf16.msra.mxu0 %v1087
    %1105 = vmatprep.subr.bf16.mxu0 0
    %1106 = vmatpush1.bf16.msra.mxu0 %v1088
    %1107 = vmatprep.subr.bf16.mxu0 0
    %1108 = vmatpush1.bf16.msra.mxu0 %v1089
    %1109 = vmatprep.subr.bf16.mxu0 0
    %1110 = vmatpush1.bf16.msra.mxu0 %v1090
    %1111 = vmatprep.subr.bf16.mxu0 0
    %1112 = vmatpush1.bf16.msra.mxu0 %v1091
    %1113 = vmatprep.subr.bf16.mxu0 0
    %1114 = vmatpush1.bf16.msra.mxu0 %v1092
    %1115 = vmatprep.subr.bf16.mxu0 0
    %1116 = vmatpush1.bf16.msra.mxu0 %v1093
    %1117 = vmatprep.subr.bf16.mxu0 0
    %1118 = vmatpush1.bf16.msra.mxu0 %v1094
    %1119 = vmatprep.subr.bf16.mxu0 0
    %1120 = vmatpush1.bf16.msra.mxu0 0
    %1121 = vmatprep.subr.bf16.mxu0 0
    %1122 = vmatpush1.bf16.msra.mxu0 0
    %1123 = vmatprep.subr.bf16.mxu0 0
    %1124 = vmatpush1.bf16.msra.mxu0 0
    %1125 = vmatprep.subr.bf16.mxu0 0
    %1126 = vmatpush1.bf16.msra.mxu0 0
    %1127 = vmatprep.subr.bf16.mxu0 0
    %1128 = vmatpush1.bf16.msra.mxu0 0
    %1129 = vmatprep.subr.bf16.mxu0 0
    %1130 = vmatpush1.bf16.msra.mxu0 0
    %1131 = vmatprep.subr.bf16.mxu0 0
    %1132 = vmatpush1.bf16.msra.mxu0 0
    %1133 = vmatprep.subr.bf16.mxu0 0
    %1134 = vmatpush1.bf16.msra.mxu0 0
    %1135 = vmatprep.mubr.bf16.mxu0 0
    %1136 = vmatmul.mubr.bf16.gmra.mrb[0].mxu0 %v1038
    %v1137 = vpop.f32.mrb[0].mxu0
    %v1138 = vadd.f32 0.0, %v1137
    %v1139 = vpop.f32.mrb[0].mxu0
    %v1140 = vpop.f32.mrb[0].mxu0
    %v1141 = vpop.f32.mrb[0].mxu0
    %1142 = vdwg.mxu0
    %v1143 = vadd.f32 %v1036, %v1138
    %v1144 = vtanh.pop %v1143
    %v1145 = vpack.c.bf16 %v1144, %v1144
    %v1146 = vld [vmem:[%s2] sm:$0xf]
    %v1147 = vld [vmem:[%s2 + $0x4] sm:$0xf]
    %v1148 = vld [vmem:[%s2 + $0x8] sm:$0xf]
    %v1149 = vld [vmem:[%s2 + $0xc] sm:$0xf]
    %v1150 = vld [vmem:[%s2 + $0x10] sm:$0xf]
    %v1151 = vld [vmem:[%s2 + $0x14] sm:$0xf]
    %v1152 = vld [vmem:[%s2 + $0x18] sm:$0xf]
    %v1153 = vld [vmem:[%s2 + $0x1c] sm:$0xf]
    %v1154 = vld [vmem:[%s2 + $0x20] sm:$0xf]
    %v1155 = vld [vmem:[%s2 + $0x24] sm:$0xf]
    %v1156 = vld [vmem:[%s2 + $0x28] sm:$0xf]
    %v1157 = vld [vmem:[%s2 + $0x2c] sm:$0xf]
    %v1158 = vld [vmem:[%s2 + $0x30] sm:$0xf]
    %v1159 = vld [vmem:[%s2 + $0x34] sm:$0xf]
    %v1160 = vld [vmem:[%s2 + $0x38] sm:$0xf]
    %v1161 = vld [vmem:[%s2 + $0x3c] sm:$0xf]
    %v1162 = vld [vmem:[#allocation3] sm:$0x3]
    %v1163 = vpack.c.bf16 %v1162, %v1162
    %v1164 = vld [vmem:[%s3] sm:$0xf]
    %v1165 = vld [vmem:[%s3 + $0x4] sm:$0xf]
    %v1166 = vld [vmem:[%s3 + $0x8] sm:$0xf]
    %v1167 = vld [vmem:[%s3 + $0xc] sm:$0xf]
    %v1168 = vld [vmem:[%s3 + $0x10] sm:$0xf]
    %v1169 = vld [vmem:[%s3 + $0x14] sm:$0xf]
    %v1170 = vld [vmem:[%s3 + $0x18] sm:$0xf]
    %v1171 = vld [vmem:[%s3 + $0x1c] sm:$0xf]
    %v1172 = vld [vmem:[%s3 + $0x20] sm:$0xf]
    %v1173 = vld [vmem:[%s3 + $0x24] sm:$0xf]
    %v1174 = vld [vmem:[%s3 + $0x28] sm:$0xf]
    %v1175 = vld [vmem:[%s3 + $0x2c] sm:$0xf]
    %v1176 = vld [vmem:[%s3 + $0x30] sm:$0xf]
    %v1177 = vld [vmem:[%s3 + $0x34] sm:$0xf]
    %v1178 = vld [vmem:[%s3 + $0x38] sm:$0xf]
    %v1179 = vld [vmem:[%s3 + $0x3c] sm:$0xf]
    %v1196 = vunpack.c.l.b16 %v1164
    %v1197 = vunpack.c.l.b16 %v1165
    %v1198 = vunpack.c.l.b16 %v1166
    %v1199 = vunpack.c.l.b16 %v1167
    %v1200 = vunpack.c.l.b16 %v1168
    %v1201 = vunpack.c.l.b16 %v1169
    %v1202 = vunpack.c.l.b16 %v1170
    %v1203 = vunpack.c.l.b16 %v1171
    %v1204 = vunpack.c.l.b16 %v1172
    %v1205 = vunpack.c.l.b16 %v1173
    %v1206 = vunpack.c.l.b16 %v1174
    %v1207 = vunpack.c.l.b16 %v1175
    %v1208 = vunpack.c.l.b16 %v1176
    %v1209 = vunpack.c.l.b16 %v1177
    %v1210 = vunpack.c.l.b16 %v1178
    %v1211 = vunpack.c.l.b16 %v1179
    %v1212 = vpack.c.b16 %v1197, %v1196
    %v1213 = vpack.c.b16 %v1199, %v1198
    %v1214 = vpack.c.b16 %v1201, %v1200
    %v1215 = vpack.c.b16 %v1203, %v1202
    %v1216 = vpack.c.b16 %v1205, %v1204
    %v1217 = vpack.c.b16 %v1207, %v1206
    %v1218 = vpack.c.b16 %v1209, %v1208
    %v1219 = vpack.c.b16 %v1211, %v1210
    %1228 = vmatprep.subr.bf16.mxu0 0
    %1229 = vmatpush1.bf16.msra.mxu0 %v1212
    %1230 = vmatprep.subr.bf16.mxu0 0
    %1231 = vmatpush1.bf16.msra.mxu0 %v1213
    %1232 = vmatprep.subr.bf16.mxu0 0
    %1233 = vmatpush1.bf16.msra.mxu0 %v1214
    %1234 = vmatprep.subr.bf16.mxu0 0
    %1235 = vmatpush1.bf16.msra.mxu0 %v1215
    %1236 = vmatprep.subr.bf16.mxu0 0
    %1237 = vmatpush1.bf16.msra.mxu0 %v1216
    %1238 = vmatprep.subr.bf16.mxu0 0
    %1239 = vmatpush1.bf16.msra.mxu0 %v1217
    %1240 = vmatprep.subr.bf16.mxu0 0
    %1241 = vmatpush1.bf16.msra.mxu0 %v1218
    %1242 = vmatprep.subr.bf16.mxu0 0
    %1243 = vmatpush1.bf16.msra.mxu0 %v1219
    %1244 = vmatprep.subr.bf16.mxu0 0
    %1245 = vmatpush1.bf16.msra.mxu0 0
    %1246 = vmatprep.subr.bf16.mxu0 0
    %1247 = vmatpush1.bf16.msra.mxu0 0
    %1248 = vmatprep.subr.bf16.mxu0 0
    %1249 = vmatpush1.bf16.msra.mxu0 0
    %1250 = vmatprep.subr.bf16.mxu0 0
    %1251 = vmatpush1.bf16.msra.mxu0 0
    %1252 = vmatprep.subr.bf16.mxu0 0
    %1253 = vmatpush1.bf16.msra.mxu0 0
    %1254 = vmatprep.subr.bf16.mxu0 0
    %1255 = vmatpush1.bf16.msra.mxu0 0
    %1256 = vmatprep.subr.bf16.mxu0 0
    %1257 = vmatpush1.bf16.msra.mxu0 0
    %1258 = vmatprep.subr.bf16.mxu0 0
    %1259 = vmatpush1.bf16.msra.mxu0 0
    %1260 = vmatprep.mubr.bf16.mxu0 0
    %1261 = vmatmul.mubr.bf16.gmra.mrb[0].mxu0 %v1163
    %v1262 = vpop.f32.mrb[0].mxu0
    %v1263 = vadd.f32 0.0, %v1262
    %v1264 = vpop.f32.mrb[0].mxu0
    %v1265 = vpop.f32.mrb[0].mxu0
    %v1266 = vpop.f32.mrb[0].mxu0
    %1267 = vdwg.mxu0
    %v1284 = vunpack.c.l.b16 %v1146
    %v1285 = vunpack.c.l.b16 %v1147
    %v1286 = vunpack.c.l.b16 %v1148
    %v1287 = vunpack.c.l.b16 %v1149
    %v1288 = vunpack.c.l.b16 %v1150
    %v1289 = vunpack.c.l.b16 %v1151
    %v1290 = vunpack.c.l.b16 %v1152
    %v1291 = vunpack.c.l.b16 %v1153
    %v1292 = vunpack.c.l.b16 %v1154
    %v1293 = vunpack.c.l.b16 %v1155
    %v1294 = vunpack.c.l.b16 %v1156
    %v1295 = vunpack.c.l.b16 %v1157
    %v1296 = vunpack.c.l.b16 %v1158
    %v1297 = vunpack.c.l.b16 %v1159
    %v1298 = vunpack.c.l.b16 %v1160
    %v1299 = vunpack.c.l.b16 %v1161
    %v1300 = vpack.c.b16 %v1285, %v1284
    %v1301 = vpack.c.b16 %v1287, %v1286
    %v1302 = vpack.c.b16 %v1289, %v1288
    %v1303 = vpack.c.b16 %v1291, %v1290
    %v1304 = vpack.c.b16 %v1293, %v1292
    %v1305 = vpack.c.b16 %v1295, %v1294
    %v1306 = vpack.c.b16 %v1297, %v1296
    %v1307 = vpack.c.b16 %v1299, %v1298
    %1316 = vmatprep.subr.bf16.mxu0 0
    %1317 = vmatpush1.bf16.msra.mxu0 %v1300
    %1318 = vmatprep.subr.bf16.mxu0 0
    %1319 = vmatpush1.bf16.msra.mxu0 %v1301
    %1320 = vmatprep.subr.bf16.mxu0 0
    %1321 = vmatpush1.bf16.msra.mxu0 %v1302
    %1322 = vmatprep.subr.bf16.mxu0 0
    %1323 = vmatpush1.bf16.msra.mxu0 %v1303
    %1324 = vmatprep.subr.bf16.mxu0 0
    %1325 = vmatpush1.bf16.msra.mxu0 %v1304
    %1326 = vmatprep.subr.bf16.mxu0 0
    %1327 = vmatpush1.bf16.msra.mxu0 %v1305
    %1328 = vmatprep.subr.bf16.mxu0 0
    %1329 = vmatpush1.bf16.msra.mxu0 %v1306
    %1330 = vmatprep.subr.bf16.mxu0 0
    %1331 = vmatpush1.bf16.msra.mxu0 %v1307
    %1332 = vmatprep.subr.bf16.mxu0 0
    %1333 = vmatpush1.bf16.msra.mxu0 0
    %1334 = vmatprep.subr.bf16.mxu0 0
    %1335 = vmatpush1.bf16.msra.mxu0 0
    %1336 = vmatprep.subr.bf16.mxu0 0
    %1337 = vmatpush1.bf16.msra.mxu0 0
    %1338 = vmatprep.subr.bf16.mxu0 0
    %1339 = vmatpush1.bf16.msra.mxu0 0
    %1340 = vmatprep.subr.bf16.mxu0 0
    %1341 = vmatpush1.bf16.msra.mxu0 0
    %1342 = vmatprep.subr.bf16.mxu0 0
    %1343 = vmatpush1.bf16.msra.mxu0 0
    %1344 = vmatprep.subr.bf16.mxu0 0
    %1345 = vmatpush1.bf16.msra.mxu0 0
    %1346 = vmatprep.subr.bf16.mxu0 0
    %1347 = vmatpush1.bf16.msra.mxu0 0
    %1348 = vmatprep.mubr.bf16.mxu0 0
    %1349 = vmatmul.mubr.bf16.gmra.mrb[0].mxu0 %v1145
    %v1350 = vpop.f32.mrb[0].mxu0
    %v1351 = vadd.f32 %v1263, %v1350
    %v1352 = vpop.f32.mrb[0].mxu0
    %v1353 = vpop.f32.mrb[0].mxu0
    %v1354 = vpop.f32.mrb[0].mxu0
    %1355 = vdwg.mxu0
    %v1356 = vadd.f32 %v1351, %v47
    %v1357 = vtanh.pop %v1356
    %1358 = vst [vmem:[#allocation2] sm:$0x3] %v1144
    %1359 = vst [vmem:[#allocation3] sm:$0x3] %v1357
    %v1360 = vpack.c.bf16 %v1357, %v1357
    %s1361 = scalar_lea.vmem %s5, 3
    %1362 = vst [vmem:[%s1361] sm:$0x1] %v1360
    %s1363 = scalar_lea.vmem %s0, 4
    %v1364 = vld [vmem:[%s1363] sm:$0x1]
    %v1365 = vunpack.c.l.bf16 %v1364
    %v1366 = vld [vmem:[#allocation2] sm:$0x3]
    %v1367 = vpack.c.bf16 %v1366, %v1366
    %v1368 = vld [vmem:[%s1] sm:$0xf]
    %v1369 = vld [vmem:[%s1 + $0x4] sm:$0xf]
    %v1370 = vld [vmem:[%s1 + $0x8] sm:$0xf]
    %v1371 = vld [vmem:[%s1 + $0xc] sm:$0xf]
    %v1372 = vld [vmem:[%s1 + $0x10] sm:$0xf]
    %v1373 = vld [vmem:[%s1 + $0x14] sm:$0xf]
    %v1374 = vld [vmem:[%s1 + $0x18] sm:$0xf]
    %v1375 = vld [vmem:[%s1 + $0x1c] sm:$0xf]
    %v1376 = vld [vmem:[%s1 + $0x20] sm:$0xf]
    %v1377 = vld [vmem:[%s1 + $0x24] sm:$0xf]
    %v1378 = vld [vmem:[%s1 + $0x28] sm:$0xf]
    %v1379 = vld [vmem:[%s1 + $0x2c] sm:$0xf]
    %v1380 = vld [vmem:[%s1 + $0x30] sm:$0xf]
    %v1381 = vld [vmem:[%s1 + $0x34] sm:$0xf]
    %v1382 = vld [vmem:[%s1 + $0x38] sm:$0xf]
    %v1383 = vld [vmem:[%s1 + $0x3c] sm:$0xf]
    %v1400 = vunpack.c.l.b16 %v1368
    %v1401 = vunpack.c.l.b16 %v1369
    %v1402 = vunpack.c.l.b16 %v1370
    %v1403 = vunpack.c.l.b16 %v1371
    %v1404 = vunpack.c.l.b16 %v1372
    %v1405 = vunpack.c.l.b16 %v1373
    %v1406 = vunpack.c.l.b16 %v1374
    %v1407 = vunpack.c.l.b16 %v1375
    %v1408 = vunpack.c.l.b16 %v1376
    %v1409 = vunpack.c.l.b16 %v1377
    %v1410 = vunpack.c.l.b16 %v1378
    %v1411 = vunpack.c.l.b16 %v1379
    %v1412 = vunpack.c.l.b16 %v1380
    %v1413 = vunpack.c.l.b16 %v1381
    %v1414 = vunpack.c.l.b16 %v1382
    %v1415 = vunpack.c.l.b16 %v1383
    %v1416 = vpack.c.b16 %v1401, %v1400
    %v1417 = vpack.c.b16 %v1403, %v1402
    %v1418 = vpack.c.b16 %v1405, %v1404
    %v1419 = vpack.c.b16 %v1407, %v1406
    %v1420 = vpack.c.b16 %v1409, %v1408
    %v1421 = vpack.c.b16 %v1411, %v1410
    %v1422 = vpack.c.b16 %v1413, %v1412
    %v1423 = vpack.c.b16 %v1415, %v1414
    %1432 = vmatprep.subr.bf16.mxu0 0
    %1433 = vmatpush1.bf16.msra.mxu0 %v1416
    %1434 = vmatprep.subr.bf16.mxu0 0
    %1435 = vmatpush1.bf16.msra.mxu0 %v1417
    %1436 = vmatprep.subr.bf16.mxu0 0
    %1437 = vmatpush1.bf16.msra.mxu0 %v1418
    %1438 = vmatprep.subr.bf16.mxu0 0
    %1439 = vmatpush1.bf16.msra.mxu0 %v1419
    %1440 = vmatprep.subr.bf16.mxu0 0
    %1441 = vmatpush1.bf16.msra.mxu0 %v1420
    %1442 = vmatprep.subr.bf16.mxu0 0
    %1443 = vmatpush1.bf16.msra.mxu0 %v1421
    %1444 = vmatprep.subr.bf16.mxu0 0
    %1445 = vmatpush1.bf16.msra.mxu0 %v1422
    %1446 = vmatprep.subr.bf16.mxu0 0
    %1447 = vmatpush1.bf16.msra.mxu0 %v1423
    %1448 = vmatprep.subr.bf16.mxu0 0
    %1449 = vmatpush1.bf16.msra.mxu0 0
    %1450 = vmatprep.subr.bf16.mxu0 0
    %1451 = vmatpush1.bf16.msra.mxu0 0
    %1452 = vmatprep.subr.bf16.mxu0 0
    %1453 = vmatpush1.bf16.msra.mxu0 0
    %1454 = vmatprep.subr.bf16.mxu0 0
    %1455 = vmatpush1.bf16.msra.mxu0 0
    %1456 = vmatprep.subr.bf16.mxu0 0
    %1457 = vmatpush1.bf16.msra.mxu0 0
    %1458 = vmatprep.subr.bf16.mxu0 0
    %1459 = vmatpush1.bf16.msra.mxu0 0
    %1460 = vmatprep.subr.bf16.mxu0 0
    %1461 = vmatpush1.bf16.msra.mxu0 0
    %1462 = vmatprep.subr.bf16.mxu0 0
    %1463 = vmatpush1.bf16.msra.mxu0 0
    %1464 = vmatprep.mubr.bf16.mxu0 0
    %1465 = vmatmul.mubr.bf16.gmra.mrb[0].mxu0 %v1367
    %v1466 = vpop.f32.mrb[0].mxu0
    %v1467 = vadd.f32 0.0, %v1466
    %v1468 = vpop.f32.mrb[0].mxu0
    %v1469 = vpop.f32.mrb[0].mxu0
    %v1470 = vpop.f32.mrb[0].mxu0
    %1471 = vdwg.mxu0
    %v1472 = vadd.f32 %v1365, %v1467
    %v1473 = vtanh.pop %v1472
    %v1474 = vpack.c.bf16 %v1473, %v1473
    %v1475 = vld [vmem:[%s2] sm:$0xf]
    %v1476 = vld [vmem:[%s2 + $0x4] sm:$0xf]
    %v1477 = vld [vmem:[%s2 + $0x8] sm:$0xf]
    %v1478 = vld [vmem:[%s2 + $0xc] sm:$0xf]
    %v1479 = vld [vmem:[%s2 + $0x10] sm:$0xf]
    %v1480 = vld [vmem:[%s2 + $0x14] sm:$0xf]
    %v1481 = vld [vmem:[%s2 + $0x18] sm:$0xf]
    %v1482 = vld [vmem:[%s2 + $0x1c] sm:$0xf]
    %v1483 = vld [vmem:[%s2 + $0x20] sm:$0xf]
    %v1484 = vld [vmem:[%s2 + $0x24] sm:$0xf]
    %v1485 = vld [vmem:[%s2 + $0x28] sm:$0xf]
    %v1486 = vld [vmem:[%s2 + $0x2c] sm:$0xf]
    %v1487 = vld [vmem:[%s2 + $0x30] sm:$0xf]
    %v1488 = vld [vmem:[%s2 + $0x34] sm:$0xf]
    %v1489 = vld [vmem:[%s2 + $0x38] sm:$0xf]
    %v1490 = vld [vmem:[%s2 + $0x3c] sm:$0xf]
    %v1491 = vld [vmem:[#allocation3] sm:$0x3]
    %v1492 = vpack.c.bf16 %v1491, %v1491
    %v1493 = vld [vmem:[%s3] sm:$0xf]
    %v1494 = vld [vmem:[%s3 + $0x4] sm:$0xf]
    %v1495 = vld [vmem:[%s3 + $0x8] sm:$0xf]
    %v1496 = vld [vmem:[%s3 + $0xc] sm:$0xf]
    %v1497 = vld [vmem:[%s3 + $0x10] sm:$0xf]
    %v1498 = vld [vmem:[%s3 + $0x14] sm:$0xf]
    %v1499 = vld [vmem:[%s3 + $0x18] sm:$0xf]
    %v1500 = vld [vmem:[%s3 + $0x1c] sm:$0xf]
    %v1501 = vld [vmem:[%s3 + $0x20] sm:$0xf]
    %v1502 = vld [vmem:[%s3 + $0x24] sm:$0xf]
    %v1503 = vld [vmem:[%s3 + $0x28] sm:$0xf]
    %v1504 = vld [vmem:[%s3 + $0x2c] sm:$0xf]
    %v1505 = vld [vmem:[%s3 + $0x30] sm:$0xf]
    %v1506 = vld [vmem:[%s3 + $0x34] sm:$0xf]
    %v1507 = vld [vmem:[%s3 + $0x38] sm:$0xf]
    %v1508 = vld [vmem:[%s3 + $0x3c] sm:$0xf]
    %v1525 = vunpack.c.l.b16 %v1493
    %v1526 = vunpack.c.l.b16 %v1494
    %v1527 = vunpack.c.l.b16 %v1495
    %v1528 = vunpack.c.l.b16 %v1496
    %v1529 = vunpack.c.l.b16 %v1497
    %v1530 = vunpack.c.l.b16 %v1498
    %v1531 = vunpack.c.l.b16 %v1499
    %v1532 = vunpack.c.l.b16 %v1500
    %v1533 = vunpack.c.l.b16 %v1501
    %v1534 = vunpack.c.l.b16 %v1502
    %v1535 = vunpack.c.l.b16 %v1503
    %v1536 = vunpack.c.l.b16 %v1504
    %v1537 = vunpack.c.l.b16 %v1505
    %v1538 = vunpack.c.l.b16 %v1506
    %v1539 = vunpack.c.l.b16 %v1507
    %v1540 = vunpack.c.l.b16 %v1508
    %v1541 = vpack.c.b16 %v1526, %v1525
    %v1542 = vpack.c.b16 %v1528, %v1527
    %v1543 = vpack.c.b16 %v1530, %v1529
    %v1544 = vpack.c.b16 %v1532, %v1531
    %v1545 = vpack.c.b16 %v1534, %v1533
    %v1546 = vpack.c.b16 %v1536, %v1535
    %v1547 = vpack.c.b16 %v1538, %v1537
    %v1548 = vpack.c.b16 %v1540, %v1539
    %1557 = vmatprep.subr.bf16.mxu0 0
    %1558 = vmatpush1.bf16.msra.mxu0 %v1541
    %1559 = vmatprep.subr.bf16.mxu0 0
    %1560 = vmatpush1.bf16.msra.mxu0 %v1542
    %1561 = vmatprep.subr.bf16.mxu0 0
    %1562 = vmatpush1.bf16.msra.mxu0 %v1543
    %1563 = vmatprep.subr.bf16.mxu0 0
    %1564 = vmatpush1.bf16.msra.mxu0 %v1544
    %1565 = vmatprep.subr.bf16.mxu0 0
    %1566 = vmatpush1.bf16.msra.mxu0 %v1545
    %1567 = vmatprep.subr.bf16.mxu0 0
    %1568 = vmatpush1.bf16.msra.mxu0 %v1546
    %1569 = vmatprep.subr.bf16.mxu0 0
    %1570 = vmatpush1.bf16.msra.mxu0 %v1547
    %1571 = vmatprep.subr.bf16.mxu0 0
    %1572 = vmatpush1.bf16.msra.mxu0 %v1548
    %1573 = vmatprep.subr.bf16.mxu0 0
    %1574 = vmatpush1.bf16.msra.mxu0 0
    %1575 = vmatprep.subr.bf16.mxu0 0
    %1576 = vmatpush1.bf16.msra.mxu0 0
    %1577 = vmatprep.subr.bf16.mxu0 0
    %1578 = vmatpush1.bf16.msra.mxu0 0
    %1579 = vmatprep.subr.bf16.mxu0 0
    %1580 = vmatpush1.bf16.msra.mxu0 0
    %1581 = vmatprep.subr.bf16.mxu0 0
    %1582 = vmatpush1.bf16.msra.mxu0 0
    %1583 = vmatprep.subr.bf16.mxu0 0
    %1584 = vmatpush1.bf16.msra.mxu0 0
    %1585 = vmatprep.subr.bf16.mxu0 0
    %1586 = vmatpush1.bf16.msra.mxu0 0
    %1587 = vmatprep.subr.bf16.mxu0 0
    %1588 = vmatpush1.bf16.msra.mxu0 0
    %1589 = vmatprep.mubr.bf16.mxu0 0
    %1590 = vmatmul.mubr.bf16.gmra.mrb[0].mxu0 %v1492
    %v1591 = vpop.f32.mrb[0].mxu0
    %v1592 = vadd.f32 0.0, %v1591
    %v1593 = vpop.f32.mrb[0].mxu0
    %v1594 = vpop.f32.mrb[0].mxu0
    %v1595 = vpop.f32.mrb[0].mxu0
    %1596 = vdwg.mxu0
    %v1613 = vunpack.c.l.b16 %v1475
    %v1614 = vunpack.c.l.b16 %v1476
    %v1615 = vunpack.c.l.b16 %v1477
    %v1616 = vunpack.c.l.b16 %v1478
    %v1617 = vunpack.c.l.b16 %v1479
    %v1618 = vunpack.c.l.b16 %v1480
    %v1619 = vunpack.c.l.b16 %v1481
    %v1620 = vunpack.c.l.b16 %v1482
    %v1621 = vunpack.c.l.b16 %v1483
    %v1622 = vunpack.c.l.b16 %v1484
    %v1623 = vunpack.c.l.b16 %v1485
    %v1624 = vunpack.c.l.b16 %v1486
    %v1625 = vunpack.c.l.b16 %v1487
    %v1626 = vunpack.c.l.b16 %v1488
    %v1627 = vunpack.c.l.b16 %v1489
    %v1628 = vunpack.c.l.b16 %v1490
    %v1629 = vpack.c.b16 %v1614, %v1613
    %v1630 = vpack.c.b16 %v1616, %v1615
    %v1631 = vpack.c.b16 %v1618, %v1617
    %v1632 = vpack.c.b16 %v1620, %v1619
    %v1633 = vpack.c.b16 %v1622, %v1621
    %v1634 = vpack.c.b16 %v1624, %v1623
    %v1635 = vpack.c.b16 %v1626, %v1625
    %v1636 = vpack.c.b16 %v1628, %v1627
    %1645 = vmatprep.subr.bf16.mxu0 0
    %1646 = vmatpush1.bf16.msra.mxu0 %v1629
    %1647 = vmatprep.subr.bf16.mxu0 0
    %1648 = vmatpush1.bf16.msra.mxu0 %v1630
    %1649 = vmatprep.subr.bf16.mxu0 0
    %1650 = vmatpush1.bf16.msra.mxu0 %v1631
    %1651 = vmatprep.subr.bf16.mxu0 0
    %1652 = vmatpush1.bf16.msra.mxu0 %v1632
    %1653 = vmatprep.subr.bf16.mxu0 0
    %1654 = vmatpush1.bf16.msra.mxu0 %v1633
    %1655 = vmatprep.subr.bf16.mxu0 0
    %1656 = vmatpush1.bf16.msra.mxu0 %v1634
    %1657 = vmatprep.subr.bf16.mxu0 0
    %1658 = vmatpush1.bf16.msra.mxu0 %v1635
    %1659 = vmatprep.subr.bf16.mxu0 0
    %1660 = vmatpush1.bf16.msra.mxu0 %v1636
    %1661 = vmatprep.subr.bf16.mxu0 0
    %1662 = vmatpush1.bf16.msra.mxu0 0
    %1663 = vmatprep.subr.bf16.mxu0 0
    %1664 = vmatpush1.bf16.msra.mxu0 0
    %1665 = vmatprep.subr.bf16.mxu0 0
    %1666 = vmatpush1.bf16.msra.mxu0 0
    %1667 = vmatprep.subr.bf16.mxu0 0
    %1668 = vmatpush1.bf16.msra.mxu0 0
    %1669 = vmatprep.subr.bf16.mxu0 0
    %1670 = vmatpush1.bf16.msra.mxu0 0
    %1671 = vmatprep.subr.bf16.mxu0 0
    %1672 = vmatpush1.bf16.msra.mxu0 0
    %1673 = vmatprep.subr.bf16.mxu0 0
    %1674 = vmatpush1.bf16.msra.mxu0 0
    %1675 = vmatprep.subr.bf16.mxu0 0
    %1676 = vmatpush1.bf16.msra.mxu0 0
    %1677 = vmatprep.mubr.bf16.mxu0 0
    %1678 = vmatmul.mubr.bf16.gmra.mrb[0].mxu0 %v1474
    %v1679 = vpop.f32.mrb[0].mxu0
    %v1680 = vadd.f32 %v1592, %v1679
    %v1681 = vpop.f32.mrb[0].mxu0
    %v1682 = vpop.f32.mrb[0].mxu0
    %v1683 = vpop.f32.mrb[0].mxu0
    %1684 = vdwg.mxu0
    %v1685 = vadd.f32 %v1680, %v47
    %v1686 = vtanh.pop %v1685
    %1687 = vst [vmem:[#allocation2] sm:$0x3] %v1473
    %1688 = vst [vmem:[#allocation3] sm:$0x3] %v1686
    %v1689 = vpack.c.bf16 %v1686, %v1686
    %s1690 = scalar_lea.vmem %s5, 4
    %1691 = vst [vmem:[%s1690] sm:$0x1] %v1689
    %s1692 = scalar_lea.vmem %s0, 5
    %v1693 = vld [vmem:[%s1692] sm:$0x1]
    %v1694 = vunpack.c.l.bf16 %v1693
    %v1695 = vld [vmem:[#allocation2] sm:$0x3]
    %v1696 = vpack.c.bf16 %v1695, %v1695
    %v1697 = vld [vmem:[%s1] sm:$0xf]
    %v1698 = vld [vmem:[%s1 + $0x4] sm:$0xf]
    %v1699 = vld [vmem:[%s1 + $0x8] sm:$0xf]
    %v1700 = vld [vmem:[%s1 + $0xc] sm:$0xf]
    %v1701 = vld [vmem:[%s1 + $0x10] sm:$0xf]
    %v1702 = vld [vmem:[%s1 + $0x14] sm:$0xf]
    %v1703 = vld [vmem:[%s1 + $0x18] sm:$0xf]
    %v1704 = vld [vmem:[%s1 + $0x1c] sm:$0xf]
    %v1705 = vld [vmem:[%s1 + $0x20] sm:$0xf]
    %v1706 = vld [vmem:[%s1 + $0x24] sm:$0xf]
    %v1707 = vld [vmem:[%s1 + $0x28] sm:$0xf]
    %v1708 = vld [vmem:[%s1 + $0x2c] sm:$0xf]
    %v1709 = vld [vmem:[%s1 + $0x30] sm:$0xf]
    %v1710 = vld [vmem:[%s1 + $0x34] sm:$0xf]
    %v1711 = vld [vmem:[%s1 + $0x38] sm:$0xf]
    %v1712 = vld [vmem:[%s1 + $0x3c] sm:$0xf]
    %v1729 = vunpack.c.l.b16 %v1697
    %v1730 = vunpack.c.l.b16 %v1698
    %v1731 = vunpack.c.l.b16 %v1699
    %v1732 = vunpack.c.l.b16 %v1700
    %v1733 = vunpack.c.l.b16 %v1701
    %v1734 = vunpack.c.l.b16 %v1702
    %v1735 = vunpack.c.l.b16 %v1703
    %v1736 = vunpack.c.l.b16 %v1704
    %v1737 = vunpack.c.l.b16 %v1705
    %v1738 = vunpack.c.l.b16 %v1706
    %v1739 = vunpack.c.l.b16 %v1707
    %v1740 = vunpack.c.l.b16 %v1708
    %v1741 = vunpack.c.l.b16 %v1709
    %v1742 = vunpack.c.l.b16 %v1710
    %v1743 = vunpack.c.l.b16 %v1711
    %v1744 = vunpack.c.l.b16 %v1712
    %v1745 = vpack.c.b16 %v1730, %v1729
    %v1746 = vpack.c.b16 %v1732, %v1731
    %v1747 = vpack.c.b16 %v1734, %v1733
    %v1748 = vpack.c.b16 %v1736, %v1735
    %v1749 = vpack.c.b16 %v1738, %v1737
    %v1750 = vpack.c.b16 %v1740, %v1739
    %v1751 = vpack.c.b16 %v1742, %v1741
    %v1752 = vpack.c.b16 %v1744, %v1743
    %1761 = vmatprep.subr.bf16.mxu0 0
    %1762 = vmatpush1.bf16.msra.mxu0 %v1745
    %1763 = vmatprep.subr.bf16.mxu0 0
    %1764 = vmatpush1.bf16.msra.mxu0 %v1746
    %1765 = vmatprep.subr.bf16.mxu0 0
    %1766 = vmatpush1.bf16.msra.mxu0 %v1747
    %1767 = vmatprep.subr.bf16.mxu0 0
    %1768 = vmatpush1.bf16.msra.mxu0 %v1748
    %1769 = vmatprep.subr.bf16.mxu0 0
    %1770 = vmatpush1.bf16.msra.mxu0 %v1749
    %1771 = vmatprep.subr.bf16.mxu0 0
    %1772 = vmatpush1.bf16.msra.mxu0 %v1750
    %1773 = vmatprep.subr.bf16.mxu0 0
    %1774 = vmatpush1.bf16.msra.mxu0 %v1751
    %1775 = vmatprep.subr.bf16.mxu0 0
    %1776 = vmatpush1.bf16.msra.mxu0 %v1752
    %1777 = vmatprep.subr.bf16.mxu0 0
    %1778 = vmatpush1.bf16.msra.mxu0 0
    %1779 = vmatprep.subr.bf16.mxu0 0
    %1780 = vmatpush1.bf16.msra.mxu0 0
    %1781 = vmatprep.subr.bf16.mxu0 0
    %1782 = vmatpush1.bf16.msra.mxu0 0
    %1783 = vmatprep.subr.bf16.mxu0 0
    %1784 = vmatpush1.bf16.msra.mxu0 0
    %1785 = vmatprep.subr.bf16.mxu0 0
    %1786 = vmatpush1.bf16.msra.mxu0 0
    %1787 = vmatprep.subr.bf16.mxu0 0
    %1788 = vmatpush1.bf16.msra.mxu0 0
    %1789 = vmatprep.subr.bf16.mxu0 0
    %1790 = vmatpush1.bf16.msra.mxu0 0
    %1791 = vmatprep.subr.bf16.mxu0 0
    %1792 = vmatpush1.bf16.msra.mxu0 0
    %1793 = vmatprep.mubr.bf16.mxu0 0
    %1794 = vmatmul.mubr.bf16.gmra.mrb[0].mxu0 %v1696
    %v1795 = vpop.f32.mrb[0].mxu0
    %v1796 = vadd.f32 0.0, %v1795
    %v1797 = vpop.f32.mrb[0].mxu0
    %v1798 = vpop.f32.mrb[0].mxu0
    %v1799 = vpop.f32.mrb[0].mxu0
    %1800 = vdwg.mxu0
    %v1801 = vadd.f32 %v1694, %v1796
    %v1802 = vtanh.pop %v1801
    %v1803 = vpack.c.bf16 %v1802, %v1802
    %v1804 = vld [vmem:[%s2] sm:$0xf]
    %v1805 = vld [vmem:[%s2 + $0x4] sm:$0xf]
    %v1806 = vld [vmem:[%s2 + $0x8] sm:$0xf]
    %v1807 = vld [vmem:[%s2 + $0xc] sm:$0xf]
    %v1808 = vld [vmem:[%s2 + $0x10] sm:$0xf]
    %v1809 = vld [vmem:[%s2 + $0x14] sm:$0xf]
    %v1810 = vld [vmem:[%s2 + $0x18] sm:$0xf]
    %v1811 = vld [vmem:[%s2 + $0x1c] sm:$0xf]
    %v1812 = vld [vmem:[%s2 + $0x20] sm:$0xf]
    %v1813 = vld [vmem:[%s2 + $0x24] sm:$0xf]
    %v1814 = vld [vmem:[%s2 + $0x28] sm:$0xf]
    %v1815 = vld [vmem:[%s2 + $0x2c] sm:$0xf]
    %v1816 = vld [vmem:[%s2 + $0x30] sm:$0xf]
    %v1817 = vld [vmem:[%s2 + $0x34] sm:$0xf]
    %v1818 = vld [vmem:[%s2 + $0x38] sm:$0xf]
    %v1819 = vld [vmem:[%s2 + $0x3c] sm:$0xf]
    %v1820 = vld [vmem:[#allocation3] sm:$0x3]
    %v1821 = vpack.c.bf16 %v1820, %v1820
    %v1822 = vld [vmem:[%s3] sm:$0xf]
    %v1823 = vld [vmem:[%s3 + $0x4] sm:$0xf]
    %v1824 = vld [vmem:[%s3 + $0x8] sm:$0xf]
    %v1825 = vld [vmem:[%s3 + $0xc] sm:$0xf]
    %v1826 = vld [vmem:[%s3 + $0x10] sm:$0xf]
    %v1827 = vld [vmem:[%s3 + $0x14] sm:$0xf]
    %v1828 = vld [vmem:[%s3 + $0x18] sm:$0xf]
    %v1829 = vld [vmem:[%s3 + $0x1c] sm:$0xf]
    %v1830 = vld [vmem:[%s3 + $0x20] sm:$0xf]
    %v1831 = vld [vmem:[%s3 + $0x24] sm:$0xf]
    %v1832 = vld [vmem:[%s3 + $0x28] sm:$0xf]
    %v1833 = vld [vmem:[%s3 + $0x2c] sm:$0xf]
    %v1834 = vld [vmem:[%s3 + $0x30] sm:$0xf]
    %v1835 = vld [vmem:[%s3 + $0x34] sm:$0xf]
    %v1836 = vld [vmem:[%s3 + $0x38] sm:$0xf]
    %v1837 = vld [vmem:[%s3 + $0x3c] sm:$0xf]
    %v1854 = vunpack.c.l.b16 %v1822
    %v1855 = vunpack.c.l.b16 %v1823
    %v1856 = vunpack.c.l.b16 %v1824
    %v1857 = vunpack.c.l.b16 %v1825
    %v1858 = vunpack.c.l.b16 %v1826
    %v1859 = vunpack.c.l.b16 %v1827
    %v1860 = vunpack.c.l.b16 %v1828
    %v1861 = vunpack.c.l.b16 %v1829
    %v1862 = vunpack.c.l.b16 %v1830
    %v1863 = vunpack.c.l.b16 %v1831
    %v1864 = vunpack.c.l.b16 %v1832
    %v1865 = vunpack.c.l.b16 %v1833
    %v1866 = vunpack.c.l.b16 %v1834
    %v1867 = vunpack.c.l.b16 %v1835
    %v1868 = vunpack.c.l.b16 %v1836
    %v1869 = vunpack.c.l.b16 %v1837
    %v1870 = vpack.c.b16 %v1855, %v1854
    %v1871 = vpack.c.b16 %v1857, %v1856
    %v1872 = vpack.c.b16 %v1859, %v1858
    %v1873 = vpack.c.b16 %v1861, %v1860
    %v1874 = vpack.c.b16 %v1863, %v1862
    %v1875 = vpack.c.b16 %v1865, %v1864
    %v1876 = vpack.c.b16 %v1867, %v1866
    %v1877 = vpack.c.b16 %v1869, %v1868
    %1886 = vmatprep.subr.bf16.mxu0 0
    %1887 = vmatpush1.bf16.msra.mxu0 %v1870
    %1888 = vmatprep.subr.bf16.mxu0 0
    %1889 = vmatpush1.bf16.msra.mxu0 %v1871
    %1890 = vmatprep.subr.bf16.mxu0 0
    %1891 = vmatpush1.bf16.msra.mxu0 %v1872
    %1892 = vmatprep.subr.bf16.mxu0 0
    %1893 = vmatpush1.bf16.msra.mxu0 %v1873
    %1894 = vmatprep.subr.bf16.mxu0 0
    %1895 = vmatpush1.bf16.msra.mxu0 %v1874
    %1896 = vmatprep.subr.bf16.mxu0 0
    %1897 = vmatpush1.bf16.msra.mxu0 %v1875
    %1898 = vmatprep.subr.bf16.mxu0 0
    %1899 = vmatpush1.bf16.msra.mxu0 %v1876
    %1900 = vmatprep.subr.bf16.mxu0 0
    %1901 = vmatpush1.bf16.msra.mxu0 %v1877
    %1902 = vmatprep.subr.bf16.mxu0 0
    %1903 = vmatpush1.bf16.msra.mxu0 0
    %1904 = vmatprep.subr.bf16.mxu0 0
    %1905 = vmatpush1.bf16.msra.mxu0 0
    %1906 = vmatprep.subr.bf16.mxu0 0
    %1907 = vmatpush1.bf16.msra.mxu0 0
    %1908 = vmatprep.subr.bf16.mxu0 0
    %1909 = vmatpush1.bf16.msra.mxu0 0
    %1910 = vmatprep.subr.bf16.mxu0 0
    %1911 = vmatpush1.bf16.msra.mxu0 0
    %1912 = vmatprep.subr.bf16.mxu0 0
    %1913 = vmatpush1.bf16.msra.mxu0 0
    %1914 = vmatprep.subr.bf16.mxu0 0
    %1915 = vmatpush1.bf16.msra.mxu0 0
    %1916 = vmatprep.subr.bf16.mxu0 0
    %1917 = vmatpush1.bf16.msra.mxu0 0
    %1918 = vmatprep.mubr.bf16.mxu0 0
    %1919 = vmatmul.mubr.bf16.gmra.mrb[0].mxu0 %v1821
    %v1920 = vpop.f32.mrb[0].mxu0
    %v1921 = vadd.f32 0.0, %v1920
    %v1922 = vpop.f32.mrb[0].mxu0
    %v1923 = vpop.f32.mrb[0].mxu0
    %v1924 = vpop.f32.mrb[0].mxu0
    %1925 = vdwg.mxu0
    %v1942 = vunpack.c.l.b16 %v1804
    %v1943 = vunpack.c.l.b16 %v1805
    %v1944 = vunpack.c.l.b16 %v1806
    %v1945 = vunpack.c.l.b16 %v1807
    %v1946 = vunpack.c.l.b16 %v1808
    %v1947 = vunpack.c.l.b16 %v1809
    %v1948 = vunpack.c.l.b16 %v1810
    %v1949 = vunpack.c.l.b16 %v1811
    %v1950 = vunpack.c.l.b16 %v1812
    %v1951 = vunpack.c.l.b16 %v1813
    %v1952 = vunpack.c.l.b16 %v1814
    %v1953 = vunpack.c.l.b16 %v1815
    %v1954 = vunpack.c.l.b16 %v1816
    %v1955 = vunpack.c.l.b16 %v1817
    %v1956 = vunpack.c.l.b16 %v1818
    %v1957 = vunpack.c.l.b16 %v1819
    %v1958 = vpack.c.b16 %v1943, %v1942
    %v1959 = vpack.c.b16 %v1945, %v1944
    %v1960 = vpack.c.b16 %v1947, %v1946
    %v1961 = vpack.c.b16 %v1949, %v1948
    %v1962 = vpack.c.b16 %v1951, %v1950
    %v1963 = vpack.c.b16 %v1953, %v1952
    %v1964 = vpack.c.b16 %v1955, %v1954
    %v1965 = vpack.c.b16 %v1957, %v1956
    %1974 = vmatprep.subr.bf16.mxu0 0
    %1975 = vmatpush1.bf16.msra.mxu0 %v1958
    %1976 = vmatprep.subr.bf16.mxu0 0
    %1977 = vmatpush1.bf16.msra.mxu0 %v1959
    %1978 = vmatprep.subr.bf16.mxu0 0
    %1979 = vmatpush1.bf16.msra.mxu0 %v1960
    %1980 = vmatprep.subr.bf16.mxu0 0
    %1981 = vmatpush1.bf16.msra.mxu0 %v1961
    %1982 = vmatprep.subr.bf16.mxu0 0
    %1983 = vmatpush1.bf16.msra.mxu0 %v1962
    %1984 = vmatprep.subr.bf16.mxu0 0
    %1985 = vmatpush1.bf16.msra.mxu0 %v1963
    %1986 = vmatprep.subr.bf16.mxu0 0
    %1987 = vmatpush1.bf16.msra.mxu0 %v1964
    %1988 = vmatprep.subr.bf16.mxu0 0
    %1989 = vmatpush1.bf16.msra.mxu0 %v1965
    %1990 = vmatprep.subr.bf16.mxu0 0
    %1991 = vmatpush1.bf16.msra.mxu0 0
    %1992 = vmatprep.subr.bf16.mxu0 0
    %1993 = vmatpush1.bf16.msra.mxu0 0
    %1994 = vmatprep.subr.bf16.mxu0 0
    %1995 = vmatpush1.bf16.msra.mxu0 0
    %1996 = vmatprep.subr.bf16.mxu0 0
    %1997 = vmatpush1.bf16.msra.mxu0 0
    %1998 = vmatprep.subr.bf16.mxu0 0
    %1999 = vmatpush1.bf16.msra.mxu0 0
    %2000 = vmatprep.subr.bf16.mxu0 0
    %2001 = vmatpush1.bf16.msra.mxu0 0
    %2002 = vmatprep.subr.bf16.mxu0 0
    %2003 = vmatpush1.bf16.msra.mxu0 0
    %2004 = vmatprep.subr.bf16.mxu0 0
    %2005 = vmatpush1.bf16.msra.mxu0 0
    %2006 = vmatprep.mubr.bf16.mxu0 0
    %2007 = vmatmul.mubr.bf16.gmra.mrb[0].mxu0 %v1803
    %v2008 = vpop.f32.mrb[0].mxu0
    %v2009 = vadd.f32 %v1921, %v2008
    %v2010 = vpop.f32.mrb[0].mxu0
    %v2011 = vpop.f32.mrb[0].mxu0
    %v2012 = vpop.f32.mrb[0].mxu0
    %2013 = vdwg.mxu0
    %v2014 = vadd.f32 %v2009, %v47
    %v2015 = vtanh.pop %v2014
    %2016 = vst [vmem:[#allocation2] sm:$0x3] %v1802
    %2017 = vst [vmem:[#allocation3] sm:$0x3] %v2015
    %v2018 = vpack.c.bf16 %v2015, %v2015
    %s2019 = scalar_lea.vmem %s5, 5
    %2020 = vst [vmem:[%s2019] sm:$0x1] %v2018
    %s2021 = scalar_lea.vmem %s0, 6
    %v2022 = vld [vmem:[%s2021] sm:$0x1]
    %v2023 = vunpack.c.l.bf16 %v2022
    %v2024 = vld [vmem:[#allocation2] sm:$0x3]
    %v2025 = vpack.c.bf16 %v2024, %v2024
    %v2026 = vld [vmem:[%s1] sm:$0xf]
    %v2027 = vld [vmem:[%s1 + $0x4] sm:$0xf]
    %v2028 = vld [vmem:[%s1 + $0x8] sm:$0xf]
    %v2029 = vld [vmem:[%s1 + $0xc] sm:$0xf]
    %v2030 = vld [vmem:[%s1 + $0x10] sm:$0xf]
    %v2031 = vld [vmem:[%s1 + $0x14] sm:$0xf]
    %v2032 = vld [vmem:[%s1 + $0x18] sm:$0xf]
    %v2033 = vld [vmem:[%s1 + $0x1c] sm:$0xf]
    %v2034 = vld [vmem:[%s1 + $0x20] sm:$0xf]
    %v2035 = vld [vmem:[%s1 + $0x24] sm:$0xf]
    %v2036 = vld [vmem:[%s1 + $0x28] sm:$0xf]
    %v2037 = vld [vmem:[%s1 + $0x2c] sm:$0xf]
    %v2038 = vld [vmem:[%s1 + $0x30] sm:$0xf]
    %v2039 = vld [vmem:[%s1 + $0x34] sm:$0xf]
    %v2040 = vld [vmem:[%s1 + $0x38] sm:$0xf]
    %v2041 = vld [vmem:[%s1 + $0x3c] sm:$0xf]
    %v2058 = vunpack.c.l.b16 %v2026
    %v2059 = vunpack.c.l.b16 %v2027
    %v2060 = vunpack.c.l.b16 %v2028
    %v2061 = vunpack.c.l.b16 %v2029
    %v2062 = vunpack.c.l.b16 %v2030
    %v2063 = vunpack.c.l.b16 %v2031
    %v2064 = vunpack.c.l.b16 %v2032
    %v2065 = vunpack.c.l.b16 %v2033
    %v2066 = vunpack.c.l.b16 %v2034
    %v2067 = vunpack.c.l.b16 %v2035
    %v2068 = vunpack.c.l.b16 %v2036
    %v2069 = vunpack.c.l.b16 %v2037
    %v2070 = vunpack.c.l.b16 %v2038
    %v2071 = vunpack.c.l.b16 %v2039
    %v2072 = vunpack.c.l.b16 %v2040
    %v2073 = vunpack.c.l.b16 %v2041
    %v2074 = vpack.c.b16 %v2059, %v2058
    %v2075 = vpack.c.b16 %v2061, %v2060
    %v2076 = vpack.c.b16 %v2063, %v2062
    %v2077 = vpack.c.b16 %v2065, %v2064
    %v2078 = vpack.c.b16 %v2067, %v2066
    %v2079 = vpack.c.b16 %v2069, %v2068
    %v2080 = vpack.c.b16 %v2071, %v2070
    %v2081 = vpack.c.b16 %v2073, %v2072
    %2090 = vmatprep.subr.bf16.mxu0 0
    %2091 = vmatpush1.bf16.msra.mxu0 %v2074
    %2092 = vmatprep.subr.bf16.mxu0 0
    %2093 = vmatpush1.bf16.msra.mxu0 %v2075
    %2094 = vmatprep.subr.bf16.mxu0 0
    %2095 = vmatpush1.bf16.msra.mxu0 %v2076
    %2096 = vmatprep.subr.bf16.mxu0 0
    %2097 = vmatpush1.bf16.msra.mxu0 %v2077
    %2098 = vmatprep.subr.bf16.mxu0 0
    %2099 = vmatpush1.bf16.msra.mxu0 %v2078
    %2100 = vmatprep.subr.bf16.mxu0 0
    %2101 = vmatpush1.bf16.msra.mxu0 %v2079
    %2102 = vmatprep.subr.bf16.mxu0 0
    %2103 = vmatpush1.bf16.msra.mxu0 %v2080
    %2104 = vmatprep.subr.bf16.mxu0 0
    %2105 = vmatpush1.bf16.msra.mxu0 %v2081
    %2106 = vmatprep.subr.bf16.mxu0 0
    %2107 = vmatpush1.bf16.msra.mxu0 0
    %2108 = vmatprep.subr.bf16.mxu0 0
    %2109 = vmatpush1.bf16.msra.mxu0 0
    %2110 = vmatprep.subr.bf16.mxu0 0
    %2111 = vmatpush1.bf16.msra.mxu0 0
    %2112 = vmatprep.subr.bf16.mxu0 0
    %2113 = vmatpush1.bf16.msra.mxu0 0
    %2114 = vmatprep.subr.bf16.mxu0 0
    %2115 = vmatpush1.bf16.msra.mxu0 0
    %2116 = vmatprep.subr.bf16.mxu0 0
    %2117 = vmatpush1.bf16.msra.mxu0 0
    %2118 = vmatprep.subr.bf16.mxu0 0
    %2119 = vmatpush1.bf16.msra.mxu0 0
    %2120 = vmatprep.subr.bf16.mxu0 0
    %2121 = vmatpush1.bf16.msra.mxu0 0
    %2122 = vmatprep.mubr.bf16.mxu0 0
    %2123 = vmatmul.mubr.bf16.gmra.mrb[0].mxu0 %v2025
    %v2124 = vpop.f32.mrb[0].mxu0
    %v2125 = vadd.f32 0.0, %v2124
    %v2126 = vpop.f32.mrb[0].mxu0
    %v2127 = vpop.f32.mrb[0].mxu0
    %v2128 = vpop.f32.mrb[0].mxu0
    %2129 = vdwg.mxu0
    %v2130 = vadd.f32 %v2023, %v2125
    %v2131 = vtanh.pop %v2130
    %v2132 = vpack.c.bf16 %v2131, %v2131
    %v2133 = vld [vmem:[%s2] sm:$0xf]
    %v2134 = vld [vmem:[%s2 + $0x4] sm:$0xf]
    %v2135 = vld [vmem:[%s2 + $0x8] sm:$0xf]
    %v2136 = vld [vmem:[%s2 + $0xc] sm:$0xf]
    %v2137 = vld [vmem:[%s2 + $0x10] sm:$0xf]
    %v2138 = vld [vmem:[%s2 + $0x14] sm:$0xf]
    %v2139 = vld [vmem:[%s2 + $0x18] sm:$0xf]
    %v2140 = vld [vmem:[%s2 + $0x1c] sm:$0xf]
    %v2141 = vld [vmem:[%s2 + $0x20] sm:$0xf]
    %v2142 = vld [vmem:[%s2 + $0x24] sm:$0xf]
    %v2143 = vld [vmem:[%s2 + $0x28] sm:$0xf]
    %v2144 = vld [vmem:[%s2 + $0x2c] sm:$0xf]
    %v2145 = vld [vmem:[%s2 + $0x30] sm:$0xf]
    %v2146 = vld [vmem:[%s2 + $0x34] sm:$0xf]
    %v2147 = vld [vmem:[%s2 + $0x38] sm:$0xf]
    %v2148 = vld [vmem:[%s2 + $0x3c] sm:$0xf]
    %v2149 = vld [vmem:[#allocation3] sm:$0x3]
    %v2150 = vpack.c.bf16 %v2149, %v2149
    %v2151 = vld [vmem:[%s3] sm:$0xf]
    %v2152 = vld [vmem:[%s3 + $0x4] sm:$0xf]
    %v2153 = vld [vmem:[%s3 + $0x8] sm:$0xf]
    %v2154 = vld [vmem:[%s3 + $0xc] sm:$0xf]
    %v2155 = vld [vmem:[%s3 + $0x10] sm:$0xf]
    %v2156 = vld [vmem:[%s3 + $0x14] sm:$0xf]
    %v2157 = vld [vmem:[%s3 + $0x18] sm:$0xf]
    %v2158 = vld [vmem:[%s3 + $0x1c] sm:$0xf]
    %v2159 = vld [vmem:[%s3 + $0x20] sm:$0xf]
    %v2160 = vld [vmem:[%s3 + $0x24] sm:$0xf]
    %v2161 = vld [vmem:[%s3 + $0x28] sm:$0xf]
    %v2162 = vld [vmem:[%s3 + $0x2c] sm:$0xf]
    %v2163 = vld [vmem:[%s3 + $0x30] sm:$0xf]
    %v2164 = vld [vmem:[%s3 + $0x34] sm:$0xf]
    %v2165 = vld [vmem:[%s3 + $0x38] sm:$0xf]
    %v2166 = vld [vmem:[%s3 + $0x3c] sm:$0xf]
    %v2183 = vunpack.c.l.b16 %v2151
    %v2184 = vunpack.c.l.b16 %v2152
    %v2185 = vunpack.c.l.b16 %v2153
    %v2186 = vunpack.c.l.b16 %v2154
    %v2187 = vunpack.c.l.b16 %v2155
    %v2188 = vunpack.c.l.b16 %v2156
    %v2189 = vunpack.c.l.b16 %v2157
    %v2190 = vunpack.c.l.b16 %v2158
    %v2191 = vunpack.c.l.b16 %v2159
    %v2192 = vunpack.c.l.b16 %v2160
    %v2193 = vunpack.c.l.b16 %v2161
    %v2194 = vunpack.c.l.b16 %v2162
    %v2195 = vunpack.c.l.b16 %v2163
    %v2196 = vunpack.c.l.b16 %v2164
    %v2197 = vunpack.c.l.b16 %v2165
    %v2198 = vunpack.c.l.b16 %v2166
    %v2199 = vpack.c.b16 %v2184, %v2183
    %v2200 = vpack.c.b16 %v2186, %v2185
    %v2201 = vpack.c.b16 %v2188, %v2187
    %v2202 = vpack.c.b16 %v2190, %v2189
    %v2203 = vpack.c.b16 %v2192, %v2191
    %v2204 = vpack.c.b16 %v2194, %v2193
    %v2205 = vpack.c.b16 %v2196, %v2195
    %v2206 = vpack.c.b16 %v2198, %v2197
    %2215 = vmatprep.subr.bf16.mxu0 0
    %2216 = vmatpush1.bf16.msra.mxu0 %v2199
    %2217 = vmatprep.subr.bf16.mxu0 0
    %2218 = vmatpush1.bf16.msra.mxu0 %v2200
    %2219 = vmatprep.subr.bf16.mxu0 0
    %2220 = vmatpush1.bf16.msra.mxu0 %v2201
    %2221 = vmatprep.subr.bf16.mxu0 0
    %2222 = vmatpush1.bf16.msra.mxu0 %v2202
    %2223 = vmatprep.subr.bf16.mxu0 0
    %2224 = vmatpush1.bf16.msra.mxu0 %v2203
    %2225 = vmatprep.subr.bf16.mxu0 0
    %2226 = vmatpush1.bf16.msra.mxu0 %v2204
    %2227 = vmatprep.subr.bf16.mxu0 0
    %2228 = vmatpush1.bf16.msra.mxu0 %v2205
    %2229 = vmatprep.subr.bf16.mxu0 0
    %2230 = vmatpush1.bf16.msra.mxu0 %v2206
    %2231 = vmatprep.subr.bf16.mxu0 0
    %2232 = vmatpush1.bf16.msra.mxu0 0
    %2233 = vmatprep.subr.bf16.mxu0 0
    %2234 = vmatpush1.bf16.msra.mxu0 0
    %2235 = vmatprep.subr.bf16.mxu0 0
    %2236 = vmatpush1.bf16.msra.mxu0 0
    %2237 = vmatprep.subr.bf16.mxu0 0
    %2238 = vmatpush1.bf16.msra.mxu0 0
    %2239 = vmatprep.subr.bf16.mxu0 0
    %2240 = vmatpush1.bf16.msra.mxu0 0
    %2241 = vmatprep.subr.bf16.mxu0 0
    %2242 = vmatpush1.bf16.msra.mxu0 0
    %2243 = vmatprep.subr.bf16.mxu0 0
    %2244 = vmatpush1.bf16.msra.mxu0 0
    %2245 = vmatprep.subr.bf16.mxu0 0
    %2246 = vmatpush1.bf16.msra.mxu0 0
    %2247 = vmatprep.mubr.bf16.mxu0 0
    %2248 = vmatmul.mubr.bf16.gmra.mrb[0].mxu0 %v2150
    %v2249 = vpop.f32.mrb[0].mxu0
    %v2250 = vadd.f32 0.0, %v2249
    %v2251 = vpop.f32.mrb[0].mxu0
    %v2252 = vpop.f32.mrb[0].mxu0
    %v2253 = vpop.f32.mrb[0].mxu0
    %2254 = vdwg.mxu0
    %v2271 = vunpack.c.l.b16 %v2133
    %v2272 = vunpack.c.l.b16 %v2134
    %v2273 = vunpack.c.l.b16 %v2135
    %v2274 = vunpack.c.l.b16 %v2136
    %v2275 = vunpack.c.l.b16 %v2137
    %v2276 = vunpack.c.l.b16 %v2138
    %v2277 = vunpack.c.l.b16 %v2139
    %v2278 = vunpack.c.l.b16 %v2140
    %v2279 = vunpack.c.l.b16 %v2141
    %v2280 = vunpack.c.l.b16 %v2142
    %v2281 = vunpack.c.l.b16 %v2143
    %v2282 = vunpack.c.l.b16 %v2144
    %v2283 = vunpack.c.l.b16 %v2145
    %v2284 = vunpack.c.l.b16 %v2146
    %v2285 = vunpack.c.l.b16 %v2147
    %v2286 = vunpack.c.l.b16 %v2148
    %v2287 = vpack.c.b16 %v2272, %v2271
    %v2288 = vpack.c.b16 %v2274, %v2273
    %v2289 = vpack.c.b16 %v2276, %v2275
    %v2290 = vpack.c.b16 %v2278, %v2277
    %v2291 = vpack.c.b16 %v2280, %v2279
    %v2292 = vpack.c.b16 %v2282, %v2281
    %v2293 = vpack.c.b16 %v2284, %v2283
    %v2294 = vpack.c.b16 %v2286, %v2285
    %2303 = vmatprep.subr.bf16.mxu0 0
    %2304 = vmatpush1.bf16.msra.mxu0 %v2287
    %2305 = vmatprep.subr.bf16.mxu0 0
    %2306 = vmatpush1.bf16.msra.mxu0 %v2288
    %2307 = vmatprep.subr.bf16.mxu0 0
    %2308 = vmatpush1.bf16.msra.mxu0 %v2289
    %2309 = vmatprep.subr.bf16.mxu0 0
    %2310 = vmatpush1.bf16.msra.mxu0 %v2290
    %2311 = vmatprep.subr.bf16.mxu0 0
    %2312 = vmatpush1.bf16.msra.mxu0 %v2291
    %2313 = vmatprep.subr.bf16.mxu0 0
    %2314 = vmatpush1.bf16.msra.mxu0 %v2292
    %2315 = vmatprep.subr.bf16.mxu0 0
    %2316 = vmatpush1.bf16.msra.mxu0 %v2293
    %2317 = vmatprep.subr.bf16.mxu0 0
    %2318 = vmatpush1.bf16.msra.mxu0 %v2294
    %2319 = vmatprep.subr.bf16.mxu0 0
    %2320 = vmatpush1.bf16.msra.mxu0 0
    %2321 = vmatprep.subr.bf16.mxu0 0
    %2322 = vmatpush1.bf16.msra.mxu0 0
    %2323 = vmatprep.subr.bf16.mxu0 0
    %2324 = vmatpush1.bf16.msra.mxu0 0
    %2325 = vmatprep.subr.bf16.mxu0 0
    %2326 = vmatpush1.bf16.msra.mxu0 0
    %2327 = vmatprep.subr.bf16.mxu0 0
    %2328 = vmatpush1.bf16.msra.mxu0 0
    %2329 = vmatprep.subr.bf16.mxu0 0
    %2330 = vmatpush1.bf16.msra.mxu0 0
    %2331 = vmatprep.subr.bf16.mxu0 0
    %2332 = vmatpush1.bf16.msra.mxu0 0
    %2333 = vmatprep.subr.bf16.mxu0 0
    %2334 = vmatpush1.bf16.msra.mxu0 0
    %2335 = vmatprep.mubr.bf16.mxu0 0
    %2336 = vmatmul.mubr.bf16.gmra.mrb[0].mxu0 %v2132
    %v2337 = vpop.f32.mrb[0].mxu0
    %v2338 = vadd.f32 %v2250, %v2337
    %v2339 = vpop.f32.mrb[0].mxu0
    %v2340 = vpop.f32.mrb[0].mxu0
    %v2341 = vpop.f32.mrb[0].mxu0
    %2342 = vdwg.mxu0
    %v2343 = vadd.f32 %v2338, %v47
    %v2344 = vtanh.pop %v2343
    %2345 = vst [vmem:[#allocation2] sm:$0x3] %v2131
    %2346 = vst [vmem:[#allocation3] sm:$0x3] %v2344
    %v2347 = vpack.c.bf16 %v2344, %v2344
    %s2348 = scalar_lea.vmem %s5, 6
    %2349 = vst [vmem:[%s2348] sm:$0x1] %v2347
    %s2350 = scalar_lea.vmem %s0, 7
    %v2351 = vld [vmem:[%s2350] sm:$0x1]
    %v2352 = vunpack.c.l.bf16 %v2351
    %v2353 = vld [vmem:[#allocation2] sm:$0x3]
    %v2354 = vpack.c.bf16 %v2353, %v2353
    %v2355 = vld [vmem:[%s1] sm:$0xf]
    %v2356 = vld [vmem:[%s1 + $0x4] sm:$0xf]
    %v2357 = vld [vmem:[%s1 + $0x8] sm:$0xf]
    %v2358 = vld [vmem:[%s1 + $0xc] sm:$0xf]
    %v2359 = vld [vmem:[%s1 + $0x10] sm:$0xf]
    %v2360 = vld [vmem:[%s1 + $0x14] sm:$0xf]
    %v2361 = vld [vmem:[%s1 + $0x18] sm:$0xf]
    %v2362 = vld [vmem:[%s1 + $0x1c] sm:$0xf]
    %v2363 = vld [vmem:[%s1 + $0x20] sm:$0xf]
    %v2364 = vld [vmem:[%s1 + $0x24] sm:$0xf]
    %v2365 = vld [vmem:[%s1 + $0x28] sm:$0xf]
    %v2366 = vld [vmem:[%s1 + $0x2c] sm:$0xf]
    %v2367 = vld [vmem:[%s1 + $0x30] sm:$0xf]
    %v2368 = vld [vmem:[%s1 + $0x34] sm:$0xf]
    %v2369 = vld [vmem:[%s1 + $0x38] sm:$0xf]
    %v2370 = vld [vmem:[%s1 + $0x3c] sm:$0xf]
    %v2387 = vunpack.c.l.b16 %v2355
    %v2388 = vunpack.c.l.b16 %v2356
    %v2389 = vunpack.c.l.b16 %v2357
    %v2390 = vunpack.c.l.b16 %v2358
    %v2391 = vunpack.c.l.b16 %v2359
    %v2392 = vunpack.c.l.b16 %v2360
    %v2393 = vunpack.c.l.b16 %v2361
    %v2394 = vunpack.c.l.b16 %v2362
    %v2395 = vunpack.c.l.b16 %v2363
    %v2396 = vunpack.c.l.b16 %v2364
    %v2397 = vunpack.c.l.b16 %v2365
    %v2398 = vunpack.c.l.b16 %v2366
    %v2399 = vunpack.c.l.b16 %v2367
    %v2400 = vunpack.c.l.b16 %v2368
    %v2401 = vunpack.c.l.b16 %v2369
    %v2402 = vunpack.c.l.b16 %v2370
    %v2403 = vpack.c.b16 %v2388, %v2387
    %v2404 = vpack.c.b16 %v2390, %v2389
    %v2405 = vpack.c.b16 %v2392, %v2391
    %v2406 = vpack.c.b16 %v2394, %v2393
    %v2407 = vpack.c.b16 %v2396, %v2395
    %v2408 = vpack.c.b16 %v2398, %v2397
    %v2409 = vpack.c.b16 %v2400, %v2399
    %v2410 = vpack.c.b16 %v2402, %v2401
    %2419 = vmatprep.subr.bf16.mxu0 0
    %2420 = vmatpush1.bf16.msra.mxu0 %v2403
    %2421 = vmatprep.subr.bf16.mxu0 0
    %2422 = vmatpush1.bf16.msra.mxu0 %v2404
    %2423 = vmatprep.subr.bf16.mxu0 0
    %2424 = vmatpush1.bf16.msra.mxu0 %v2405
    %2425 = vmatprep.subr.bf16.mxu0 0
    %2426 = vmatpush1.bf16.msra.mxu0 %v2406
    %2427 = vmatprep.subr.bf16.mxu0 0
    %2428 = vmatpush1.bf16.msra.mxu0 %v2407
    %2429 = vmatprep.subr.bf16.mxu0 0
    %2430 = vmatpush1.bf16.msra.mxu0 %v2408
    %2431 = vmatprep.subr.bf16.mxu0 0
    %2432 = vmatpush1.bf16.msra.mxu0 %v2409
    %2433 = vmatprep.subr.bf16.mxu0 0
    %2434 = vmatpush1.bf16.msra.mxu0 %v2410
    %2435 = vmatprep.subr.bf16.mxu0 0
    %2436 = vmatpush1.bf16.msra.mxu0 0
    %2437 = vmatprep.subr.bf16.mxu0 0
    %2438 = vmatpush1.bf16.msra.mxu0 0
    %2439 = vmatprep.subr.bf16.mxu0 0
    %2440 = vmatpush1.bf16.msra.mxu0 0
    %2441 = vmatprep.subr.bf16.mxu0 0
    %2442 = vmatpush1.bf16.msra.mxu0 0
    %2443 = vmatprep.subr.bf16.mxu0 0
    %2444 = vmatpush1.bf16.msra.mxu0 0
    %2445 = vmatprep.subr.bf16.mxu0 0
    %2446 = vmatpush1.bf16.msra.mxu0 0
    %2447 = vmatprep.subr.bf16.mxu0 0
    %2448 = vmatpush1.bf16.msra.mxu0 0
    %2449 = vmatprep.subr.bf16.mxu0 0
    %2450 = vmatpush1.bf16.msra.mxu0 0
    %2451 = vmatprep.mubr.bf16.mxu0 0
    %2452 = vmatmul.mubr.bf16.gmra.mrb[0].mxu0 %v2354
    %v2453 = vpop.f32.mrb[0].mxu0
    %v2454 = vadd.f32 0.0, %v2453
    %v2455 = vpop.f32.mrb[0].mxu0
    %v2456 = vpop.f32.mrb[0].mxu0
    %v2457 = vpop.f32.mrb[0].mxu0
    %2458 = vdwg.mxu0
    %v2459 = vadd.f32 %v2352, %v2454
    %v2460 = vtanh.pop %v2459
    %v2461 = vpack.c.bf16 %v2460, %v2460
    %v2462 = vld [vmem:[%s2] sm:$0xf]
    %v2463 = vld [vmem:[%s2 + $0x4] sm:$0xf]
    %v2464 = vld [vmem:[%s2 + $0x8] sm:$0xf]
    %v2465 = vld [vmem:[%s2 + $0xc] sm:$0xf]
    %v2466 = vld [vmem:[%s2 + $0x10] sm:$0xf]
    %v2467 = vld [vmem:[%s2 + $0x14] sm:$0xf]
    %v2468 = vld [vmem:[%s2 + $0x18] sm:$0xf]
    %v2469 = vld [vmem:[%s2 + $0x1c] sm:$0xf]
    %v2470 = vld [vmem:[%s2 + $0x20] sm:$0xf]
    %v2471 = vld [vmem:[%s2 + $0x24] sm:$0xf]
    %v2472 = vld [vmem:[%s2 + $0x28] sm:$0xf]
    %v2473 = vld [vmem:[%s2 + $0x2c] sm:$0xf]
    %v2474 = vld [vmem:[%s2 + $0x30] sm:$0xf]
    %v2475 = vld [vmem:[%s2 + $0x34] sm:$0xf]
    %v2476 = vld [vmem:[%s2 + $0x38] sm:$0xf]
    %v2477 = vld [vmem:[%s2 + $0x3c] sm:$0xf]
    %v2478 = vld [vmem:[#allocation3] sm:$0x3]
    %v2479 = vpack.c.bf16 %v2478, %v2478
    %v2480 = vld [vmem:[%s3] sm:$0xf]
    %v2481 = vld [vmem:[%s3 + $0x4] sm:$0xf]
    %v2482 = vld [vmem:[%s3 + $0x8] sm:$0xf]
    %v2483 = vld [vmem:[%s3 + $0xc] sm:$0xf]
    %v2484 = vld [vmem:[%s3 + $0x10] sm:$0xf]
    %v2485 = vld [vmem:[%s3 + $0x14] sm:$0xf]
    %v2486 = vld [vmem:[%s3 + $0x18] sm:$0xf]
    %v2487 = vld [vmem:[%s3 + $0x1c] sm:$0xf]
    %v2488 = vld [vmem:[%s3 + $0x20] sm:$0xf]
    %v2489 = vld [vmem:[%s3 + $0x24] sm:$0xf]
    %v2490 = vld [vmem:[%s3 + $0x28] sm:$0xf]
    %v2491 = vld [vmem:[%s3 + $0x2c] sm:$0xf]
    %v2492 = vld [vmem:[%s3 + $0x30] sm:$0xf]
    %v2493 = vld [vmem:[%s3 + $0x34] sm:$0xf]
    %v2494 = vld [vmem:[%s3 + $0x38] sm:$0xf]
    %v2495 = vld [vmem:[%s3 + $0x3c] sm:$0xf]
    %v2512 = vunpack.c.l.b16 %v2480
    %v2513 = vunpack.c.l.b16 %v2481
    %v2514 = vunpack.c.l.b16 %v2482
    %v2515 = vunpack.c.l.b16 %v2483
    %v2516 = vunpack.c.l.b16 %v2484
    %v2517 = vunpack.c.l.b16 %v2485
    %v2518 = vunpack.c.l.b16 %v2486
    %v2519 = vunpack.c.l.b16 %v2487
    %v2520 = vunpack.c.l.b16 %v2488
    %v2521 = vunpack.c.l.b16 %v2489
    %v2522 = vunpack.c.l.b16 %v2490
    %v2523 = vunpack.c.l.b16 %v2491
    %v2524 = vunpack.c.l.b16 %v2492
    %v2525 = vunpack.c.l.b16 %v2493
    %v2526 = vunpack.c.l.b16 %v2494
    %v2527 = vunpack.c.l.b16 %v2495
    %v2528 = vpack.c.b16 %v2513, %v2512
    %v2529 = vpack.c.b16 %v2515, %v2514
    %v2530 = vpack.c.b16 %v2517, %v2516
    %v2531 = vpack.c.b16 %v2519, %v2518
    %v2532 = vpack.c.b16 %v2521, %v2520
    %v2533 = vpack.c.b16 %v2523, %v2522
    %v2534 = vpack.c.b16 %v2525, %v2524
    %v2535 = vpack.c.b16 %v2527, %v2526
    %2544 = vmatprep.subr.bf16.mxu0 0
    %2545 = vmatpush1.bf16.msra.mxu0 %v2528
    %2546 = vmatprep.subr.bf16.mxu0 0
    %2547 = vmatpush1.bf16.msra.mxu0 %v2529
    %2548 = vmatprep.subr.bf16.mxu0 0
    %2549 = vmatpush1.bf16.msra.mxu0 %v2530
    %2550 = vmatprep.subr.bf16.mxu0 0
    %2551 = vmatpush1.bf16.msra.mxu0 %v2531
    %2552 = vmatprep.subr.bf16.mxu0 0
    %2553 = vmatpush1.bf16.msra.mxu0 %v2532
    %2554 = vmatprep.subr.bf16.mxu0 0
    %2555 = vmatpush1.bf16.msra.mxu0 %v2533
    %2556 = vmatprep.subr.bf16.mxu0 0
    %2557 = vmatpush1.bf16.msra.mxu0 %v2534
    %2558 = vmatprep.subr.bf16.mxu0 0
    %2559 = vmatpush1.bf16.msra.mxu0 %v2535
    %2560 = vmatprep.subr.bf16.mxu0 0
    %2561 = vmatpush1.bf16.msra.mxu0 0
    %2562 = vmatprep.subr.bf16.mxu0 0
    %2563 = vmatpush1.bf16.msra.mxu0 0
    %2564 = vmatprep.subr.bf16.mxu0 0
    %2565 = vmatpush1.bf16.msra.mxu0 0
    %2566 = vmatprep.subr.bf16.mxu0 0
    %2567 = vmatpush1.bf16.msra.mxu0 0
    %2568 = vmatprep.subr.bf16.mxu0 0
    %2569 = vmatpush1.bf16.msra.mxu0 0
    %2570 = vmatprep.subr.bf16.mxu0 0
    %2571 = vmatpush1.bf16.msra.mxu0 0
    %2572 = vmatprep.subr.bf16.mxu0 0
    %2573 = vmatpush1.bf16.msra.mxu0 0
    %2574 = vmatprep.subr.bf16.mxu0 0
    %2575 = vmatpush1.bf16.msra.mxu0 0
    %2576 = vmatprep.mubr.bf16.mxu0 0
    %2577 = vmatmul.mubr.bf16.gmra.mrb[0].mxu0 %v2479
    %v2578 = vpop.f32.mrb[0].mxu0
    %v2579 = vadd.f32 0.0, %v2578
    %v2580 = vpop.f32.mrb[0].mxu0
    %v2581 = vpop.f32.mrb[0].mxu0
    %v2582 = vpop.f32.mrb[0].mxu0
    %2583 = vdwg.mxu0
    %v2600 = vunpack.c.l.b16 %v2462
    %v2601 = vunpack.c.l.b16 %v2463
    %v2602 = vunpack.c.l.b16 %v2464
    %v2603 = vunpack.c.l.b16 %v2465
    %v2604 = vunpack.c.l.b16 %v2466
    %v2605 = vunpack.c.l.b16 %v2467
    %v2606 = vunpack.c.l.b16 %v2468
    %v2607 = vunpack.c.l.b16 %v2469
    %v2608 = vunpack.c.l.b16 %v2470
    %v2609 = vunpack.c.l.b16 %v2471
    %v2610 = vunpack.c.l.b16 %v2472
    %v2611 = vunpack.c.l.b16 %v2473
    %v2612 = vunpack.c.l.b16 %v2474
    %v2613 = vunpack.c.l.b16 %v2475
    %v2614 = vunpack.c.l.b16 %v2476
    %v2615 = vunpack.c.l.b16 %v2477
    %v2616 = vpack.c.b16 %v2601, %v2600
    %v2617 = vpack.c.b16 %v2603, %v2602
    %v2618 = vpack.c.b16 %v2605, %v2604
    %v2619 = vpack.c.b16 %v2607, %v2606
    %v2620 = vpack.c.b16 %v2609, %v2608
    %v2621 = vpack.c.b16 %v2611, %v2610
    %v2622 = vpack.c.b16 %v2613, %v2612
    %v2623 = vpack.c.b16 %v2615, %v2614
    %2632 = vmatprep.subr.bf16.mxu0 0
    %2633 = vmatpush1.bf16.msra.mxu0 %v2616
    %2634 = vmatprep.subr.bf16.mxu0 0
    %2635 = vmatpush1.bf16.msra.mxu0 %v2617
    %2636 = vmatprep.subr.bf16.mxu0 0
    %2637 = vmatpush1.bf16.msra.mxu0 %v2618
    %2638 = vmatprep.subr.bf16.mxu0 0
    %2639 = vmatpush1.bf16.msra.mxu0 %v2619
    %2640 = vmatprep.subr.bf16.mxu0 0
    %2641 = vmatpush1.bf16.msra.mxu0 %v2620
    %2642 = vmatprep.subr.bf16.mxu0 0
    %2643 = vmatpush1.bf16.msra.mxu0 %v2621
    %2644 = vmatprep.subr.bf16.mxu0 0
    %2645 = vmatpush1.bf16.msra.mxu0 %v2622
    %2646 = vmatprep.subr.bf16.mxu0 0
    %2647 = vmatpush1.bf16.msra.mxu0 %v2623
    %2648 = vmatprep.subr.bf16.mxu0 0
    %2649 = vmatpush1.bf16.msra.mxu0 0
    %2650 = vmatprep.subr.bf16.mxu0 0
    %2651 = vmatpush1.bf16.msra.mxu0 0
    %2652 = vmatprep.subr.bf16.mxu0 0
    %2653 = vmatpush1.bf16.msra.mxu0 0
    %2654 = vmatprep.subr.bf16.mxu0 0
    %2655 = vmatpush1.bf16.msra.mxu0 0
    %2656 = vmatprep.subr.bf16.mxu0 0
    %2657 = vmatpush1.bf16.msra.mxu0 0
    %2658 = vmatprep.subr.bf16.mxu0 0
    %2659 = vmatpush1.bf16.msra.mxu0 0
    %2660 = vmatprep.subr.bf16.mxu0 0
    %2661 = vmatpush1.bf16.msra.mxu0 0
    %2662 = vmatprep.subr.bf16.mxu0 0
    %2663 = vmatpush1.bf16.msra.mxu0 0
    %2664 = vmatprep.mubr.bf16.mxu0 0
    %2665 = vmatmul.mubr.bf16.gmra.mrb[0].mxu0 %v2461
    %v2666 = vpop.f32.mrb[0].mxu0
    %v2667 = vadd.f32 %v2579, %v2666
    %v2668 = vpop.f32.mrb[0].mxu0
    %v2669 = vpop.f32.mrb[0].mxu0
    %v2670 = vpop.f32.mrb[0].mxu0
    %2671 = vdwg.mxu0
    %v2672 = vadd.f32 %v2667, %v47
    %v2673 = vtanh.pop %v2672
    %2674 = vst [vmem:[#allocation2] sm:$0x3] %v2460
    %2675 = vst [vmem:[#allocation3] sm:$0x3] %v2673
    %v2676 = vpack.c.bf16 %v2673, %v2673
    %s2677 = scalar_lea.vmem %s5, 7
    %2678 = vst [vmem:[%s2677] sm:$0x1] %v2676
    %v2679 = vld [vmem:[#allocation2] sm:$0x3]
    %2680 = vst [vmem:[#allocation7] sm:$0x3] %v2679
    %v2681 = vld [vmem:[#allocation3] sm:$0x3]
    %s2682 = scalar_lea.vmem [#allocation7], 2
    %2683 = vst [vmem:[%s2682] sm:$0x3] %v2681
    // Predicated region
    $region30: #{vanilla_rnn_language_forward.4} parent=1 // pred_check
      _
    $region31: #{vanilla_rnn_language_forward.4} parent=1 // pred_check_branch
      %2685 = sbr.rel (0) target = $region33
    $region32: #{vanilla_rnn_language_forward.4} parent=1 // pred_region
      _
    $region33: #{vanilla_rnn_language_forward.4} parent=1 // pred_fallthru
      _
    // Predicated region
    $region34: #{vanilla_rnn_language_forward.4} parent=1 // pred_check
      _
    $region35: #{vanilla_rnn_language_forward.4} parent=1 // pred_check_branch
      %2687 = sbr.rel (0) target = $region37
    $region36: #{vanilla_rnn_language_forward.4} parent=1 // pred_region
      %s2689 = ssub.s32 64, 64
      %2690 = vsyncadd [#allocation6], %s2689
      %s2691 = sshll.u32 [#allocation7], 4
      %s2692 = int_to_ptr.vmem [resolvable:$true] %s2691
      %2697 = dma.vmem_to_hbm [thread:$0]  %s2692, 64, %s6, [#allocation6], 32, 32, 2
    $region37: #{vanilla_rnn_language_forward.4} parent=1 // pred_fallthru
      _
    // Predicated region
    $region38: #{vanilla_rnn_language_forward.4} parent=1 // pred_check
      _
    $region39: #{vanilla_rnn_language_forward.4} parent=1 // pred_check_branch
      %2699 = sbr.rel (0) target = $region41
    $region40: #{vanilla_rnn_language_forward.4} parent=1 // pred_region
      _
    $region41: #{vanilla_rnn_language_forward.4} parent=1 // pred_fallthru
      _
    // Predicated region
    $region42: #{vanilla_rnn_language_forward.4} parent=1 // pred_check
      _
    $region43: #{vanilla_rnn_language_forward.4} parent=1 // pred_check_branch
      %2701 = sbr.rel (0) target = $region45
    $region44: #{vanilla_rnn_language_forward.4} parent=1 // pred_region
      %2702 = dma.done [#allocation6], 64
    $region45: #{vanilla_rnn_language_forward.4} parent=1 // pred_fallthru
      _
    %2703 = vsyncpa [#allocation5], 1
    %2704 = vsyncpa [#allocation6], 1

</llo_original>
